<compile_context>
chip_gen: v5e
topology: v5e:2x2
jax: 0.10.0
libtpu: 0.0.40
codegen_flags: <defaults>
</compile_context>

<pallas_src>
import functools

import jax
import jax.numpy as jnp
from jax import lax
from jax.experimental import pallas as pl
from jax.experimental.pallas import tpu as pltpu

# ----------------------------- model hyper-parameters (small synthetic config) --------------
SR = 16000
WIN = 64          # analysis window / n_fft
NFFT = 64
HOP = 32          # WIN == 2 * HOP (used by the framing trick below)
N_BINS = NFFT // 2 + 1   # 33
N_MELS = 32
SUB = 4           # time subsampling factor of the (simplified) pre-encoder
D_MODEL = 64
N_HEADS = 4
D_HEAD = D_MODEL // N_HEADS
FF_DIM = 4 * D_MODEL      # 256
CONV_K = 5        # depthwise-conv kernel size of the conformer conv module
N_LAYERS = 2
N_LABELS = 40     # label_target_size -> output dim = N_LABELS + 1 (blank)
PAD_OUT = 128     # lane-dense padding of the final logits (sliced back to N_LABELS+1)

# rows of the packed per-layer vector slab [N_VEC_ROWS, FF_DIM] (unused lanes are zero-padded)
ROW_LN_FF1_G, ROW_LN_FF1_B = 0, 1
ROW_FF1_B1, ROW_FF1_B2 = 2, 3
ROW_LN_ATT_G, ROW_LN_ATT_B = 4, 5
ROW_BQKV, ROW_BO = 6, 7
ROW_LN_CONV_G, ROW_LN_CONV_B = 8, 9
ROW_PW1_B, ROW_DW_B = 10, 11
ROW_BN_G, ROW_BN_B, ROW_BN_RM, ROW_BN_RV = 12, 13, 14, 15
ROW_PW2_B = 16
ROW_LN_FF2_G, ROW_LN_FF2_B = 17, 18
ROW_FF2_B1, ROW_FF2_B2 = 19, 20
ROW_LN_OUT_G, ROW_LN_OUT_B = 21, 22
ROW_DW0 = 23
N_VEC_ROWS = ROW_DW0 + CONV_K    # 28

STACKED_WEIGHT_KEYS = ("ff1_w1", "ff1_w2", "wqkv", "wo",
                       "pw1_w", "pw2_w", "ff2_w1", "ff2_w2", "vecs")

# =========================================== helpers ========================================


def _mm(a, w):
    """bf16 MXU matmul with f32 accumulation (w is already stored in bf16)."""
    return jnp.dot(a.astype(jnp.bfloat16), w, preferred_element_type=jnp.float32)


def _layer_norm(v, gamma, beta):
    mu = jnp.mean(v, axis=-1, keepdims=True)
    var = jnp.mean(jnp.square(v - mu), axis=-1, keepdims=True)
    return (v - mu) * lax.rsqrt(var + 1e-5) * gamma + beta


def _swish(v):
    return v * jax.nn.sigmoid(v)


# ---------------------------------------------------------------------------------------------
# Fused preprocessor: window multiply + "FFT" (one matmul against [cos|sin]), power + mel
# (duplicated filterbank), log, NeMo "per_feature" normalization over valid frames, and
# frame-stacking x SUB via exact 0/1 selection matmuls -> lane-dense [T, SUB*N_MELS] output.
# One grid step per batch element; frame mask built from the prefetched length.
# ---------------------------------------------------------------------------------------------
def _preproc_kernel(len_ref, fr_ref, win_ref, cossin_ref, mel2_ref, sel_ref, o_ref):
    b = pl.program_id(0)
    n_frames = fr_ref.shape[1]
    n_valid = len_ref[b]
    m = (lax.broadcasted_iota(jnp.int32, (n_frames, 1), 0) < n_valid).astype(jnp.float32)

    f = (fr_ref[0] * win_ref[...]).astype(jnp.bfloat16)                        # [F, WIN]
    rim = jnp.dot(f, cossin_ref[...], preferred_element_type=jnp.float32)      # [F, 2*N_BINS]
    p2 = rim * rim                                                             # re^2 | im^2
    mel = jnp.dot(p2.astype(jnp.bfloat16), mel2_ref[...],
                  preferred_element_type=jnp.float32)                          # [F, N_MELS]
    x = jnp.log(mel + 2.0 ** -24)                                              # NeMo log guard

    cnt = jnp.sum(m, axis=0, keepdims=True)                                    # [1, 1]
    inv_cnt = pl.reciprocal(jnp.maximum(cnt, 1.0), approx=True)
    mean = jnp.sum(x * m, axis=0, keepdims=True) * inv_cnt                     # [1, N_MELS]
    diff = (x - mean) * m
    var = jnp.sum(diff * diff, axis=0, keepdims=True) / jnp.maximum(cnt - 1.0, 1.0)
    inv_std = pl.reciprocal(jnp.sqrt(var) + 1e-5, approx=True)
    xn = ((x - mean) * inv_std) * m                                            # [F, N_MELS]

    # frame stacking x SUB: piece s = rows (SUB*t + s) of xn, selected with an exact 0/1 matmul
    pieces = [jnp.dot(sel_ref[s], xn, preferred_element_type=jnp.float32)      # [T, N_MELS]
              for s in range(SUB)]
    o_ref[0] = jnp.concatenate(pieces, axis=-1)                                # [T, SUB*N_MELS]


def preprocess_feats(frames, feat_len, consts):
    """frames: [B, F, WIN] (pre-emphasized), feat_len: [B] int32 -> [B, T, SUB*N_MELS]."""
    B, F, _ = frames.shape
    T = F // SUB
    t_idx = jnp.arange(T, dtype=jnp.int32)
    f_idx = jnp.arange(F, dtype=jnp.int32)
    sel = jnp.stack(
        [(f_idx[None, :] == (SUB * t_idx[:, None] + s)).astype(jnp.float32) for s in range(SUB)],
        axis=0)                                                                # [SUB, T, F]

    grid_spec = pltpu.PrefetchScalarGridSpec(
        num_scalar_prefetch=1,
        grid=(B,),
        in_specs=[
            pl.BlockSpec((1, F, WIN), lambda b, L: (b, 0, 0)),
            pl.BlockSpec((1, WIN), lambda b, L: (0, 0)),
            pl.BlockSpec((WIN, 2 * N_BINS), lambda b, L: (0, 0)),
            pl.BlockSpec((2 * N_BINS, N_MELS), lambda b, L: (0, 0)),
            pl.BlockSpec((SUB, T, F), lambda b, L: (0, 0, 0)),
        ],
        out_specs=pl.BlockSpec((1, T, SUB * N_MELS), lambda b, L: (b, 0, 0)),
    )
    return pl.pallas_call(
        _preproc_kernel,
        out_shape=jax.ShapeDtypeStruct((B, T, SUB * N_MELS), jnp.float32),
        grid_spec=grid_spec,
        compiler_params=pltpu.CompilerParams(dimension_semantics=("parallel",)),
    )(feat_len, frames, consts["window"], consts["cossin"], consts["mel2"], sel)


# ---------------------------------------------------------------------------------------------
# Single fused encoder kernel: pre-encoder projection + N_LAYERS Conformer layers + final
# linear + log_softmax.  One grid step per batch element; all weights VMEM-resident (constant
# index_map); activations never leave VMEM; masks built from the prefetched length.
# ---------------------------------------------------------------------------------------------
def _encoder_kernel(len_ref, x_ref, pre_w_ref, gvec_ref, fin_w_ref,
                    ff1_w1_ref, ff1_w2_ref, wqkv_ref, wo_ref,
                    pw1_ref, pw2_ref, ff2_w1_ref, ff2_w2_ref, vec_ref, o_ref):
    b = pl.program_id(0)
    T = x_ref.shape[1]
    n_valid = len_ref[b]
    m_col = (lax.broadcasted_iota(jnp.int32, (T, 1), 0) < n_valid).astype(jnp.float32)
    m_row = (lax.broadcasted_iota(jnp.int32, (1, T), 1) < n_valid).astype(jnp.float32)
    key_bias = (m_row - 1.0) * 1e9                               # 0 for valid keys, -1e9 padded

    gv = gvec_ref[...]                                           # [2, PAD_OUT]
    pre_b = gv[0:1, :D_MODEL]
    fin_b = gv[1:2, :]

    # --- pre-encoder: linear projection of stacked frames + xscale + mask ---
    # TODO(synk): NeMo uses dw-striding Conv2d subsampling (x8) + RelPositionalEncoding;
    # simplified here to frame stacking (x4) + linear projection.
    x = (_mm(x_ref[0], pre_w_ref[...]) + pre_b) * (float(D_MODEL) ** 0.5)
    x = x * m_col                                                # [T, D]

    att_scale = 1.0 / float(D_HEAD) ** 0.5
    pad = (CONV_K - 1) // 2

    for l in range(N_LAYERS):
        vec = vec_ref[l]                                         # [N_VEC_ROWS, FF_DIM] f32

        def V(i, w=D_MODEL):
            return vec[i:i + 1, :w]

        # --- feed-forward module 1 (half-step residual) ---
        y = _layer_norm(x, V(ROW_LN_FF1_G), V(ROW_LN_FF1_B))
        y = _swish(_mm(y, ff1_w1_ref[l]) + V(ROW_FF1_B1, FF_DIM))
        y = _mm(y, ff1_w2_ref[l]) + V(ROW_FF1_B2)
        x = x + 0.5 * y

        # --- multi-head self-attention (fused QKV, single output projection) ---
        # TODO(synk): NeMo uses RelPositionMultiHeadAttention (relative positional bias);
        # plain scaled-dot-product attention with key padding mask is implemented here.
        y = _layer_norm(x, V(ROW_LN_ATT_G), V(ROW_LN_ATT_B))
        qkv = _mm(y, wqkv_ref[l]) + V(ROW_BQKV, 3 * D_MODEL)     # [T, 3D]
        ctx_parts = []
        for h in range(N_HEADS):
            lo = h * D_HEAD
            qh = qkv[:, lo:lo + D_HEAD].astype(jnp.bfloat16)
            kh = qkv[:, D_MODEL + lo:D_MODEL + lo + D_HEAD].astype(jnp.bfloat16)
            vh = qkv[:, 2 * D_MODEL + lo:2 * D_MODEL + lo + D_HEAD].astype(jnp.bfloat16)
            s = lax.dot_general(qh, kh, (((1,), (1,)), ((), ())),
                                preferred_element_type=jnp.float32)            # [T, T]
            s = s * att_scale + key_bias
            s = s - jnp.max(s, axis=-1, keepdims=True)
            p = jnp.exp(s)
            p = p * pl.reciprocal(jnp.sum(p, axis=-1, keepdims=True), approx=True)
            ctx_parts.append(jnp.dot(p.astype(jnp.bfloat16), vh,
                                     preferred_element_type=jnp.float32))      # [T, D_HEAD]
        ctx = jnp.concatenate(ctx_parts, axis=-1)                               # [T, D]
        x = (x + _mm(ctx, wo_ref[l]) + V(ROW_BO)) * m_col        # re-mask padded queries

        # --- convolution module (pointwise -> GLU -> depthwise halo -> BN -> swish -> pointwise) ---
        y = _layer_norm(x, V(ROW_LN_CONV_G), V(ROW_LN_CONV_B))
        y = _mm(y, pw1_ref[l]) + V(ROW_PW1_B, 2 * D_MODEL)       # [T, 2D]
        y = y[:, :D_MODEL] * jax.nn.sigmoid(y[:, D_MODEL:])      # GLU
        y = y * m_col                                            # masked conv input
        zpad = jnp.zeros((pad, D_MODEL), jnp.float32)
        yp = jnp.concatenate([zpad, y, zpad], axis=0)            # [T+K-1, D], VMEM only
        acc = jnp.zeros((T, D_MODEL), jnp.float32)
        for kk in range(CONV_K):                                 # tiny halo; pltpu.roll alt. not needed at T=15
            acc = acc + yp[kk:kk + T, :] * V(ROW_DW0 + kk)
        acc = acc + V(ROW_DW_B)
        acc = (acc - V(ROW_BN_RM)) * lax.rsqrt(V(ROW_BN_RV) + 1e-5) * V(ROW_BN_G) + V(ROW_BN_B)
        acc = _swish(acc)
        y = _mm(acc, pw2_ref[l]) + V(ROW_PW2_B)
        x = x + y

        # --- feed-forward module 2 (half-step residual) ---
        y = _layer_norm(x, V(ROW_LN_FF2_G), V(ROW_LN_FF2_B))
        y = _swish(_mm(y, ff2_w1_ref[l]) + V(ROW_FF2_B1, FF_DIM))
        y = _mm(y, ff2_w2_ref[l]) + V(ROW_FF2_B2)
        x = x + 0.5 * y

        # --- output layer norm (masked) ---
        x = _layer_norm(x, V(ROW_LN_OUT_G), V(ROW_LN_OUT_B)) * m_col

    # --- final linear + log_softmax (padded classes carry bias -1e30; kept f32) ---
    # TODO(synk): final_dropout is identity in eval mode.
    logits = _mm(x, fin_w_ref[...]) + fin_b                       # [T, PAD_OUT]
    z = logits - jnp.max(logits, axis=-1, keepdims=True)
    o_ref[0] = z - jnp.log(jnp.sum(jnp.exp(z), axis=-1, keepdims=True))


def encoder_forward(feats, enc_len, params):
    """feats: [B, T, SUB*N_MELS], enc_len: [B] int32 -> padded log-probs [B, T, PAD_OUT]."""
    B, T, _ = feats.shape

    def const_spec(a):
        zeros = (0,) * a.ndim
        return pl.BlockSpec(a.shape, lambda b, L, z=zeros: z)

    weights = [params["pre_w"], params["gvec"], params["fin_w"]] + \
              [params[k] for k in STACKED_WEIGHT_KEYS]

    grid_spec = pltpu.PrefetchScalarGridSpec(
        num_scalar_prefetch=1,
        grid=(B,),
        in_specs=[pl.BlockSpec((1, T, SUB * N_MELS), lambda b, L: (b, 0, 0))]
                 + [const_spec(w) for w in weights],
        out_specs=pl.BlockSpec((1, T, PAD_OUT), lambda b, L: (b, 0, 0)),
    )
    return pl.pallas_call(
        _encoder_kernel,
        out_shape=jax.ShapeDtypeStruct((B, T, PAD_OUT), jnp.float32),
        grid_spec=grid_spec,
        compiler_params=pltpu.CompilerParams(dimension_semantics=("parallel",)),
    )(enc_len, feats, *weights)


# =========================================== glue: model forward ============================

def build_consts():
    n = jnp.arange(WIN, dtype=jnp.float32)
    window = 0.5 - 0.5 * jnp.cos(2.0 * jnp.pi * n / WIN)              # periodic hann
    kk = jnp.arange(N_BINS, dtype=jnp.float32)
    ang = 2.0 * jnp.pi * jnp.outer(n, kk) / NFFT                      # [WIN, N_BINS]
    cossin = jnp.concatenate([jnp.cos(ang), jnp.sin(ang)], axis=1).astype(jnp.bfloat16)

    # TODO(synk): HTK mel scale used; NeMo/librosa default is Slaney (small spectral mismatch).
    def hz_to_mel(f):
        return 2595.0 * jnp.log10(1.0 + f / 700.0)

    def mel_to_hz(m):
        return 700.0 * (10.0 ** (m / 2595.0) - 1.0)

    freqs = jnp.linspace(0.0, SR / 2.0, N_BINS)
    mel_pts = mel_to_hz(jnp.linspace(hz_to_mel(0.0), hz_to_mel(SR / 2.0), N_MELS + 2))
    lower = mel_pts[:-2][None, :]
    center = mel_pts[1:-1][None, :]
    upper = mel_pts[2:][None, :]
    f = freqs[:, None]
    up = (f - lower) / jnp.maximum(center - lower, 1e-6)
    down = (upper - f) / jnp.maximum(upper - center, 1e-6)
    mel_fb = jnp.maximum(0.0, jnp.minimum(up, down))                  # [N_BINS, N_MELS]
    mel2 = jnp.concatenate([mel_fb, mel_fb], axis=0).astype(jnp.bfloat16)   # power = re^2 + im^2 folded
    return {"window": window.reshape(1, WIN), "cossin": cossin, "mel2": mel2}


def preprocess(audio, audio_len, consts):
    """audio: [B, T_audio] -> stacked log-mel features [B, T, SUB*N_MELS], feature lengths [B]."""
    B, TA = audio.shape
    # preemphasis (0.97) — cheap XLA elementwise
    x = jnp.concatenate([audio[:, :1], audio[:, 1:] - 0.97 * audio[:, :-1]], axis=1)
    # framing without a gather: WIN == 2*HOP, so frame f = [chunk f, chunk f+1]
    F = (TA - WIN) // HOP + 1
    n_chunks = F + 1
    chunks = x[:, :n_chunks * HOP].reshape(B, n_chunks, HOP)
    frames = jnp.concatenate([chunks[:, :-1, :], chunks[:, 1:, :]], axis=-1)   # [B, F, WIN]

    feat_len = jnp.maximum((audio_len - WIN) // HOP + 1, 0).astype(jnp.int32)
    feats = preprocess_feats(frames, feat_len, consts)                         # fused kernel
    return feats, feat_len


def model_forward(raw_audio, raw_audio_len, params, consts):
    """raw_audio: [B, T_audio, 1], raw_audio_len: [B] -> (log_probs [B, T_enc, N_LABELS+1], enc_len)."""
    squeezed = jnp.squeeze(raw_audio, axis=-1)
    feats, feat_len = preprocess(squeezed, raw_audio_len, consts)
    # TODO(synk): SpecAugment is training-only (self.training == False path) -> skipped.
    enc_len = (feat_len // SUB).astype(jnp.int32)
    log_probs_padded = encoder_forward(feats, enc_len, params)                 # [B, T, PAD_OUT]
    # (PyTorch transposes encoder output [B, D, T] -> [B, T, D]; we already compute [B, T, D].)
    log_probs = log_probs_padded[:, :, :N_LABELS + 1]
    return log_probs, enc_len


# =========================================== parameters =====================================

def init_params(key):
    kit = iter(jax.random.split(key, 256))

    def dense(fan_in, fan_out):
        return (jax.random.normal(next(kit), (fan_in, fan_out), jnp.float32)
                / jnp.sqrt(float(fan_in))).astype(jnp.bfloat16)       # bf16 matmul weights

    def layer_vec_slab():
        slab = jnp.zeros((N_VEC_ROWS, FF_DIM), jnp.float32)
        ones_d = jnp.ones((D_MODEL,), jnp.float32)
        for r in (ROW_LN_FF1_G, ROW_LN_ATT_G, ROW_LN_CONV_G, ROW_BN_G, ROW_BN_RV,
                  ROW_LN_FF2_G, ROW_LN_OUT_G):
            slab = slab.at[r, :D_MODEL].set(ones_d)
        dw = (jax.random.normal(next(kit), (CONV_K, D_MODEL), jnp.float32)
              / jnp.sqrt(float(CONV_K)))
        slab = slab.at[ROW_DW0:ROW_DW0 + CONV_K, :D_MODEL].set(dw)
        return slab                                                   # all biases zero at init

    per_layer = {k: [] for k in STACKED_WEIGHT_KEYS}
    for _ in range(N_LAYERS):
        per_layer["ff1_w1"].append(dense(D_MODEL, FF_DIM))
        per_layer["ff1_w2"].append(dense(FF_DIM, D_MODEL))
        per_layer["wqkv"].append(dense(D_MODEL, 3 * D_MODEL))         # fused Q|K|V
        per_layer["wo"].append(dense(D_MODEL, D_MODEL))
        per_layer["pw1_w"].append(dense(D_MODEL, 2 * D_MODEL))
        per_layer["pw2_w"].append(dense(D_MODEL, D_MODEL))
        per_layer["ff2_w1"].append(dense(D_MODEL, FF_DIM))
        per_layer["ff2_w2"].append(dense(FF_DIM, D_MODEL))
        per_layer["vecs"].append(layer_vec_slab())
    params = {k: jnp.stack(v, axis=0) for k, v in per_layer.items()}

    params["pre_w"] = dense(SUB * N_MELS, D_MODEL)
    fin_w = dense(D_MODEL, N_LABELS + 1)
    params["fin_w"] = jnp.pad(fin_w, ((0, 0), (0, PAD_OUT - (N_LABELS + 1))))
    # globals slab: row 0 = pre_b (zeros), row 1 = fin_b with -1e30 on padded classes so they
    # vanish in the softmax normalization (sliced away host-side).
    gvec = jnp.zeros((2, PAD_OUT), jnp.float32)
    gvec = gvec.at[1, N_LABELS + 1:].set(-1e30)
    params["gvec"] = gvec
    return params


# =========================================== main ===========================================

if __name__ == "__main__":
    key = jax.random.PRNGKey(0)
    pkey, akey = jax.random.split(key)
    params = init_params(pkey)
    consts = build_consts()

    B, T_AUDIO = 2, 2048
    raw_audio_len = jnp.array([2048, 1600], dtype=jnp.int32)
    raw_audio = 0.1 * jax.random.normal(akey, (B, T_AUDIO, 1), jnp.float32)
    valid = (jnp.arange(T_AUDIO)[None, :] < raw_audio_len[:, None]).astype(jnp.float32)
    raw_audio = raw_audio * valid[:, :, None]

    fwd = jax.jit(functools.partial(model_forward, params=params, consts=consts))
    log_probs, enc_len = fwd(raw_audio, raw_audio_len)
    jax.block_until_ready((log_probs, enc_len))

    expected_T = ((T_AUDIO - WIN) // HOP + 1) // SUB
    assert log_probs.shape == (B, expected_T, N_LABELS + 1), log_probs.shape
    assert enc_len.shape == (B,)
    assert bool(jnp.all(jnp.isfinite(log_probs)))
    assert bool(jnp.allclose(jnp.sum(jnp.exp(log_probs), axis=-1), 1.0, atol=1e-3))
    print("KERNEL_OK")
</pallas_src>

<mosaic_0001>
module attributes {stable_mosaic.version = 11 : i64} {
  func.func @_preproc_kernel(%arg0: i32, %arg1: memref<2xi32, #tpu.memory_space<smem>>, %arg2: memref<1x63x64xf32, #tpu.memory_space<vmem>>, %arg3: memref<1x64xf32, #tpu.memory_space<vmem>>, %arg4: memref<64x66xbf16, #tpu.memory_space<vmem>>, %arg5: memref<66x32xbf16, #tpu.memory_space<vmem>>, %arg6: memref<4x15x63xf32, #tpu.memory_space<vmem>>, %arg7: memref<1x15x128xf32, #tpu.memory_space<vmem>>) attributes {dimension_semantics = [#tpu.dimension_semantics<parallel>], iteration_bounds = array<i64: 2>, scalar_prefetch = 1 : i64, scratch_operands = 0 : i64, tpu.core_type = #tpu.core_type<tc>, window_params = [{transform_indices = @transform_0, window_bounds = array<i64: 1, 63, 64>}, {pipeline_mode = #tpu.pipeline_mode<synchronous>, transform_indices = @transform_1, window_bounds = array<i64: 1, 64>}, {pipeline_mode = #tpu.pipeline_mode<synchronous>, transform_indices = @transform_2, window_bounds = array<i64: 64, 66>}, {pipeline_mode = #tpu.pipeline_mode<synchronous>, transform_indices = @transform_3, window_bounds = array<i64: 66, 32>}, {pipeline_mode = #tpu.pipeline_mode<synchronous>, transform_indices = @transform_4, window_bounds = array<i64: 4, 15, 63>}, {transform_indices = @transform_5, window_bounds = array<i64: 1, 15, 128>}]} {
    %0 = arith.index_cast %arg0 : i32 to index
    %1 = memref.load %arg1[%0] : memref<2xi32, #tpu.memory_space<smem>>
    %2 = tpu.iota {dimensions = array<i32: 0>} : vector<63x1xi32>
    %3 = vector.broadcast %1 : i32 to vector<63x1xi32>
    %4 = arith.cmpi slt, %2, %3 : vector<63x1xi32>
    %5 = arith.extui %4 : vector<63x1xi1> to vector<63x1xi32>
    %6 = arith.sitofp %5 : vector<63x1xi32> to vector<63x1xf32>
    %c0 = arith.constant 0 : index
    %c0_0 = arith.constant 0 : index
    %c0_1 = arith.constant 0 : index
    %7 = vector.load %arg2[%c0, %c0_0, %c0_1] : memref<1x63x64xf32, #tpu.memory_space<vmem>>, vector<1x63x64xf32>
    %8 = vector.shape_cast %7 : vector<1x63x64xf32> to vector<63x64xf32>
    %c0_2 = arith.constant 0 : index
    %c0_3 = arith.constant 0 : index
    %9 = vector.load %arg3[%c0_2, %c0_3] : memref<1x64xf32, #tpu.memory_space<vmem>>, vector<1x64xf32>
    %10 = vector.broadcast %9 : vector<1x64xf32> to vector<63x64xf32>
    %11 = arith.mulf %8, %10 : vector<63x64xf32>
    %12 = arith.truncf %11 : vector<63x64xf32> to vector<63x64xbf16>
    %c0_4 = arith.constant 0 : index
    %c0_5 = arith.constant 0 : index
    %13 = vector.load %arg4[%c0_4, %c0_5] : memref<64x66xbf16, #tpu.memory_space<vmem>>, vector<64x66xbf16>
    %cst = arith.constant dense<0.000000e+00> : vector<63x66xf32>
    %14 = tpu.matmul %12, %13, %cst {dimension_numbers = #tpu.dot_dimension_numbers<[1], [0], [0], [1], [0, 0, 1, 1], [], []>} : vector<63x64xbf16>, vector<64x66xbf16>, vector<63x66xf32> -> vector<63x66xf32>
    %15 = arith.mulf %14, %14 : vector<63x66xf32>
    %16 = arith.truncf %15 : vector<63x66xf32> to vector<63x66xbf16>
    %c0_6 = arith.constant 0 : index
    %c0_7 = arith.constant 0 : index
    %17 = vector.load %arg5[%c0_6, %c0_7] : memref<66x32xbf16, #tpu.memory_space<vmem>>, vector<66x32xbf16>
    %cst_8 = arith.constant dense<0.000000e+00> : vector<63x32xf32>
    %18 = tpu.matmul %16, %17, %cst_8 {dimension_numbers = #tpu.dot_dimension_numbers<[1], [0], [0], [1], [0, 0, 1, 1], [], []>} : vector<63x66xbf16>, vector<66x32xbf16>, vector<63x32xf32> -> vector<63x32xf32>
    %cst_9 = arith.constant 5.96046448E-8 : f32
    %19 = vector.broadcast %cst_9 : f32 to vector<63x32xf32>
    %20 = arith.addf %18, %19 : vector<63x32xf32>
    %21 = math.log %20 : vector<63x32xf32>
    %cst_10 = arith.constant dense<0.000000e+00> : vector<1xf32>
    %22 = vector.multi_reduction <add>, %6, %cst_10 [0] : vector<63x1xf32> to vector<1xf32>
    %23 = vector.shape_cast %22 : vector<1xf32> to vector<1x1xf32>
    %cst_11 = arith.constant 1.000000e+00 : f32
    %24 = vector.broadcast %cst_11 : f32 to vector<1x1xf32>
    %25 = arith.maximumf %23, %24 : vector<1x1xf32>
    %26 = tpu.reciprocal %25 {approx = true} : vector<1x1xf32> -> vector<1x1xf32>
    %27 = vector.broadcast %6 : vector<63x1xf32> to vector<63x32xf32>
    %28 = arith.mulf %21, %27 : vector<63x32xf32>
    %cst_12 = arith.constant dense<0.000000e+00> : vector<32xf32>
    %29 = vector.multi_reduction <add>, %28, %cst_12 [0] : vector<63x32xf32> to vector<32xf32>
    %30 = vector.shape_cast %29 : vector<32xf32> to vector<1x32xf32>
    %31 = vector.broadcast %26 : vector<1x1xf32> to vector<1x32xf32>
    %32 = arith.mulf %30, %31 : vector<1x32xf32>
    %33 = vector.broadcast %32 : vector<1x32xf32> to vector<63x32xf32>
    %34 = arith.subf %21, %33 : vector<63x32xf32>
    %35 = vector.broadcast %6 : vector<63x1xf32> to vector<63x32xf32>
    %36 = arith.mulf %34, %35 : vector<63x32xf32>
    %37 = arith.mulf %36, %36 : vector<63x32xf32>
    %cst_13 = arith.constant dense<0.000000e+00> : vector<32xf32>
    %38 = vector.multi_reduction <add>, %37, %cst_13 [0] : vector<63x32xf32> to vector<32xf32>
    %39 = vector.shape_cast %38 : vector<32xf32> to vector<1x32xf32>
    %cst_14 = arith.constant 1.000000e+00 : f32
    %40 = vector.broadcast %cst_14 : f32 to vector<1x1xf32>
    %41 = arith.subf %23, %40 : vector<1x1xf32>
    %cst_15 = arith.constant 1.000000e+00 : f32
    %42 = vector.broadcast %cst_15 : f32 to vector<1x1xf32>
    %43 = arith.maximumf %41, %42 : vector<1x1xf32>
    %44 = vector.broadcast %43 : vector<1x1xf32> to vector<1x32xf32>
    %45 = arith.divf %39, %44 : vector<1x32xf32>
    %46 = math.sqrt %45 : vector<1x32xf32>
    %cst_16 = arith.constant 9.99999974E-6 : f32
    %47 = vector.broadcast %cst_16 : f32 to vector<1x32xf32>
    %48 = arith.addf %46, %47 : vector<1x32xf32>
    %49 = tpu.reciprocal %48 {approx = true} : vector<1x32xf32> -> vector<1x32xf32>
    %50 = vector.broadcast %32 : vector<1x32xf32> to vector<63x32xf32>
    %51 = arith.subf %21, %50 : vector<63x32xf32>
    %52 = vector.broadcast %49 : vector<1x32xf32> to vector<63x32xf32>
    %53 = arith.mulf %51, %52 : vector<63x32xf32>
    %54 = vector.broadcast %6 : vector<63x1xf32> to vector<63x32xf32>
    %55 = arith.mulf %53, %54 : vector<63x32xf32>
    %c0_17 = arith.constant 0 : index
    %c0_18 = arith.constant 0 : index
    %c0_19 = arith.constant 0 : index
    %56 = vector.load %arg6[%c0_17, %c0_18, %c0_19] : memref<4x15x63xf32, #tpu.memory_space<vmem>>, vector<1x15x63xf32>
    %57 = vector.shape_cast %56 : vector<1x15x63xf32> to vector<15x63xf32>
    %cst_20 = arith.constant dense<0.000000e+00> : vector<15x32xf32>
    %58 = tpu.matmul %57, %55, %cst_20 {dimension_numbers = #tpu.dot_dimension_numbers<[1], [0], [0], [1], [0, 0, 1, 1], [], []>} : vector<15x63xf32>, vector<63x32xf32>, vector<15x32xf32> -> vector<15x32xf32>
    %c1 = arith.constant 1 : index
    %c0_21 = arith.constant 0 : index
    %c0_22 = arith.constant 0 : index
    %59 = vector.load %arg6[%c1, %c0_21, %c0_22] : memref<4x15x63xf32, #tpu.memory_space<vmem>>, vector<1x15x63xf32>
    %60 = vector.shape_cast %59 : vector<1x15x63xf32> to vector<15x63xf32>
    %cst_23 = arith.constant dense<0.000000e+00> : vector<15x32xf32>
    %61 = tpu.matmul %60, %55, %cst_23 {dimension_numbers = #tpu.dot_dimension_numbers<[1], [0], [0], [1], [0, 0, 1, 1], [], []>} : vector<15x63xf32>, vector<63x32xf32>, vector<15x32xf32> -> vector<15x32xf32>
    %c2 = arith.constant 2 : index
    %c0_24 = arith.constant 0 : index
    %c0_25 = arith.constant 0 : index
    %62 = vector.load %arg6[%c2, %c0_24, %c0_25] : memref<4x15x63xf32, #tpu.memory_space<vmem>>, vector<1x15x63xf32>
    %63 = vector.shape_cast %62 : vector<1x15x63xf32> to vector<15x63xf32>
    %cst_26 = arith.constant dense<0.000000e+00> : vector<15x32xf32>
    %64 = tpu.matmul %63, %55, %cst_26 {dimension_numbers = #tpu.dot_dimension_numbers<[1], [0], [0], [1], [0, 0, 1, 1], [], []>} : vector<15x63xf32>, vector<63x32xf32>, vector<15x32xf32> -> vector<15x32xf32>
    %c3 = arith.constant 3 : index
    %c0_27 = arith.constant 0 : index
    %c0_28 = arith.constant 0 : index
    %65 = vector.load %arg6[%c3, %c0_27, %c0_28] : memref<4x15x63xf32, #tpu.memory_space<vmem>>, vector<1x15x63xf32>
    %66 = vector.shape_cast %65 : vector<1x15x63xf32> to vector<15x63xf32>
    %cst_29 = arith.constant dense<0.000000e+00> : vector<15x32xf32>
    %67 = tpu.matmul %66, %55, %cst_29 {dimension_numbers = #tpu.dot_dimension_numbers<[1], [0], [0], [1], [0, 0, 1, 1], [], []>} : vector<15x63xf32>, vector<63x32xf32>, vector<15x32xf32> -> vector<15x32xf32>
    %68 = tpu.concatenate %58, %61, %64, %67 in 1 : vector<15x32xf32>, vector<15x32xf32>, vector<15x32xf32>, vector<15x32xf32> -> vector<15x128xf32>
    %c0_30 = arith.constant 0 : index
    %c0_31 = arith.constant 0 : index
    %c0_32 = arith.constant 0 : index
    %69 = vector.load %arg7[%c0_30, %c0_31, %c0_32] : memref<1x15x128xf32, #tpu.memory_space<vmem>>, vector<1x15x128xf32>
    %70 = vector.shape_cast %69 : vector<1x15x128xf32> to vector<15x128xf32>
    %71 = vector.shape_cast %68 : vector<15x128xf32> to vector<1x15x128xf32>
    tpu.vector_store %arg7[%c0_30, %c0_31, %c0_32], %71 {strides = array<i32>} : memref<1x15x128xf32, #tpu.memory_space<vmem>>, vector<1x15x128xf32>,
    return
  }
  func.func @transform_0(%arg0: i32, %arg1: memref<2xi32, #tpu.memory_space<smem>>) -> (i32, i32, i32) {
    %c0_i32 = arith.constant 0 : i32
    %c0_i32_0 = arith.constant 0 : i32
    %c0_i32_1 = arith.constant 0 : i32
    return %arg0, %c0_i32, %c0_i32_0 : i32, i32, i32
  }
  func.func @transform_1(%arg0: i32, %arg1: memref<2xi32, #tpu.memory_space<smem>>) -> (i32, i32) {
    %c0_i32 = arith.constant 0 : i32
    %c0_i32_0 = arith.constant 0 : i32
    %c0_i32_1 = arith.constant 0 : i32
    return %c0_i32, %c0_i32_0 : i32, i32
  }
  func.func @transform_2(%arg0: i32, %arg1: memref<2xi32, #tpu.memory_space<smem>>) -> (i32, i32) {
    %c0_i32 = arith.constant 0 : i32
    %c0_i32_0 = arith.constant 0 : i32
    %c0_i32_1 = arith.constant 0 : i32
    return %c0_i32, %c0_i32_0 : i32, i32
  }
  func.func @transform_3(%arg0: i32, %arg1: memref<2xi32, #tpu.memory_space<smem>>) -> (i32, i32) {
    %c0_i32 = arith.constant 0 : i32
    %c0_i32_0 = arith.constant 0 : i32
    %c0_i32_1 = arith.constant 0 : i32
    return %c0_i32, %c0_i32_0 : i32, i32
  }
  func.func @transform_4(%arg0: i32, %arg1: memref<2xi32, #tpu.memory_space<smem>>) -> (i32, i32, i32) {
    %c0_i32 = arith.constant 0 : i32
    %c0_i32_0 = arith.constant 0 : i32
    %c0_i32_1 = arith.constant 0 : i32
    %c0_i32_2 = arith.constant 0 : i32
    return %c0_i32, %c0_i32_0, %c0_i32_1 : i32, i32, i32
  }
  func.func @transform_5(%arg0: i32, %arg1: memref<2xi32, #tpu.memory_space<smem>>) -> (i32, i32, i32) {
    %c0_i32 = arith.constant 0 : i32
    %c0_i32_0 = arith.constant 0 : i32
    %c0_i32_1 = arith.constant 0 : i32
    return %arg0, %c0_i32, %c0_i32_0 : i32, i32, i32
  }
}

module attributes {stable_mosaic.version = 11 : i64} {
  func.func @_encoder_kernel(%arg0: i32, %arg1: memref<2xi32, #tpu.memory_space<smem>>, %arg2: memref<1x15x128xf32, #tpu.memory_space<vmem>>, %arg3: memref<128x64xbf16, #tpu.memory_space<vmem>>, %arg4: memref<2x128xf32, #tpu.memory_space<vmem>>, %arg5: memref<64x128xbf16, #tpu.memory_space<vmem>>, %arg6: memref<2x64x256xbf16, #tpu.memory_space<vmem>>, %arg7: memref<2x256x64xbf16, #tpu.memory_space<vmem>>, %arg8: memref<2x64x192xbf16, #tpu.memory_space<vmem>>, %arg9: memref<2x64x64xbf16, #tpu.memory_space<vmem>>, %arg10: memref<2x64x128xbf16, #tpu.memory_space<vmem>>, %arg11: memref<2x64x64xbf16, #tpu.memory_space<vmem>>, %arg12: memref<2x64x256xbf16, #tpu.memory_space<vmem>>, %arg13: memref<2x256x64xbf16, #tpu.memory_space<vmem>>, %arg14: memref<2x28x256xf32, #tpu.memory_space<vmem>>, %arg15: memref<1x15x128xf32, #tpu.memory_space<vmem>>) attributes {dimension_semantics = [#tpu.dimension_semantics<parallel>], iteration_bounds = array<i64: 2>, scalar_prefetch = 1 : i64, scratch_operands = 0 : i64, tpu.core_type = #tpu.core_type<tc>, window_params = [{transform_indices = @transform_0, window_bounds = array<i64: 1, 15, 128>}, {pipeline_mode = #tpu.pipeline_mode<synchronous>, transform_indices = @transform_1, window_bounds = array<i64: 128, 64>}, {pipeline_mode = #tpu.pipeline_mode<synchronous>, transform_indices = @transform_2, window_bounds = array<i64: 2, 128>}, {pipeline_mode = #tpu.pipeline_mode<synchronous>, transform_indices = @transform_3, window_bounds = array<i64: 64, 128>}, {pipeline_mode = #tpu.pipeline_mode<synchronous>, transform_indices = @transform_4, window_bounds = array<i64: 2, 64, 256>}, {pipeline_mode = #tpu.pipeline_mode<synchronous>, transform_indices = @transform_5, window_bounds = array<i64: 2, 256, 64>}, {pipeline_mode = #tpu.pipeline_mode<synchronous>, transform_indices = @transform_6, window_bounds = array<i64: 2, 64, 192>}, {pipeline_mode = #tpu.pipeline_mode<synchronous>, transform_indices = @transform_7, window_bounds = array<i64: 2, 64, 64>}, {pipeline_mode = #tpu.pipeline_mode<synchronous>, transform_indices = @transform_8, window_bounds = array<i64: 2, 64, 128>}, {pipeline_mode = #tpu.pipeline_mode<synchronous>, transform_indices = @transform_9, window_bounds = array<i64: 2, 64, 64>}, {pipeline_mode = #tpu.pipeline_mode<synchronous>, transform_indices = @transform_10, window_bounds = array<i64: 2, 64, 256>}, {pipeline_mode = #tpu.pipeline_mode<synchronous>, transform_indices = @transform_11, window_bounds = array<i64: 2, 256, 64>}, {pipeline_mode = #tpu.pipeline_mode<synchronous>, transform_indices = @transform_12, window_bounds = array<i64: 2, 28, 256>}, {transform_indices = @transform_13, window_bounds = array<i64: 1, 15, 128>}]} {
    %0 = arith.index_cast %arg0 : i32 to index
    %1 = memref.load %arg1[%0] : memref<2xi32, #tpu.memory_space<smem>>
    %2 = tpu.iota {dimensions = array<i32: 0>} : vector<15x1xi32>
    %3 = vector.broadcast %1 : i32 to vector<15x1xi32>
    %4 = arith.cmpi slt, %2, %3 : vector<15x1xi32>
    %5 = arith.extui %4 : vector<15x1xi1> to vector<15x1xi32>
    %6 = arith.sitofp %5 : vector<15x1xi32> to vector<15x1xf32>
    %7 = tpu.iota {dimensions = array<i32: 1>} : vector<1x15xi32>
    %8 = vector.broadcast %1 : i32 to vector<1x15xi32>
    %9 = arith.cmpi slt, %7, %8 : vector<1x15xi32>
    %10 = arith.extui %9 : vector<1x15xi1> to vector<1x15xi32>
    %11 = arith.sitofp %10 : vector<1x15xi32> to vector<1x15xf32>
    %cst = arith.constant 1.000000e+00 : f32
    %12 = vector.broadcast %cst : f32 to vector<1x15xf32>
    %13 = arith.subf %11, %12 : vector<1x15xf32>
    %cst_0 = arith.constant 1.000000e+09 : f32
    %14 = vector.broadcast %cst_0 : f32 to vector<1x15xf32>
    %15 = arith.mulf %13, %14 : vector<1x15xf32>
    %c0 = arith.constant 0 : index
    %c0_1 = arith.constant 0 : index
    %16 = vector.load %arg4[%c0, %c0_1] : memref<2x128xf32, #tpu.memory_space<vmem>>, vector<2x128xf32>
    %17 = vector.extract_strided_slice %16 {offsets = [0, 0], sizes = [1, 64], strides = [1, 1]} : vector<2x128xf32> to vector<1x64xf32>
    %18 = vector.extract_strided_slice %16 {offsets = [1, 0], sizes = [1, 128], strides = [1, 1]} : vector<2x128xf32> to vector<1x128xf32>
    %c0_2 = arith.constant 0 : index
    %c0_3 = arith.constant 0 : index
    %c0_4 = arith.constant 0 : index
    %19 = vector.load %arg2[%c0_2, %c0_3, %c0_4] : memref<1x15x128xf32, #tpu.memory_space<vmem>>, vector<1x15x128xf32>
    %20 = vector.shape_cast %19 : vector<1x15x128xf32> to vector<15x128xf32>
    %c0_5 = arith.constant 0 : index
    %c0_6 = arith.constant 0 : index
    %21 = vector.load %arg3[%c0_5, %c0_6] : memref<128x64xbf16, #tpu.memory_space<vmem>>, vector<128x64xbf16>
    %22 = arith.truncf %20 : vector<15x128xf32> to vector<15x128xbf16>
    %cst_7 = arith.constant dense<0.000000e+00> : vector<15x64xf32>
    %23 = tpu.matmul %22, %21, %cst_7 {dimension_numbers = #tpu.dot_dimension_numbers<[1], [0], [0], [1], [0, 0, 1, 1], [], []>} : vector<15x128xbf16>, vector<128x64xbf16>, vector<15x64xf32> -> vector<15x64xf32>
    %24 = vector.broadcast %17 : vector<1x64xf32> to vector<15x64xf32>
    %25 = arith.addf %23, %24 : vector<15x64xf32>
    %cst_8 = arith.constant 8.000000e+00 : f32
    %26 = vector.broadcast %cst_8 : f32 to vector<15x64xf32>
    %27 = arith.mulf %25, %26 : vector<15x64xf32>
    %28 = vector.broadcast %6 : vector<15x1xf32> to vector<15x64xf32>
    %29 = arith.mulf %27, %28 : vector<15x64xf32>
    %c0_9 = arith.constant 0 : index
    %c0_10 = arith.constant 0 : index
    %c0_11 = arith.constant 0 : index
    %30 = vector.load %arg14[%c0_9, %c0_10, %c0_11] : memref<2x28x256xf32, #tpu.memory_space<vmem>>, vector<1x28x256xf32>
    %31 = vector.shape_cast %30 : vector<1x28x256xf32> to vector<28x256xf32>
    %32 = vector.extract_strided_slice %31 {offsets = [0, 0], sizes = [1, 64], strides = [1, 1]} : vector<28x256xf32> to vector<1x64xf32>
    %33 = vector.extract_strided_slice %31 {offsets = [1, 0], sizes = [1, 64], strides = [1, 1]} : vector<28x256xf32> to vector<1x64xf32>
    %cst_12 = arith.constant dense<0.000000e+00> : vector<15xf32>
    %34 = vector.multi_reduction <add>, %29, %cst_12 [1] : vector<15x64xf32> to vector<15xf32>
    %35 = vector.shape_cast %34 : vector<15xf32> to vector<15x1xf32>
    %cst_13 = arith.constant 6.400000e+01 : f32
    %36 = vector.broadcast %cst_13 : f32 to vector<15x1xf32>
    %37 = arith.divf %35, %36 : vector<15x1xf32>
    %38 = vector.broadcast %37 : vector<15x1xf32> to vector<15x64xf32>
    %39 = arith.subf %29, %38 : vector<15x64xf32>
    %40 = arith.mulf %39, %39 : vector<15x64xf32>
    %cst_14 = arith.constant dense<0.000000e+00> : vector<15xf32>
    %41 = vector.multi_reduction <add>, %40, %cst_14 [1] : vector<15x64xf32> to vector<15xf32>
    %42 = vector.shape_cast %41 : vector<15xf32> to vector<15x1xf32>
    %cst_15 = arith.constant 6.400000e+01 : f32
    %43 = vector.broadcast %cst_15 : f32 to vector<15x1xf32>
    %44 = arith.divf %42, %43 : vector<15x1xf32>
    %45 = vector.broadcast %37 : vector<15x1xf32> to vector<15x64xf32>
    %46 = arith.subf %29, %45 : vector<15x64xf32>
    %cst_16 = arith.constant 9.99999974E-6 : f32
    %47 = vector.broadcast %cst_16 : f32 to vector<15x1xf32>
    %48 = arith.addf %44, %47 : vector<15x1xf32>
    %49 = math.rsqrt %48 : vector<15x1xf32>
    %50 = vector.broadcast %49 : vector<15x1xf32> to vector<15x64xf32>
    %51 = arith.mulf %46, %50 : vector<15x64xf32>
    %52 = vector.broadcast %32 : vector<1x64xf32> to vector<15x64xf32>
    %53 = arith.mulf %51, %52 : vector<15x64xf32>
    %54 = vector.broadcast %33 : vector<1x64xf32> to vector<15x64xf32>
    %55 = arith.addf %53, %54 : vector<15x64xf32>
    %c0_17 = arith.constant 0 : index
    %c0_18 = arith.constant 0 : index
    %c0_19 = arith.constant 0 : index
    %56 = vector.load %arg6[%c0_17, %c0_18, %c0_19] : memref<2x64x256xbf16, #tpu.memory_space<vmem>>, vector<1x64x256xbf16>
    %57 = vector.shape_cast %56 : vector<1x64x256xbf16> to vector<64x256xbf16>
    %58 = arith.truncf %55 : vector<15x64xf32> to vector<15x64xbf16>
    %cst_20 = arith.constant dense<0.000000e+00> : vector<15x256xf32>
    %59 = tpu.matmul %58, %57, %cst_20 {dimension_numbers = #tpu.dot_dimension_numbers<[1], [0], [0], [1], [0, 0, 1, 1], [], []>} : vector<15x64xbf16>, vector<64x256xbf16>, vector<15x256xf32> -> vector<15x256xf32>
    %60 = vector.extract_strided_slice %31 {offsets = [2, 0], sizes = [1, 256], strides = [1, 1]} : vector<28x256xf32> to vector<1x256xf32>
    %61 = vector.broadcast %60 : vector<1x256xf32> to vector<15x256xf32>
    %62 = arith.addf %59, %61 : vector<15x256xf32>
    %63 = arith.negf %62 : vector<15x256xf32>
    %64 = math.exp %63 : vector<15x256xf32>
    %cst_21 = arith.constant 1.000000e+00 : f32
    %65 = vector.broadcast %cst_21 : f32 to vector<15x256xf32>
    %66 = arith.addf %65, %64 : vector<15x256xf32>
    %67 = arith.divf %65, %66 : vector<15x256xf32>
    %68 = arith.mulf %62, %67 : vector<15x256xf32>
    %c0_22 = arith.constant 0 : index
    %c0_23 = arith.constant 0 : index
    %c0_24 = arith.constant 0 : index
    %69 = vector.load %arg7[%c0_22, %c0_23, %c0_24] : memref<2x256x64xbf16, #tpu.memory_space<vmem>>, vector<1x256x64xbf16>
    %70 = vector.shape_cast %69 : vector<1x256x64xbf16> to vector<256x64xbf16>
    %71 = arith.truncf %68 : vector<15x256xf32> to vector<15x256xbf16>
    %cst_25 = arith.constant dense<0.000000e+00> : vector<15x64xf32>
    %72 = tpu.matmul %71, %70, %cst_25 {dimension_numbers = #tpu.dot_dimension_numbers<[1], [0], [0], [1], [0, 0, 1, 1], [], []>} : vector<15x256xbf16>, vector<256x64xbf16>, vector<15x64xf32> -> vector<15x64xf32>
    %73 = vector.extract_strided_slice %31 {offsets = [3, 0], sizes = [1, 64], strides = [1, 1]} : vector<28x256xf32> to vector<1x64xf32>
    %74 = vector.broadcast %73 : vector<1x64xf32> to vector<15x64xf32>
    %75 = arith.addf %72, %74 : vector<15x64xf32>
    %cst_26 = arith.constant 5.000000e-01 : f32
    %76 = vector.broadcast %cst_26 : f32 to vector<15x64xf32>
    %77 = arith.mulf %76, %75 : vector<15x64xf32>
    %78 = arith.addf %29, %77 : vector<15x64xf32>
    %79 = vector.extract_strided_slice %31 {offsets = [4, 0], sizes = [1, 64], strides = [1, 1]} : vector<28x256xf32> to vector<1x64xf32>
    %80 = vector.extract_strided_slice %31 {offsets = [5, 0], sizes = [1, 64], strides = [1, 1]} : vector<28x256xf32> to vector<1x64xf32>
    %cst_27 = arith.constant dense<0.000000e+00> : vector<15xf32>
    %81 = vector.multi_reduction <add>, %78, %cst_27 [1] : vector<15x64xf32> to vector<15xf32>
    %82 = vector.shape_cast %81 : vector<15xf32> to vector<15x1xf32>
    %cst_28 = arith.constant 6.400000e+01 : f32
    %83 = vector.broadcast %cst_28 : f32 to vector<15x1xf32>
    %84 = arith.divf %82, %83 : vector<15x1xf32>
    %85 = vector.broadcast %84 : vector<15x1xf32> to vector<15x64xf32>
    %86 = arith.subf %78, %85 : vector<15x64xf32>
    %87 = arith.mulf %86, %86 : vector<15x64xf32>
    %cst_29 = arith.constant dense<0.000000e+00> : vector<15xf32>
    %88 = vector.multi_reduction <add>, %87, %cst_29 [1] : vector<15x64xf32> to vector<15xf32>
    %89 = vector.shape_cast %88 : vector<15xf32> to vector<15x1xf32>
    %cst_30 = arith.constant 6.400000e+01 : f32
    %90 = vector.broadcast %cst_30 : f32 to vector<15x1xf32>
    %91 = arith.divf %89, %90 : vector<15x1xf32>
    %92 = vector.broadcast %84 : vector<15x1xf32> to vector<15x64xf32>
    %93 = arith.subf %78, %92 : vector<15x64xf32>
    %cst_31 = arith.constant 9.99999974E-6 : f32
    %94 = vector.broadcast %cst_31 : f32 to vector<15x1xf32>
    %95 = arith.addf %91, %94 : vector<15x1xf32>
    %96 = math.rsqrt %95 : vector<15x1xf32>
    %97 = vector.broadcast %96 : vector<15x1xf32> to vector<15x64xf32>
    %98 = arith.mulf %93, %97 : vector<15x64xf32>
    %99 = vector.broadcast %79 : vector<1x64xf32> to vector<15x64xf32>
    %100 = arith.mulf %98, %99 : vector<15x64xf32>
    %101 = vector.broadcast %80 : vector<1x64xf32> to vector<15x64xf32>
    %102 = arith.addf %100, %101 : vector<15x64xf32>
    %c0_32 = arith.constant 0 : index
    %c0_33 = arith.constant 0 : index
    %c0_34 = arith.constant 0 : index
    %103 = vector.load %arg8[%c0_32, %c0_33, %c0_34] : memref<2x64x192xbf16, #tpu.memory_space<vmem>>, vector<1x64x192xbf16>
    %104 = vector.shape_cast %103 : vector<1x64x192xbf16> to vector<64x192xbf16>
    %105 = arith.truncf %102 : vector<15x64xf32> to vector<15x64xbf16>
    %cst_35 = arith.constant dense<0.000000e+00> : vector<15x192xf32>
    %106 = tpu.matmul %105, %104, %cst_35 {dimension_numbers = #tpu.dot_dimension_numbers<[1], [0], [0], [1], [0, 0, 1, 1], [], []>} : vector<15x64xbf16>, vector<64x192xbf16>, vector<15x192xf32> -> vector<15x192xf32>
    %107 = vector.extract_strided_slice %31 {offsets = [6, 0], sizes = [1, 192], strides = [1, 1]} : vector<28x256xf32> to vector<1x192xf32>
    %108 = vector.broadcast %107 : vector<1x192xf32> to vector<15x192xf32>
    %109 = arith.addf %106, %108 : vector<15x192xf32>
    %110 = vector.extract_strided_slice %109 {offsets = [0, 0], sizes = [15, 16], strides = [1, 1]} : vector<15x192xf32> to vector<15x16xf32>
    %111 = arith.truncf %110 : vector<15x16xf32> to vector<15x16xbf16>
    %112 = vector.extract_strided_slice %109 {offsets = [0, 64], sizes = [15, 16], strides = [1, 1]} : vector<15x192xf32> to vector<15x16xf32>
    %113 = arith.truncf %112 : vector<15x16xf32> to vector<15x16xbf16>
    %114 = vector.extract_strided_slice %109 {offsets = [0, 128], sizes = [15, 16], strides = [1, 1]} : vector<15x192xf32> to vector<15x16xf32>
    %115 = arith.truncf %114 : vector<15x16xf32> to vector<15x16xbf16>
    %cst_36 = arith.constant dense<0.000000e+00> : vector<15x15xf32>
    %116 = tpu.matmul %111, %113, %cst_36 {dimension_numbers = #tpu.dot_dimension_numbers<[1], [1], [0], [0], [0, 0, 1, 0], [], []>} : vector<15x16xbf16>, vector<15x16xbf16>, vector<15x15xf32> -> vector<15x15xf32>
    %cst_37 = arith.constant 2.500000e-01 : f32
    %117 = vector.broadcast %cst_37 : f32 to vector<15x15xf32>
    %118 = arith.mulf %116, %117 : vector<15x15xf32>
    %119 = vector.broadcast %15 : vector<1x15xf32> to vector<15x15xf32>
    %120 = arith.addf %118, %119 : vector<15x15xf32>
    %cst_38 = arith.constant dense<0xFF800000> : vector<15xf32>
    %121 = vector.multi_reduction <maximumf>, %120, %cst_38 [1] : vector<15x15xf32> to vector<15xf32>
    %122 = vector.shape_cast %121 : vector<15xf32> to vector<15x1xf32>
    %123 = vector.broadcast %122 : vector<15x1xf32> to vector<15x15xf32>
    %124 = arith.subf %120, %123 : vector<15x15xf32>
    %125 = math.exp %124 : vector<15x15xf32>
    %cst_39 = arith.constant dense<0.000000e+00> : vector<15xf32>
    %126 = vector.multi_reduction <add>, %125, %cst_39 [1] : vector<15x15xf32> to vector<15xf32>
    %127 = vector.shape_cast %126 : vector<15xf32> to vector<15x1xf32>
    %128 = tpu.reciprocal %127 {approx = true} : vector<15x1xf32> -> vector<15x1xf32>
    %129 = vector.broadcast %128 : vector<15x1xf32> to vector<15x15xf32>
    %130 = arith.mulf %125, %129 : vector<15x15xf32>
    %131 = arith.truncf %130 : vector<15x15xf32> to vector<15x15xbf16>
    %cst_40 = arith.constant dense<0.000000e+00> : vector<15x16xf32>
    %132 = tpu.matmul %131, %115, %cst_40 {dimension_numbers = #tpu.dot_dimension_numbers<[1], [0], [0], [1], [0, 0, 1, 1], [], []>} : vector<15x15xbf16>, vector<15x16xbf16>, vector<15x16xf32> -> vector<15x16xf32>
    %133 = vector.extract_strided_slice %109 {offsets = [0, 16], sizes = [15, 16], strides = [1, 1]} : vector<15x192xf32> to vector<15x16xf32>
    %134 = arith.truncf %133 : vector<15x16xf32> to vector<15x16xbf16>
    %135 = vector.extract_strided_slice %109 {offsets = [0, 80], sizes = [15, 16], strides = [1, 1]} : vector<15x192xf32> to vector<15x16xf32>
    %136 = arith.truncf %135 : vector<15x16xf32> to vector<15x16xbf16>
    %137 = vector.extract_strided_slice %109 {offsets = [0, 144], sizes = [15, 16], strides = [1, 1]} : vector<15x192xf32> to vector<15x16xf32>
    %138 = arith.truncf %137 : vector<15x16xf32> to vector<15x16xbf16>
    %cst_41 = arith.constant dense<0.000000e+00> : vector<15x15xf32>
    %139 = tpu.matmul %134, %136, %cst_41 {dimension_numbers = #tpu.dot_dimension_numbers<[1], [1], [0], [0], [0, 0, 1, 0], [], []>} : vector<15x16xbf16>, vector<15x16xbf16>, vector<15x15xf32> -> vector<15x15xf32>
    %cst_42 = arith.constant 2.500000e-01 : f32
    %140 = vector.broadcast %cst_42 : f32 to vector<15x15xf32>
    %141 = arith.mulf %139, %140 : vector<15x15xf32>
    %142 = vector.broadcast %15 : vector<1x15xf32> to vector<15x15xf32>
    %143 = arith.addf %141, %142 : vector<15x15xf32>
    %cst_43 = arith.constant dense<0xFF800000> : vector<15xf32>
    %144 = vector.multi_reduction <maximumf>, %143, %cst_43 [1] : vector<15x15xf32> to vector<15xf32>
    %145 = vector.shape_cast %144 : vector<15xf32> to vector<15x1xf32>
    %146 = vector.broadcast %145 : vector<15x1xf32> to vector<15x15xf32>
    %147 = arith.subf %143, %146 : vector<15x15xf32>
    %148 = math.exp %147 : vector<15x15xf32>
    %cst_44 = arith.constant dense<0.000000e+00> : vector<15xf32>
    %149 = vector.multi_reduction <add>, %148, %cst_44 [1] : vector<15x15xf32> to vector<15xf32>
    %150 = vector.shape_cast %149 : vector<15xf32> to vector<15x1xf32>
    %151 = tpu.reciprocal %150 {approx = true} : vector<15x1xf32> -> vector<15x1xf32>
    %152 = vector.broadcast %151 : vector<15x1xf32> to vector<15x15xf32>
    %153 = arith.mulf %148, %152 : vector<15x15xf32>
    %154 = arith.truncf %153 : vector<15x15xf32> to vector<15x15xbf16>
    %cst_45 = arith.constant dense<0.000000e+00> : vector<15x16xf32>
    %155 = tpu.matmul %154, %138, %cst_45 {dimension_numbers = #tpu.dot_dimension_numbers<[1], [0], [0], [1], [0, 0, 1, 1], [], []>} : vector<15x15xbf16>, vector<15x16xbf16>, vector<15x16xf32> -> vector<15x16xf32>
    %156 = vector.extract_strided_slice %109 {offsets = [0, 32], sizes = [15, 16], strides = [1, 1]} : vector<15x192xf32> to vector<15x16xf32>
    %157 = arith.truncf %156 : vector<15x16xf32> to vector<15x16xbf16>
    %158 = vector.extract_strided_slice %109 {offsets = [0, 96], sizes = [15, 16], strides = [1, 1]} : vector<15x192xf32> to vector<15x16xf32>
    %159 = arith.truncf %158 : vector<15x16xf32> to vector<15x16xbf16>
    %160 = vector.extract_strided_slice %109 {offsets = [0, 160], sizes = [15, 16], strides = [1, 1]} : vector<15x192xf32> to vector<15x16xf32>
    %161 = arith.truncf %160 : vector<15x16xf32> to vector<15x16xbf16>
    %cst_46 = arith.constant dense<0.000000e+00> : vector<15x15xf32>
    %162 = tpu.matmul %157, %159, %cst_46 {dimension_numbers = #tpu.dot_dimension_numbers<[1], [1], [0], [0], [0, 0, 1, 0], [], []>} : vector<15x16xbf16>, vector<15x16xbf16>, vector<15x15xf32> -> vector<15x15xf32>
    %cst_47 = arith.constant 2.500000e-01 : f32
    %163 = vector.broadcast %cst_47 : f32 to vector<15x15xf32>
    %164 = arith.mulf %162, %163 : vector<15x15xf32>
    %165 = vector.broadcast %15 : vector<1x15xf32> to vector<15x15xf32>
    %166 = arith.addf %164, %165 : vector<15x15xf32>
    %cst_48 = arith.constant dense<0xFF800000> : vector<15xf32>
    %167 = vector.multi_reduction <maximumf>, %166, %cst_48 [1] : vector<15x15xf32> to vector<15xf32>
    %168 = vector.shape_cast %167 : vector<15xf32> to vector<15x1xf32>
    %169 = vector.broadcast %168 : vector<15x1xf32> to vector<15x15xf32>
    %170 = arith.subf %166, %169 : vector<15x15xf32>
    %171 = math.exp %170 : vector<15x15xf32>
    %cst_49 = arith.constant dense<0.000000e+00> : vector<15xf32>
    %172 = vector.multi_reduction <add>, %171, %cst_49 [1] : vector<15x15xf32> to vector<15xf32>
    %173 = vector.shape_cast %172 : vector<15xf32> to vector<15x1xf32>
    %174 = tpu.reciprocal %173 {approx = true} : vector<15x1xf32> -> vector<15x1xf32>
    %175 = vector.broadcast %174 : vector<15x1xf32> to vector<15x15xf32>
    %176 = arith.mulf %171, %175 : vector<15x15xf32>
    %177 = arith.truncf %176 : vector<15x15xf32> to vector<15x15xbf16>
    %cst_50 = arith.constant dense<0.000000e+00> : vector<15x16xf32>
    %178 = tpu.matmul %177, %161, %cst_50 {dimension_numbers = #tpu.dot_dimension_numbers<[1], [0], [0], [1], [0, 0, 1, 1], [], []>} : vector<15x15xbf16>, vector<15x16xbf16>, vector<15x16xf32> -> vector<15x16xf32>
    %179 = vector.extract_strided_slice %109 {offsets = [0, 48], sizes = [15, 16], strides = [1, 1]} : vector<15x192xf32> to vector<15x16xf32>
    %180 = arith.truncf %179 : vector<15x16xf32> to vector<15x16xbf16>
    %181 = vector.extract_strided_slice %109 {offsets = [0, 112], sizes = [15, 16], strides = [1, 1]} : vector<15x192xf32> to vector<15x16xf32>
    %182 = arith.truncf %181 : vector<15x16xf32> to vector<15x16xbf16>
    %183 = vector.extract_strided_slice %109 {offsets = [0, 176], sizes = [15, 16], strides = [1, 1]} : vector<15x192xf32> to vector<15x16xf32>
    %184 = arith.truncf %183 : vector<15x16xf32> to vector<15x16xbf16>
    %cst_51 = arith.constant dense<0.000000e+00> : vector<15x15xf32>
    %185 = tpu.matmul %180, %182, %cst_51 {dimension_numbers = #tpu.dot_dimension_numbers<[1], [1], [0], [0], [0, 0, 1, 0], [], []>} : vector<15x16xbf16>, vector<15x16xbf16>, vector<15x15xf32> -> vector<15x15xf32>
    %cst_52 = arith.constant 2.500000e-01 : f32
    %186 = vector.broadcast %cst_52 : f32 to vector<15x15xf32>
    %187 = arith.mulf %185, %186 : vector<15x15xf32>
    %188 = vector.broadcast %15 : vector<1x15xf32> to vector<15x15xf32>
    %189 = arith.addf %187, %188 : vector<15x15xf32>
    %cst_53 = arith.constant dense<0xFF800000> : vector<15xf32>
    %190 = vector.multi_reduction <maximumf>, %189, %cst_53 [1] : vector<15x15xf32> to vector<15xf32>
    %191 = vector.shape_cast %190 : vector<15xf32> to vector<15x1xf32>
    %192 = vector.broadcast %191 : vector<15x1xf32> to vector<15x15xf32>
    %193 = arith.subf %189, %192 : vector<15x15xf32>
    %194 = math.exp %193 : vector<15x15xf32>
    %cst_54 = arith.constant dense<0.000000e+00> : vector<15xf32>
    %195 = vector.multi_reduction <add>, %194, %cst_54 [1] : vector<15x15xf32> to vector<15xf32>
    %196 = vector.shape_cast %195 : vector<15xf32> to vector<15x1xf32>
    %197 = tpu.reciprocal %196 {approx = true} : vector<15x1xf32> -> vector<15x1xf32>
    %198 = vector.broadcast %197 : vector<15x1xf32> to vector<15x15xf32>
    %199 = arith.mulf %194, %198 : vector<15x15xf32>
    %200 = arith.truncf %199 : vector<15x15xf32> to vector<15x15xbf16>
    %cst_55 = arith.constant dense<0.000000e+00> : vector<15x16xf32>
    %201 = tpu.matmul %200, %184, %cst_55 {dimension_numbers = #tpu.dot_dimension_numbers<[1], [0], [0], [1], [0, 0, 1, 1], [], []>} : vector<15x15xbf16>, vector<15x16xbf16>, vector<15x16xf32> -> vector<15x16xf32>
    %202 = tpu.concatenate %132, %155, %178, %201 in 1 : vector<15x16xf32>, vector<15x16xf32>, vector<15x16xf32>, vector<15x16xf32> -> vector<15x64xf32>
    %c0_56 = arith.constant 0 : index
    %c0_57 = arith.constant 0 : index
    %c0_58 = arith.constant 0 : index
    %203 = vector.load %arg9[%c0_56, %c0_57, %c0_58] : memref<2x64x64xbf16, #tpu.memory_space<vmem>>, vector<1x64x64xbf16>
    %204 = vector.shape_cast %203 : vector<1x64x64xbf16> to vector<64x64xbf16>
    %205 = arith.truncf %202 : vector<15x64xf32> to vector<15x64xbf16>
    %cst_59 = arith.constant dense<0.000000e+00> : vector<15x64xf32>
    %206 = tpu.matmul %205, %204, %cst_59 {dimension_numbers = #tpu.dot_dimension_numbers<[1], [0], [0], [1], [0, 0, 1, 1], [], []>} : vector<15x64xbf16>, vector<64x64xbf16>, vector<15x64xf32> -> vector<15x64xf32>
    %207 = arith.addf %78, %206 : vector<15x64xf32>
    %208 = vector.extract_strided_slice %31 {offsets = [7, 0], sizes = [1, 64], strides = [1, 1]} : vector<28x256xf32> to vector<1x64xf32>
    %209 = vector.broadcast %208 : vector<1x64xf32> to vector<15x64xf32>
    %210 = arith.addf %207, %209 : vector<15x64xf32>
    %211 = vector.broadcast %6 : vector<15x1xf32> to vector<15x64xf32>
    %212 = arith.mulf %210, %211 : vector<15x64xf32>
    %213 = vector.extract_strided_slice %31 {offsets = [8, 0], sizes = [1, 64], strides = [1, 1]} : vector<28x256xf32> to vector<1x64xf32>
    %214 = vector.extract_strided_slice %31 {offsets = [9, 0], sizes = [1, 64], strides = [1, 1]} : vector<28x256xf32> to vector<1x64xf32>
    %cst_60 = arith.constant dense<0.000000e+00> : vector<15xf32>
    %215 = vector.multi_reduction <add>, %212, %cst_60 [1] : vector<15x64xf32> to vector<15xf32>
    %216 = vector.shape_cast %215 : vector<15xf32> to vector<15x1xf32>
    %cst_61 = arith.constant 6.400000e+01 : f32
    %217 = vector.broadcast %cst_61 : f32 to vector<15x1xf32>
    %218 = arith.divf %216, %217 : vector<15x1xf32>
    %219 = vector.broadcast %218 : vector<15x1xf32> to vector<15x64xf32>
    %220 = arith.subf %212, %219 : vector<15x64xf32>
    %221 = arith.mulf %220, %220 : vector<15x64xf32>
    %cst_62 = arith.constant dense<0.000000e+00> : vector<15xf32>
    %222 = vector.multi_reduction <add>, %221, %cst_62 [1] : vector<15x64xf32> to vector<15xf32>
    %223 = vector.shape_cast %222 : vector<15xf32> to vector<15x1xf32>
    %cst_63 = arith.constant 6.400000e+01 : f32
    %224 = vector.broadcast %cst_63 : f32 to vector<15x1xf32>
    %225 = arith.divf %223, %224 : vector<15x1xf32>
    %226 = vector.broadcast %218 : vector<15x1xf32> to vector<15x64xf32>
    %227 = arith.subf %212, %226 : vector<15x64xf32>
    %cst_64 = arith.constant 9.99999974E-6 : f32
    %228 = vector.broadcast %cst_64 : f32 to vector<15x1xf32>
    %229 = arith.addf %225, %228 : vector<15x1xf32>
    %230 = math.rsqrt %229 : vector<15x1xf32>
    %231 = vector.broadcast %230 : vector<15x1xf32> to vector<15x64xf32>
    %232 = arith.mulf %227, %231 : vector<15x64xf32>
    %233 = vector.broadcast %213 : vector<1x64xf32> to vector<15x64xf32>
    %234 = arith.mulf %232, %233 : vector<15x64xf32>
    %235 = vector.broadcast %214 : vector<1x64xf32> to vector<15x64xf32>
    %236 = arith.addf %234, %235 : vector<15x64xf32>
    %c0_65 = arith.constant 0 : index
    %c0_66 = arith.constant 0 : index
    %c0_67 = arith.constant 0 : index
    %237 = vector.load %arg10[%c0_65, %c0_66, %c0_67] : memref<2x64x128xbf16, #tpu.memory_space<vmem>>, vector<1x64x128xbf16>
    %238 = vector.shape_cast %237 : vector<1x64x128xbf16> to vector<64x128xbf16>
    %239 = arith.truncf %236 : vector<15x64xf32> to vector<15x64xbf16>
    %cst_68 = arith.constant dense<0.000000e+00> : vector<15x128xf32>
    %240 = tpu.matmul %239, %238, %cst_68 {dimension_numbers = #tpu.dot_dimension_numbers<[1], [0], [0], [1], [0, 0, 1, 1], [], []>} : vector<15x64xbf16>, vector<64x128xbf16>, vector<15x128xf32> -> vector<15x128xf32>
    %241 = vector.extract_strided_slice %31 {offsets = [10, 0], sizes = [1, 128], strides = [1, 1]} : vector<28x256xf32> to vector<1x128xf32>
    %242 = vector.broadcast %241 : vector<1x128xf32> to vector<15x128xf32>
    %243 = arith.addf %240, %242 : vector<15x128xf32>
    %244 = vector.extract_strided_slice %243 {offsets = [0, 0], sizes = [15, 64], strides = [1, 1]} : vector<15x128xf32> to vector<15x64xf32>
    %245 = vector.extract_strided_slice %243 {offsets = [0, 64], sizes = [15, 64], strides = [1, 1]} : vector<15x128xf32> to vector<15x64xf32>
    %246 = arith.negf %245 : vector<15x64xf32>
    %247 = math.exp %246 : vector<15x64xf32>
    %cst_69 = arith.constant 1.000000e+00 : f32
    %248 = vector.broadcast %cst_69 : f32 to vector<15x64xf32>
    %249 = arith.addf %248, %247 : vector<15x64xf32>
    %250 = arith.divf %248, %249 : vector<15x64xf32>
    %251 = arith.mulf %244, %250 : vector<15x64xf32>
    %252 = vector.broadcast %6 : vector<15x1xf32> to vector<15x64xf32>
    %253 = arith.mulf %251, %252 : vector<15x64xf32>
    %cst_70 = arith.constant 0.000000e+00 : f32
    %254 = vector.broadcast %cst_70 : f32 to vector<2x64xf32>
    %255 = tpu.concatenate %254, %253, %254 in 0 : vector<2x64xf32>, vector<15x64xf32>, vector<2x64xf32> -> vector<19x64xf32>
    %cst_71 = arith.constant 0.000000e+00 : f32
    %256 = vector.broadcast %cst_71 : f32 to vector<15x64xf32>
    %257 = vector.extract_strided_slice %255 {offsets = [0, 0], sizes = [15, 64], strides = [1, 1]} : vector<19x64xf32> to vector<15x64xf32>
    %258 = vector.extract_strided_slice %31 {offsets = [23, 0], sizes = [1, 64], strides = [1, 1]} : vector<28x256xf32> to vector<1x64xf32>
    %259 = vector.broadcast %258 : vector<1x64xf32> to vector<15x64xf32>
    %260 = arith.mulf %257, %259 : vector<15x64xf32>
    %261 = arith.addf %256, %260 : vector<15x64xf32>
    %262 = vector.extract_strided_slice %255 {offsets = [1, 0], sizes = [15, 64], strides = [1, 1]} : vector<19x64xf32> to vector<15x64xf32>
    %263 = vector.extract_strided_slice %31 {offsets = [24, 0], sizes = [1, 64], strides = [1, 1]} : vector<28x256xf32> to vector<1x64xf32>
    %264 = vector.broadcast %263 : vector<1x64xf32> to vector<15x64xf32>
    %265 = arith.mulf %262, %264 : vector<15x64xf32>
    %266 = arith.addf %261, %265 : vector<15x64xf32>
    %267 = vector.extract_strided_slice %255 {offsets = [2, 0], sizes = [15, 64], strides = [1, 1]} : vector<19x64xf32> to vector<15x64xf32>
    %268 = vector.extract_strided_slice %31 {offsets = [25, 0], sizes = [1, 64], strides = [1, 1]} : vector<28x256xf32> to vector<1x64xf32>
    %269 = vector.broadcast %268 : vector<1x64xf32> to vector<15x64xf32>
    %270 = arith.mulf %267, %269 : vector<15x64xf32>
    %271 = arith.addf %266, %270 : vector<15x64xf32>
    %272 = vector.extract_strided_slice %255 {offsets = [3, 0], sizes = [15, 64], strides = [1, 1]} : vector<19x64xf32> to vector<15x64xf32>
    %273 = vector.extract_strided_slice %31 {offsets = [26, 0], sizes = [1, 64], strides = [1, 1]} : vector<28x256xf32> to vector<1x64xf32>
    %274 = vector.broadcast %273 : vector<1x64xf32> to vector<15x64xf32>
    %275 = arith.mulf %272, %274 : vector<15x64xf32>
    %276 = arith.addf %271, %275 : vector<15x64xf32>
    %277 = vector.extract_strided_slice %255 {offsets = [4, 0], sizes = [15, 64], strides = [1, 1]} : vector<19x64xf32> to vector<15x64xf32>
    %278 = vector.extract_strided_slice %31 {offsets = [27, 0], sizes = [1, 64], strides = [1, 1]} : vector<28x256xf32> to vector<1x64xf32>
    %279 = vector.broadcast %278 : vector<1x64xf32> to vector<15x64xf32>
    %280 = arith.mulf %277, %279 : vector<15x64xf32>
    %281 = arith.addf %276, %280 : vector<15x64xf32>
    %282 = vector.extract_strided_slice %31 {offsets = [11, 0], sizes = [1, 64], strides = [1, 1]} : vector<28x256xf32> to vector<1x64xf32>
    %283 = vector.broadcast %282 : vector<1x64xf32> to vector<15x64xf32>
    %284 = arith.addf %281, %283 : vector<15x64xf32>
    %285 = vector.extract_strided_slice %31 {offsets = [14, 0], sizes = [1, 64], strides = [1, 1]} : vector<28x256xf32> to vector<1x64xf32>
    %286 = vector.broadcast %285 : vector<1x64xf32> to vector<15x64xf32>
    %287 = arith.subf %284, %286 : vector<15x64xf32>
    %288 = vector.extract_strided_slice %31 {offsets = [15, 0], sizes = [1, 64], strides = [1, 1]} : vector<28x256xf32> to vector<1x64xf32>
    %cst_72 = arith.constant 9.99999974E-6 : f32
    %289 = vector.broadcast %cst_72 : f32 to vector<1x64xf32>
    %290 = arith.addf %288, %289 : vector<1x64xf32>
    %291 = math.rsqrt %290 : vector<1x64xf32>
    %292 = vector.broadcast %291 : vector<1x64xf32> to vector<15x64xf32>
    %293 = arith.mulf %287, %292 : vector<15x64xf32>
    %294 = vector.extract_strided_slice %31 {offsets = [12, 0], sizes = [1, 64], strides = [1, 1]} : vector<28x256xf32> to vector<1x64xf32>
    %295 = vector.broadcast %294 : vector<1x64xf32> to vector<15x64xf32>
    %296 = arith.mulf %293, %295 : vector<15x64xf32>
    %297 = vector.extract_strided_slice %31 {offsets = [13, 0], sizes = [1, 64], strides = [1, 1]} : vector<28x256xf32> to vector<1x64xf32>
    %298 = vector.broadcast %297 : vector<1x64xf32> to vector<15x64xf32>
    %299 = arith.addf %296, %298 : vector<15x64xf32>
    %300 = arith.negf %299 : vector<15x64xf32>
    %301 = math.exp %300 : vector<15x64xf32>
    %cst_73 = arith.constant 1.000000e+00 : f32
    %302 = vector.broadcast %cst_73 : f32 to vector<15x64xf32>
    %303 = arith.addf %302, %301 : vector<15x64xf32>
    %304 = arith.divf %302, %303 : vector<15x64xf32>
    %305 = arith.mulf %299, %304 : vector<15x64xf32>
    %c0_74 = arith.constant 0 : index
    %c0_75 = arith.constant 0 : index
    %c0_76 = arith.constant 0 : index
    %306 = vector.load %arg11[%c0_74, %c0_75, %c0_76] : memref<2x64x64xbf16, #tpu.memory_space<vmem>>, vector<1x64x64xbf16>
    %307 = vector.shape_cast %306 : vector<1x64x64xbf16> to vector<64x64xbf16>
    %308 = arith.truncf %305 : vector<15x64xf32> to vector<15x64xbf16>
    %cst_77 = arith.constant dense<0.000000e+00> : vector<15x64xf32>
    %309 = tpu.matmul %308, %307, %cst_77 {dimension_numbers = #tpu.dot_dimension_numbers<[1], [0], [0], [1], [0, 0, 1, 1], [], []>} : vector<15x64xbf16>, vector<64x64xbf16>, vector<15x64xf32> -> vector<15x64xf32>
    %310 = vector.extract_strided_slice %31 {offsets = [16, 0], sizes = [1, 64], strides = [1, 1]} : vector<28x256xf32> to vector<1x64xf32>
    %311 = vector.broadcast %310 : vector<1x64xf32> to vector<15x64xf32>
    %312 = arith.addf %309, %311 : vector<15x64xf32>
    %313 = arith.addf %212, %312 : vector<15x64xf32>
    %314 = vector.extract_strided_slice %31 {offsets = [17, 0], sizes = [1, 64], strides = [1, 1]} : vector<28x256xf32> to vector<1x64xf32>
    %315 = vector.extract_strided_slice %31 {offsets = [18, 0], sizes = [1, 64], strides = [1, 1]} : vector<28x256xf32> to vector<1x64xf32>
    %cst_78 = arith.constant dense<0.000000e+00> : vector<15xf32>
    %316 = vector.multi_reduction <add>, %313, %cst_78 [1] : vector<15x64xf32> to vector<15xf32>
    %317 = vector.shape_cast %316 : vector<15xf32> to vector<15x1xf32>
    %cst_79 = arith.constant 6.400000e+01 : f32
    %318 = vector.broadcast %cst_79 : f32 to vector<15x1xf32>
    %319 = arith.divf %317, %318 : vector<15x1xf32>
    %320 = vector.broadcast %319 : vector<15x1xf32> to vector<15x64xf32>
    %321 = arith.subf %313, %320 : vector<15x64xf32>
    %322 = arith.mulf %321, %321 : vector<15x64xf32>
    %cst_80 = arith.constant dense<0.000000e+00> : vector<15xf32>
    %323 = vector.multi_reduction <add>, %322, %cst_80 [1] : vector<15x64xf32> to vector<15xf32>
    %324 = vector.shape_cast %323 : vector<15xf32> to vector<15x1xf32>
    %cst_81 = arith.constant 6.400000e+01 : f32
    %325 = vector.broadcast %cst_81 : f32 to vector<15x1xf32>
    %326 = arith.divf %324, %325 : vector<15x1xf32>
    %327 = vector.broadcast %319 : vector<15x1xf32> to vector<15x64xf32>
    %328 = arith.subf %313, %327 : vector<15x64xf32>
    %cst_82 = arith.constant 9.99999974E-6 : f32
    %329 = vector.broadcast %cst_82 : f32 to vector<15x1xf32>
    %330 = arith.addf %326, %329 : vector<15x1xf32>
    %331 = math.rsqrt %330 : vector<15x1xf32>
    %332 = vector.broadcast %331 : vector<15x1xf32> to vector<15x64xf32>
    %333 = arith.mulf %328, %332 : vector<15x64xf32>
    %334 = vector.broadcast %314 : vector<1x64xf32> to vector<15x64xf32>
    %335 = arith.mulf %333, %334 : vector<15x64xf32>
    %336 = vector.broadcast %315 : vector<1x64xf32> to vector<15x64xf32>
    %337 = arith.addf %335, %336 : vector<15x64xf32>
    %c0_83 = arith.constant 0 : index
    %c0_84 = arith.constant 0 : index
    %c0_85 = arith.constant 0 : index
    %338 = vector.load %arg12[%c0_83, %c0_84, %c0_85] : memref<2x64x256xbf16, #tpu.memory_space<vmem>>, vector<1x64x256xbf16>
    %339 = vector.shape_cast %338 : vector<1x64x256xbf16> to vector<64x256xbf16>
    %340 = arith.truncf %337 : vector<15x64xf32> to vector<15x64xbf16>
    %cst_86 = arith.constant dense<0.000000e+00> : vector<15x256xf32>
    %341 = tpu.matmul %340, %339, %cst_86 {dimension_numbers = #tpu.dot_dimension_numbers<[1], [0], [0], [1], [0, 0, 1, 1], [], []>} : vector<15x64xbf16>, vector<64x256xbf16>, vector<15x256xf32> -> vector<15x256xf32>
    %342 = vector.extract_strided_slice %31 {offsets = [19, 0], sizes = [1, 256], strides = [1, 1]} : vector<28x256xf32> to vector<1x256xf32>
    %343 = vector.broadcast %342 : vector<1x256xf32> to vector<15x256xf32>
    %344 = arith.addf %341, %343 : vector<15x256xf32>
    %345 = arith.negf %344 : vector<15x256xf32>
    %346 = math.exp %345 : vector<15x256xf32>
    %cst_87 = arith.constant 1.000000e+00 : f32
    %347 = vector.broadcast %cst_87 : f32 to vector<15x256xf32>
    %348 = arith.addf %347, %346 : vector<15x256xf32>
    %349 = arith.divf %347, %348 : vector<15x256xf32>
    %350 = arith.mulf %344, %349 : vector<15x256xf32>
    %c0_88 = arith.constant 0 : index
    %c0_89 = arith.constant 0 : index
    %c0_90 = arith.constant 0 : index
    %351 = vector.load %arg13[%c0_88, %c0_89, %c0_90] : memref<2x256x64xbf16, #tpu.memory_space<vmem>>, vector<1x256x64xbf16>
    %352 = vector.shape_cast %351 : vector<1x256x64xbf16> to vector<256x64xbf16>
    %353 = arith.truncf %350 : vector<15x256xf32> to vector<15x256xbf16>
    %cst_91 = arith.constant dense<0.000000e+00> : vector<15x64xf32>
    %354 = tpu.matmul %353, %352, %cst_91 {dimension_numbers = #tpu.dot_dimension_numbers<[1], [0], [0], [1], [0, 0, 1, 1], [], []>} : vector<15x256xbf16>, vector<256x64xbf16>, vector<15x64xf32> -> vector<15x64xf32>
    %355 = vector.extract_strided_slice %31 {offsets = [20, 0], sizes = [1, 64], strides = [1, 1]} : vector<28x256xf32> to vector<1x64xf32>
    %356 = vector.broadcast %355 : vector<1x64xf32> to vector<15x64xf32>
    %357 = arith.addf %354, %356 : vector<15x64xf32>
    %cst_92 = arith.constant 5.000000e-01 : f32
    %358 = vector.broadcast %cst_92 : f32 to vector<15x64xf32>
    %359 = arith.mulf %358, %357 : vector<15x64xf32>
    %360 = arith.addf %313, %359 : vector<15x64xf32>
    %361 = vector.extract_strided_slice %31 {offsets = [21, 0], sizes = [1, 64], strides = [1, 1]} : vector<28x256xf32> to vector<1x64xf32>
    %362 = vector.extract_strided_slice %31 {offsets = [22, 0], sizes = [1, 64], strides = [1, 1]} : vector<28x256xf32> to vector<1x64xf32>
    %cst_93 = arith.constant dense<0.000000e+00> : vector<15xf32>
    %363 = vector.multi_reduction <add>, %360, %cst_93 [1] : vector<15x64xf32> to vector<15xf32>
    %364 = vector.shape_cast %363 : vector<15xf32> to vector<15x1xf32>
    %cst_94 = arith.constant 6.400000e+01 : f32
    %365 = vector.broadcast %cst_94 : f32 to vector<15x1xf32>
    %366 = arith.divf %364, %365 : vector<15x1xf32>
    %367 = vector.broadcast %366 : vector<15x1xf32> to vector<15x64xf32>
    %368 = arith.subf %360, %367 : vector<15x64xf32>
    %369 = arith.mulf %368, %368 : vector<15x64xf32>
    %cst_95 = arith.constant dense<0.000000e+00> : vector<15xf32>
    %370 = vector.multi_reduction <add>, %369, %cst_95 [1] : vector<15x64xf32> to vector<15xf32>
    %371 = vector.shape_cast %370 : vector<15xf32> to vector<15x1xf32>
    %cst_96 = arith.constant 6.400000e+01 : f32
    %372 = vector.broadcast %cst_96 : f32 to vector<15x1xf32>
    %373 = arith.divf %371, %372 : vector<15x1xf32>
    %374 = vector.broadcast %366 : vector<15x1xf32> to vector<15x64xf32>
    %375 = arith.subf %360, %374 : vector<15x64xf32>
    %cst_97 = arith.constant 9.99999974E-6 : f32
    %376 = vector.broadcast %cst_97 : f32 to vector<15x1xf32>
    %377 = arith.addf %373, %376 : vector<15x1xf32>
    %378 = math.rsqrt %377 : vector<15x1xf32>
    %379 = vector.broadcast %378 : vector<15x1xf32> to vector<15x64xf32>
    %380 = arith.mulf %375, %379 : vector<15x64xf32>
    %381 = vector.broadcast %361 : vector<1x64xf32> to vector<15x64xf32>
    %382 = arith.mulf %380, %381 : vector<15x64xf32>
    %383 = vector.broadcast %362 : vector<1x64xf32> to vector<15x64xf32>
    %384 = arith.addf %382, %383 : vector<15x64xf32>
    %385 = vector.broadcast %6 : vector<15x1xf32> to vector<15x64xf32>
    %386 = arith.mulf %384, %385 : vector<15x64xf32>
    %c1 = arith.constant 1 : index
    %c0_98 = arith.constant 0 : index
    %c0_99 = arith.constant 0 : index
    %387 = vector.load %arg14[%c1, %c0_98, %c0_99] : memref<2x28x256xf32, #tpu.memory_space<vmem>>, vector<1x28x256xf32>
    %388 = vector.shape_cast %387 : vector<1x28x256xf32> to vector<28x256xf32>
    %389 = vector.extract_strided_slice %388 {offsets = [0, 0], sizes = [1, 64], strides = [1, 1]} : vector<28x256xf32> to vector<1x64xf32>
    %390 = vector.extract_strided_slice %388 {offsets = [1, 0], sizes = [1, 64], strides = [1, 1]} : vector<28x256xf32> to vector<1x64xf32>
    %cst_100 = arith.constant dense<0.000000e+00> : vector<15xf32>
    %391 = vector.multi_reduction <add>, %386, %cst_100 [1] : vector<15x64xf32> to vector<15xf32>
    %392 = vector.shape_cast %391 : vector<15xf32> to vector<15x1xf32>
    %cst_101 = arith.constant 6.400000e+01 : f32
    %393 = vector.broadcast %cst_101 : f32 to vector<15x1xf32>
    %394 = arith.divf %392, %393 : vector<15x1xf32>
    %395 = vector.broadcast %394 : vector<15x1xf32> to vector<15x64xf32>
    %396 = arith.subf %386, %395 : vector<15x64xf32>
    %397 = arith.mulf %396, %396 : vector<15x64xf32>
    %cst_102 = arith.constant dense<0.000000e+00> : vector<15xf32>
    %398 = vector.multi_reduction <add>, %397, %cst_102 [1] : vector<15x64xf32> to vector<15xf32>
    %399 = vector.shape_cast %398 : vector<15xf32> to vector<15x1xf32>
    %cst_103 = arith.constant 6.400000e+01 : f32
    %400 = vector.broadcast %cst_103 : f32 to vector<15x1xf32>
    %401 = arith.divf %399, %400 : vector<15x1xf32>
    %402 = vector.broadcast %394 : vector<15x1xf32> to vector<15x64xf32>
    %403 = arith.subf %386, %402 : vector<15x64xf32>
    %cst_104 = arith.constant 9.99999974E-6 : f32
    %404 = vector.broadcast %cst_104 : f32 to vector<15x1xf32>
    %405 = arith.addf %401, %404 : vector<15x1xf32>
    %406 = math.rsqrt %405 : vector<15x1xf32>
    %407 = vector.broadcast %406 : vector<15x1xf32> to vector<15x64xf32>
    %408 = arith.mulf %403, %407 : vector<15x64xf32>
    %409 = vector.broadcast %389 : vector<1x64xf32> to vector<15x64xf32>
    %410 = arith.mulf %408, %409 : vector<15x64xf32>
    %411 = vector.broadcast %390 : vector<1x64xf32> to vector<15x64xf32>
    %412 = arith.addf %410, %411 : vector<15x64xf32>
    %c1_105 = arith.constant 1 : index
    %c0_106 = arith.constant 0 : index
    %c0_107 = arith.constant 0 : index
    %413 = vector.load %arg6[%c1_105, %c0_106, %c0_107] : memref<2x64x256xbf16, #tpu.memory_space<vmem>>, vector<1x64x256xbf16>
    %414 = vector.shape_cast %413 : vector<1x64x256xbf16> to vector<64x256xbf16>
    %415 = arith.truncf %412 : vector<15x64xf32> to vector<15x64xbf16>
    %cst_108 = arith.constant dense<0.000000e+00> : vector<15x256xf32>
    %416 = tpu.matmul %415, %414, %cst_108 {dimension_numbers = #tpu.dot_dimension_numbers<[1], [0], [0], [1], [0, 0, 1, 1], [], []>} : vector<15x64xbf16>, vector<64x256xbf16>, vector<15x256xf32> -> vector<15x256xf32>
    %417 = vector.extract_strided_slice %388 {offsets = [2, 0], sizes = [1, 256], strides = [1, 1]} : vector<28x256xf32> to vector<1x256xf32>
    %418 = vector.broadcast %417 : vector<1x256xf32> to vector<15x256xf32>
    %419 = arith.addf %416, %418 : vector<15x256xf32>
    %420 = arith.negf %419 : vector<15x256xf32>
    %421 = math.exp %420 : vector<15x256xf32>
    %cst_109 = arith.constant 1.000000e+00 : f32
    %422 = vector.broadcast %cst_109 : f32 to vector<15x256xf32>
    %423 = arith.addf %422, %421 : vector<15x256xf32>
    %424 = arith.divf %422, %423 : vector<15x256xf32>
    %425 = arith.mulf %419, %424 : vector<15x256xf32>
    %c1_110 = arith.constant 1 : index
    %c0_111 = arith.constant 0 : index
    %c0_112 = arith.constant 0 : index
    %426 = vector.load %arg7[%c1_110, %c0_111, %c0_112] : memref<2x256x64xbf16, #tpu.memory_space<vmem>>, vector<1x256x64xbf16>
    %427 = vector.shape_cast %426 : vector<1x256x64xbf16> to vector<256x64xbf16>
    %428 = arith.truncf %425 : vector<15x256xf32> to vector<15x256xbf16>
    %cst_113 = arith.constant dense<0.000000e+00> : vector<15x64xf32>
    %429 = tpu.matmul %428, %427, %cst_113 {dimension_numbers = #tpu.dot_dimension_numbers<[1], [0], [0], [1], [0, 0, 1, 1], [], []>} : vector<15x256xbf16>, vector<256x64xbf16>, vector<15x64xf32> -> vector<15x64xf32>
    %430 = vector.extract_strided_slice %388 {offsets = [3, 0], sizes = [1, 64], strides = [1, 1]} : vector<28x256xf32> to vector<1x64xf32>
    %431 = vector.broadcast %430 : vector<1x64xf32> to vector<15x64xf32>
    %432 = arith.addf %429, %431 : vector<15x64xf32>
    %cst_114 = arith.constant 5.000000e-01 : f32
    %433 = vector.broadcast %cst_114 : f32 to vector<15x64xf32>
    %434 = arith.mulf %433, %432 : vector<15x64xf32>
    %435 = arith.addf %386, %434 : vector<15x64xf32>
    %436 = vector.extract_strided_slice %388 {offsets = [4, 0], sizes = [1, 64], strides = [1, 1]} : vector<28x256xf32> to vector<1x64xf32>
    %437 = vector.extract_strided_slice %388 {offsets = [5, 0], sizes = [1, 64], strides = [1, 1]} : vector<28x256xf32> to vector<1x64xf32>
    %cst_115 = arith.constant dense<0.000000e+00> : vector<15xf32>
    %438 = vector.multi_reduction <add>, %435, %cst_115 [1] : vector<15x64xf32> to vector<15xf32>
    %439 = vector.shape_cast %438 : vector<15xf32> to vector<15x1xf32>
    %cst_116 = arith.constant 6.400000e+01 : f32
    %440 = vector.broadcast %cst_116 : f32 to vector<15x1xf32>
    %441 = arith.divf %439, %440 : vector<15x1xf32>
    %442 = vector.broadcast %441 : vector<15x1xf32> to vector<15x64xf32>
    %443 = arith.subf %435, %442 : vector<15x64xf32>
    %444 = arith.mulf %443, %443 : vector<15x64xf32>
    %cst_117 = arith.constant dense<0.000000e+00> : vector<15xf32>
    %445 = vector.multi_reduction <add>, %444, %cst_117 [1] : vector<15x64xf32> to vector<15xf32>
    %446 = vector.shape_cast %445 : vector<15xf32> to vector<15x1xf32>
    %cst_118 = arith.constant 6.400000e+01 : f32
    %447 = vector.broadcast %cst_118 : f32 to vector<15x1xf32>
    %448 = arith.divf %446, %447 : vector<15x1xf32>
    %449 = vector.broadcast %441 : vector<15x1xf32> to vector<15x64xf32>
    %450 = arith.subf %435, %449 : vector<15x64xf32>
    %cst_119 = arith.constant 9.99999974E-6 : f32
    %451 = vector.broadcast %cst_119 : f32 to vector<15x1xf32>
    %452 = arith.addf %448, %451 : vector<15x1xf32>
    %453 = math.rsqrt %452 : vector<15x1xf32>
    %454 = vector.broadcast %453 : vector<15x1xf32> to vector<15x64xf32>
    %455 = arith.mulf %450, %454 : vector<15x64xf32>
    %456 = vector.broadcast %436 : vector<1x64xf32> to vector<15x64xf32>
    %457 = arith.mulf %455, %456 : vector<15x64xf32>
    %458 = vector.broadcast %437 : vector<1x64xf32> to vector<15x64xf32>
    %459 = arith.addf %457, %458 : vector<15x64xf32>
    %c1_120 = arith.constant 1 : index
    %c0_121 = arith.constant 0 : index
    %c0_122 = arith.constant 0 : index
    %460 = vector.load %arg8[%c1_120, %c0_121, %c0_122] : memref<2x64x192xbf16, #tpu.memory_space<vmem>>, vector<1x64x192xbf16>
    %461 = vector.shape_cast %460 : vector<1x64x192xbf16> to vector<64x192xbf16>
    %462 = arith.truncf %459 : vector<15x64xf32> to vector<15x64xbf16>
    %cst_123 = arith.constant dense<0.000000e+00> : vector<15x192xf32>
    %463 = tpu.matmul %462, %461, %cst_123 {dimension_numbers = #tpu.dot_dimension_numbers<[1], [0], [0], [1], [0, 0, 1, 1], [], []>} : vector<15x64xbf16>, vector<64x192xbf16>, vector<15x192xf32> -> vector<15x192xf32>
    %464 = vector.extract_strided_slice %388 {offsets = [6, 0], sizes = [1, 192], strides = [1, 1]} : vector<28x256xf32> to vector<1x192xf32>
    %465 = vector.broadcast %464 : vector<1x192xf32> to vector<15x192xf32>
    %466 = arith.addf %463, %465 : vector<15x192xf32>
    %467 = vector.extract_strided_slice %466 {offsets = [0, 0], sizes = [15, 16], strides = [1, 1]} : vector<15x192xf32> to vector<15x16xf32>
    %468 = arith.truncf %467 : vector<15x16xf32> to vector<15x16xbf16>
    %469 = vector.extract_strided_slice %466 {offsets = [0, 64], sizes = [15, 16], strides = [1, 1]} : vector<15x192xf32> to vector<15x16xf32>
    %470 = arith.truncf %469 : vector<15x16xf32> to vector<15x16xbf16>
    %471 = vector.extract_strided_slice %466 {offsets = [0, 128], sizes = [15, 16], strides = [1, 1]} : vector<15x192xf32> to vector<15x16xf32>
    %472 = arith.truncf %471 : vector<15x16xf32> to vector<15x16xbf16>
    %cst_124 = arith.constant dense<0.000000e+00> : vector<15x15xf32>
    %473 = tpu.matmul %468, %470, %cst_124 {dimension_numbers = #tpu.dot_dimension_numbers<[1], [1], [0], [0], [0, 0, 1, 0], [], []>} : vector<15x16xbf16>, vector<15x16xbf16>, vector<15x15xf32> -> vector<15x15xf32>
    %cst_125 = arith.constant 2.500000e-01 : f32
    %474 = vector.broadcast %cst_125 : f32 to vector<15x15xf32>
    %475 = arith.mulf %473, %474 : vector<15x15xf32>
    %476 = vector.broadcast %15 : vector<1x15xf32> to vector<15x15xf32>
    %477 = arith.addf %475, %476 : vector<15x15xf32>
    %cst_126 = arith.constant dense<0xFF800000> : vector<15xf32>
    %478 = vector.multi_reduction <maximumf>, %477, %cst_126 [1] : vector<15x15xf32> to vector<15xf32>
    %479 = vector.shape_cast %478 : vector<15xf32> to vector<15x1xf32>
    %480 = vector.broadcast %479 : vector<15x1xf32> to vector<15x15xf32>
    %481 = arith.subf %477, %480 : vector<15x15xf32>
    %482 = math.exp %481 : vector<15x15xf32>
    %cst_127 = arith.constant dense<0.000000e+00> : vector<15xf32>
    %483 = vector.multi_reduction <add>, %482, %cst_127 [1] : vector<15x15xf32> to vector<15xf32>
    %484 = vector.shape_cast %483 : vector<15xf32> to vector<15x1xf32>
    %485 = tpu.reciprocal %484 {approx = true} : vector<15x1xf32> -> vector<15x1xf32>
    %486 = vector.broadcast %485 : vector<15x1xf32> to vector<15x15xf32>
    %487 = arith.mulf %482, %486 : vector<15x15xf32>
    %488 = arith.truncf %487 : vector<15x15xf32> to vector<15x15xbf16>
    %cst_128 = arith.constant dense<0.000000e+00> : vector<15x16xf32>
    %489 = tpu.matmul %488, %472, %cst_128 {dimension_numbers = #tpu.dot_dimension_numbers<[1], [0], [0], [1], [0, 0, 1, 1], [], []>} : vector<15x15xbf16>, vector<15x16xbf16>, vector<15x16xf32> -> vector<15x16xf32>
    %490 = vector.extract_strided_slice %466 {offsets = [0, 16], sizes = [15, 16], strides = [1, 1]} : vector<15x192xf32> to vector<15x16xf32>
    %491 = arith.truncf %490 : vector<15x16xf32> to vector<15x16xbf16>
    %492 = vector.extract_strided_slice %466 {offsets = [0, 80], sizes = [15, 16], strides = [1, 1]} : vector<15x192xf32> to vector<15x16xf32>
    %493 = arith.truncf %492 : vector<15x16xf32> to vector<15x16xbf16>
    %494 = vector.extract_strided_slice %466 {offsets = [0, 144], sizes = [15, 16], strides = [1, 1]} : vector<15x192xf32> to vector<15x16xf32>
    %495 = arith.truncf %494 : vector<15x16xf32> to vector<15x16xbf16>
    %cst_129 = arith.constant dense<0.000000e+00> : vector<15x15xf32>
    %496 = tpu.matmul %491, %493, %cst_129 {dimension_numbers = #tpu.dot_dimension_numbers<[1], [1], [0], [0], [0, 0, 1, 0], [], []>} : vector<15x16xbf16>, vector<15x16xbf16>, vector<15x15xf32> -> vector<15x15xf32>
    %cst_130 = arith.constant 2.500000e-01 : f32
    %497 = vector.broadcast %cst_130 : f32 to vector<15x15xf32>
    %498 = arith.mulf %496, %497 : vector<15x15xf32>
    %499 = vector.broadcast %15 : vector<1x15xf32> to vector<15x15xf32>
    %500 = arith.addf %498, %499 : vector<15x15xf32>
    %cst_131 = arith.constant dense<0xFF800000> : vector<15xf32>
    %501 = vector.multi_reduction <maximumf>, %500, %cst_131 [1] : vector<15x15xf32> to vector<15xf32>
    %502 = vector.shape_cast %501 : vector<15xf32> to vector<15x1xf32>
    %503 = vector.broadcast %502 : vector<15x1xf32> to vector<15x15xf32>
    %504 = arith.subf %500, %503 : vector<15x15xf32>
    %505 = math.exp %504 : vector<15x15xf32>
    %cst_132 = arith.constant dense<0.000000e+00> : vector<15xf32>
    %506 = vector.multi_reduction <add>, %505, %cst_132 [1] : vector<15x15xf32> to vector<15xf32>
    %507 = vector.shape_cast %506 : vector<15xf32> to vector<15x1xf32>
    %508 = tpu.reciprocal %507 {approx = true} : vector<15x1xf32> -> vector<15x1xf32>
    %509 = vector.broadcast %508 : vector<15x1xf32> to vector<15x15xf32>
    %510 = arith.mulf %505, %509 : vector<15x15xf32>
    %511 = arith.truncf %510 : vector<15x15xf32> to vector<15x15xbf16>
    %cst_133 = arith.constant dense<0.000000e+00> : vector<15x16xf32>
    %512 = tpu.matmul %511, %495, %cst_133 {dimension_numbers = #tpu.dot_dimension_numbers<[1], [0], [0], [1], [0, 0, 1, 1], [], []>} : vector<15x15xbf16>, vector<15x16xbf16>, vector<15x16xf32> -> vector<15x16xf32>
    %513 = vector.extract_strided_slice %466 {offsets = [0, 32], sizes = [15, 16], strides = [1, 1]} : vector<15x192xf32> to vector<15x16xf32>
    %514 = arith.truncf %513 : vector<15x16xf32> to vector<15x16xbf16>
    %515 = vector.extract_strided_slice %466 {offsets = [0, 96], sizes = [15, 16], strides = [1, 1]} : vector<15x192xf32> to vector<15x16xf32>
    %516 = arith.truncf %515 : vector<15x16xf32> to vector<15x16xbf16>
    %517 = vector.extract_strided_slice %466 {offsets = [0, 160], sizes = [15, 16], strides = [1, 1]} : vector<15x192xf32> to vector<15x16xf32>
    %518 = arith.truncf %517 : vector<15x16xf32> to vector<15x16xbf16>
    %cst_134 = arith.constant dense<0.000000e+00> : vector<15x15xf32>
    %519 = tpu.matmul %514, %516, %cst_134 {dimension_numbers = #tpu.dot_dimension_numbers<[1], [1], [0], [0], [0, 0, 1, 0], [], []>} : vector<15x16xbf16>, vector<15x16xbf16>, vector<15x15xf32> -> vector<15x15xf32>
    %cst_135 = arith.constant 2.500000e-01 : f32
    %520 = vector.broadcast %cst_135 : f32 to vector<15x15xf32>
    %521 = arith.mulf %519, %520 : vector<15x15xf32>
    %522 = vector.broadcast %15 : vector<1x15xf32> to vector<15x15xf32>
    %523 = arith.addf %521, %522 : vector<15x15xf32>
    %cst_136 = arith.constant dense<0xFF800000> : vector<15xf32>
    %524 = vector.multi_reduction <maximumf>, %523, %cst_136 [1] : vector<15x15xf32> to vector<15xf32>
    %525 = vector.shape_cast %524 : vector<15xf32> to vector<15x1xf32>
    %526 = vector.broadcast %525 : vector<15x1xf32> to vector<15x15xf32>
    %527 = arith.subf %523, %526 : vector<15x15xf32>
    %528 = math.exp %527 : vector<15x15xf32>
    %cst_137 = arith.constant dense<0.000000e+00> : vector<15xf32>
    %529 = vector.multi_reduction <add>, %528, %cst_137 [1] : vector<15x15xf32> to vector<15xf32>
    %530 = vector.shape_cast %529 : vector<15xf32> to vector<15x1xf32>
    %531 = tpu.reciprocal %530 {approx = true} : vector<15x1xf32> -> vector<15x1xf32>
    %532 = vector.broadcast %531 : vector<15x1xf32> to vector<15x15xf32>
    %533 = arith.mulf %528, %532 : vector<15x15xf32>
    %534 = arith.truncf %533 : vector<15x15xf32> to vector<15x15xbf16>
    %cst_138 = arith.constant dense<0.000000e+00> : vector<15x16xf32>
    %535 = tpu.matmul %534, %518, %cst_138 {dimension_numbers = #tpu.dot_dimension_numbers<[1], [0], [0], [1], [0, 0, 1, 1], [], []>} : vector<15x15xbf16>, vector<15x16xbf16>, vector<15x16xf32> -> vector<15x16xf32>
    %536 = vector.extract_strided_slice %466 {offsets = [0, 48], sizes = [15, 16], strides = [1, 1]} : vector<15x192xf32> to vector<15x16xf32>
    %537 = arith.truncf %536 : vector<15x16xf32> to vector<15x16xbf16>
    %538 = vector.extract_strided_slice %466 {offsets = [0, 112], sizes = [15, 16], strides = [1, 1]} : vector<15x192xf32> to vector<15x16xf32>
    %539 = arith.truncf %538 : vector<15x16xf32> to vector<15x16xbf16>
    %540 = vector.extract_strided_slice %466 {offsets = [0, 176], sizes = [15, 16], strides = [1, 1]} : vector<15x192xf32> to vector<15x16xf32>
    %541 = arith.truncf %540 : vector<15x16xf32> to vector<15x16xbf16>
    %cst_139 = arith.constant dense<0.000000e+00> : vector<15x15xf32>
    %542 = tpu.matmul %537, %539, %cst_139 {dimension_numbers = #tpu.dot_dimension_numbers<[1], [1], [0], [0], [0, 0, 1, 0], [], []>} : vector<15x16xbf16>, vector<15x16xbf16>, vector<15x15xf32> -> vector<15x15xf32>
    %cst_140 = arith.constant 2.500000e-01 : f32
    %543 = vector.broadcast %cst_140 : f32 to vector<15x15xf32>
    %544 = arith.mulf %542, %543 : vector<15x15xf32>
    %545 = vector.broadcast %15 : vector<1x15xf32> to vector<15x15xf32>
    %546 = arith.addf %544, %545 : vector<15x15xf32>
    %cst_141 = arith.constant dense<0xFF800000> : vector<15xf32>
    %547 = vector.multi_reduction <maximumf>, %546, %cst_141 [1] : vector<15x15xf32> to vector<15xf32>
    %548 = vector.shape_cast %547 : vector<15xf32> to vector<15x1xf32>
    %549 = vector.broadcast %548 : vector<15x1xf32> to vector<15x15xf32>
    %550 = arith.subf %546, %549 : vector<15x15xf32>
    %551 = math.exp %550 : vector<15x15xf32>
    %cst_142 = arith.constant dense<0.000000e+00> : vector<15xf32>
    %552 = vector.multi_reduction <add>, %551, %cst_142 [1] : vector<15x15xf32> to vector<15xf32>
    %553 = vector.shape_cast %552 : vector<15xf32> to vector<15x1xf32>
    %554 = tpu.reciprocal %553 {approx = true} : vector<15x1xf32> -> vector<15x1xf32>
    %555 = vector.broadcast %554 : vector<15x1xf32> to vector<15x15xf32>
    %556 = arith.mulf %551, %555 : vector<15x15xf32>
    %557 = arith.truncf %556 : vector<15x15xf32> to vector<15x15xbf16>
    %cst_143 = arith.constant dense<0.000000e+00> : vector<15x16xf32>
    %558 = tpu.matmul %557, %541, %cst_143 {dimension_numbers = #tpu.dot_dimension_numbers<[1], [0], [0], [1], [0, 0, 1, 1], [], []>} : vector<15x15xbf16>, vector<15x16xbf16>, vector<15x16xf32> -> vector<15x16xf32>
    %559 = tpu.concatenate %489, %512, %535, %558 in 1 : vector<15x16xf32>, vector<15x16xf32>, vector<15x16xf32>, vector<15x16xf32> -> vector<15x64xf32>
    %c1_144 = arith.constant 1 : index
    %c0_145 = arith.constant 0 : index
    %c0_146 = arith.constant 0 : index
    %560 = vector.load %arg9[%c1_144, %c0_145, %c0_146] : memref<2x64x64xbf16, #tpu.memory_space<vmem>>, vector<1x64x64xbf16>
    %561 = vector.shape_cast %560 : vector<1x64x64xbf16> to vector<64x64xbf16>
    %562 = arith.truncf %559 : vector<15x64xf32> to vector<15x64xbf16>
    %cst_147 = arith.constant dense<0.000000e+00> : vector<15x64xf32>
    %563 = tpu.matmul %562, %561, %cst_147 {dimension_numbers = #tpu.dot_dimension_numbers<[1], [0], [0], [1], [0, 0, 1, 1], [], []>} : vector<15x64xbf16>, vector<64x64xbf16>, vector<15x64xf32> -> vector<15x64xf32>
    %564 = arith.addf %435, %563 : vector<15x64xf32>
    %565 = vector.extract_strided_slice %388 {offsets = [7, 0], sizes = [1, 64], strides = [1, 1]} : vector<28x256xf32> to vector<1x64xf32>
    %566 = vector.broadcast %565 : vector<1x64xf32> to vector<15x64xf32>
    %567 = arith.addf %564, %566 : vector<15x64xf32>
    %568 = vector.broadcast %6 : vector<15x1xf32> to vector<15x64xf32>
    %569 = arith.mulf %567, %568 : vector<15x64xf32>
    %570 = vector.extract_strided_slice %388 {offsets = [8, 0], sizes = [1, 64], strides = [1, 1]} : vector<28x256xf32> to vector<1x64xf32>
    %571 = vector.extract_strided_slice %388 {offsets = [9, 0], sizes = [1, 64], strides = [1, 1]} : vector<28x256xf32> to vector<1x64xf32>
    %cst_148 = arith.constant dense<0.000000e+00> : vector<15xf32>
    %572 = vector.multi_reduction <add>, %569, %cst_148 [1] : vector<15x64xf32> to vector<15xf32>
    %573 = vector.shape_cast %572 : vector<15xf32> to vector<15x1xf32>
    %cst_149 = arith.constant 6.400000e+01 : f32
    %574 = vector.broadcast %cst_149 : f32 to vector<15x1xf32>
    %575 = arith.divf %573, %574 : vector<15x1xf32>
    %576 = vector.broadcast %575 : vector<15x1xf32> to vector<15x64xf32>
    %577 = arith.subf %569, %576 : vector<15x64xf32>
    %578 = arith.mulf %577, %577 : vector<15x64xf32>
    %cst_150 = arith.constant dense<0.000000e+00> : vector<15xf32>
    %579 = vector.multi_reduction <add>, %578, %cst_150 [1] : vector<15x64xf32> to vector<15xf32>
    %580 = vector.shape_cast %579 : vector<15xf32> to vector<15x1xf32>
    %cst_151 = arith.constant 6.400000e+01 : f32
    %581 = vector.broadcast %cst_151 : f32 to vector<15x1xf32>
    %582 = arith.divf %580, %581 : vector<15x1xf32>
    %583 = vector.broadcast %575 : vector<15x1xf32> to vector<15x64xf32>
    %584 = arith.subf %569, %583 : vector<15x64xf32>
    %cst_152 = arith.constant 9.99999974E-6 : f32
    %585 = vector.broadcast %cst_152 : f32 to vector<15x1xf32>
    %586 = arith.addf %582, %585 : vector<15x1xf32>
    %587 = math.rsqrt %586 : vector<15x1xf32>
    %588 = vector.broadcast %587 : vector<15x1xf32> to vector<15x64xf32>
    %589 = arith.mulf %584, %588 : vector<15x64xf32>
    %590 = vector.broadcast %570 : vector<1x64xf32> to vector<15x64xf32>
    %591 = arith.mulf %589, %590 : vector<15x64xf32>
    %592 = vector.broadcast %571 : vector<1x64xf32> to vector<15x64xf32>
    %593 = arith.addf %591, %592 : vector<15x64xf32>
    %c1_153 = arith.constant 1 : index
    %c0_154 = arith.constant 0 : index
    %c0_155 = arith.constant 0 : index
    %594 = vector.load %arg10[%c1_153, %c0_154, %c0_155] : memref<2x64x128xbf16, #tpu.memory_space<vmem>>, vector<1x64x128xbf16>
    %595 = vector.shape_cast %594 : vector<1x64x128xbf16> to vector<64x128xbf16>
    %596 = arith.truncf %593 : vector<15x64xf32> to vector<15x64xbf16>
    %cst_156 = arith.constant dense<0.000000e+00> : vector<15x128xf32>
    %597 = tpu.matmul %596, %595, %cst_156 {dimension_numbers = #tpu.dot_dimension_numbers<[1], [0], [0], [1], [0, 0, 1, 1], [], []>} : vector<15x64xbf16>, vector<64x128xbf16>, vector<15x128xf32> -> vector<15x128xf32>
    %598 = vector.extract_strided_slice %388 {offsets = [10, 0], sizes = [1, 128], strides = [1, 1]} : vector<28x256xf32> to vector<1x128xf32>
    %599 = vector.broadcast %598 : vector<1x128xf32> to vector<15x128xf32>
    %600 = arith.addf %597, %599 : vector<15x128xf32>
    %601 = vector.extract_strided_slice %600 {offsets = [0, 0], sizes = [15, 64], strides = [1, 1]} : vector<15x128xf32> to vector<15x64xf32>
    %602 = vector.extract_strided_slice %600 {offsets = [0, 64], sizes = [15, 64], strides = [1, 1]} : vector<15x128xf32> to vector<15x64xf32>
    %603 = arith.negf %602 : vector<15x64xf32>
    %604 = math.exp %603 : vector<15x64xf32>
    %cst_157 = arith.constant 1.000000e+00 : f32
    %605 = vector.broadcast %cst_157 : f32 to vector<15x64xf32>
    %606 = arith.addf %605, %604 : vector<15x64xf32>
    %607 = arith.divf %605, %606 : vector<15x64xf32>
    %608 = arith.mulf %601, %607 : vector<15x64xf32>
    %609 = vector.broadcast %6 : vector<15x1xf32> to vector<15x64xf32>
    %610 = arith.mulf %608, %609 : vector<15x64xf32>
    %cst_158 = arith.constant 0.000000e+00 : f32
    %611 = vector.broadcast %cst_158 : f32 to vector<2x64xf32>
    %612 = tpu.concatenate %611, %610, %611 in 0 : vector<2x64xf32>, vector<15x64xf32>, vector<2x64xf32> -> vector<19x64xf32>
    %cst_159 = arith.constant 0.000000e+00 : f32
    %613 = vector.broadcast %cst_159 : f32 to vector<15x64xf32>
    %614 = vector.extract_strided_slice %612 {offsets = [0, 0], sizes = [15, 64], strides = [1, 1]} : vector<19x64xf32> to vector<15x64xf32>
    %615 = vector.extract_strided_slice %388 {offsets = [23, 0], sizes = [1, 64], strides = [1, 1]} : vector<28x256xf32> to vector<1x64xf32>
    %616 = vector.broadcast %615 : vector<1x64xf32> to vector<15x64xf32>
    %617 = arith.mulf %614, %616 : vector<15x64xf32>
    %618 = arith.addf %613, %617 : vector<15x64xf32>
    %619 = vector.extract_strided_slice %612 {offsets = [1, 0], sizes = [15, 64], strides = [1, 1]} : vector<19x64xf32> to vector<15x64xf32>
    %620 = vector.extract_strided_slice %388 {offsets = [24, 0], sizes = [1, 64], strides = [1, 1]} : vector<28x256xf32> to vector<1x64xf32>
    %621 = vector.broadcast %620 : vector<1x64xf32> to vector<15x64xf32>
    %622 = arith.mulf %619, %621 : vector<15x64xf32>
    %623 = arith.addf %618, %622 : vector<15x64xf32>
    %624 = vector.extract_strided_slice %612 {offsets = [2, 0], sizes = [15, 64], strides = [1, 1]} : vector<19x64xf32> to vector<15x64xf32>
    %625 = vector.extract_strided_slice %388 {offsets = [25, 0], sizes = [1, 64], strides = [1, 1]} : vector<28x256xf32> to vector<1x64xf32>
    %626 = vector.broadcast %625 : vector<1x64xf32> to vector<15x64xf32>
    %627 = arith.mulf %624, %626 : vector<15x64xf32>
    %628 = arith.addf %623, %627 : vector<15x64xf32>
    %629 = vector.extract_strided_slice %612 {offsets = [3, 0], sizes = [15, 64], strides = [1, 1]} : vector<19x64xf32> to vector<15x64xf32>
    %630 = vector.extract_strided_slice %388 {offsets = [26, 0], sizes = [1, 64], strides = [1, 1]} : vector<28x256xf32> to vector<1x64xf32>
    %631 = vector.broadcast %630 : vector<1x64xf32> to vector<15x64xf32>
    %632 = arith.mulf %629, %631 : vector<15x64xf32>
    %633 = arith.addf %628, %632 : vector<15x64xf32>
    %634 = vector.extract_strided_slice %612 {offsets = [4, 0], sizes = [15, 64], strides = [1, 1]} : vector<19x64xf32> to vector<15x64xf32>
    %635 = vector.extract_strided_slice %388 {offsets = [27, 0], sizes = [1, 64], strides = [1, 1]} : vector<28x256xf32> to vector<1x64xf32>
    %636 = vector.broadcast %635 : vector<1x64xf32> to vector<15x64xf32>
    %637 = arith.mulf %634, %636 : vector<15x64xf32>
    %638 = arith.addf %633, %637 : vector<15x64xf32>
    %639 = vector.extract_strided_slice %388 {offsets = [11, 0], sizes = [1, 64], strides = [1, 1]} : vector<28x256xf32> to vector<1x64xf32>
    %640 = vector.broadcast %639 : vector<1x64xf32> to vector<15x64xf32>
    %641 = arith.addf %638, %640 : vector<15x64xf32>
    %642 = vector.extract_strided_slice %388 {offsets = [14, 0], sizes = [1, 64], strides = [1, 1]} : vector<28x256xf32> to vector<1x64xf32>
    %643 = vector.broadcast %642 : vector<1x64xf32> to vector<15x64xf32>
    %644 = arith.subf %641, %643 : vector<15x64xf32>
    %645 = vector.extract_strided_slice %388 {offsets = [15, 0], sizes = [1, 64], strides = [1, 1]} : vector<28x256xf32> to vector<1x64xf32>
    %cst_160 = arith.constant 9.99999974E-6 : f32
    %646 = vector.broadcast %cst_160 : f32 to vector<1x64xf32>
    %647 = arith.addf %645, %646 : vector<1x64xf32>
    %648 = math.rsqrt %647 : vector<1x64xf32>
    %649 = vector.broadcast %648 : vector<1x64xf32> to vector<15x64xf32>
    %650 = arith.mulf %644, %649 : vector<15x64xf32>
    %651 = vector.extract_strided_slice %388 {offsets = [12, 0], sizes = [1, 64], strides = [1, 1]} : vector<28x256xf32> to vector<1x64xf32>
    %652 = vector.broadcast %651 : vector<1x64xf32> to vector<15x64xf32>
    %653 = arith.mulf %650, %652 : vector<15x64xf32>
    %654 = vector.extract_strided_slice %388 {offsets = [13, 0], sizes = [1, 64], strides = [1, 1]} : vector<28x256xf32> to vector<1x64xf32>
    %655 = vector.broadcast %654 : vector<1x64xf32> to vector<15x64xf32>
    %656 = arith.addf %653, %655 : vector<15x64xf32>
    %657 = arith.negf %656 : vector<15x64xf32>
    %658 = math.exp %657 : vector<15x64xf32>
    %cst_161 = arith.constant 1.000000e+00 : f32
    %659 = vector.broadcast %cst_161 : f32 to vector<15x64xf32>
    %660 = arith.addf %659, %658 : vector<15x64xf32>
    %661 = arith.divf %659, %660 : vector<15x64xf32>
    %662 = arith.mulf %656, %661 : vector<15x64xf32>
    %c1_162 = arith.constant 1 : index
    %c0_163 = arith.constant 0 : index
    %c0_164 = arith.constant 0 : index
    %663 = vector.load %arg11[%c1_162, %c0_163, %c0_164] : memref<2x64x64xbf16, #tpu.memory_space<vmem>>, vector<1x64x64xbf16>
    %664 = vector.shape_cast %663 : vector<1x64x64xbf16> to vector<64x64xbf16>
    %665 = arith.truncf %662 : vector<15x64xf32> to vector<15x64xbf16>
    %cst_165 = arith.constant dense<0.000000e+00> : vector<15x64xf32>
    %666 = tpu.matmul %665, %664, %cst_165 {dimension_numbers = #tpu.dot_dimension_numbers<[1], [0], [0], [1], [0, 0, 1, 1], [], []>} : vector<15x64xbf16>, vector<64x64xbf16>, vector<15x64xf32> -> vector<15x64xf32>
    %667 = vector.extract_strided_slice %388 {offsets = [16, 0], sizes = [1, 64], strides = [1, 1]} : vector<28x256xf32> to vector<1x64xf32>
    %668 = vector.broadcast %667 : vector<1x64xf32> to vector<15x64xf32>
    %669 = arith.addf %666, %668 : vector<15x64xf32>
    %670 = arith.addf %569, %669 : vector<15x64xf32>
    %671 = vector.extract_strided_slice %388 {offsets = [17, 0], sizes = [1, 64], strides = [1, 1]} : vector<28x256xf32> to vector<1x64xf32>
    %672 = vector.extract_strided_slice %388 {offsets = [18, 0], sizes = [1, 64], strides = [1, 1]} : vector<28x256xf32> to vector<1x64xf32>
    %cst_166 = arith.constant dense<0.000000e+00> : vector<15xf32>
    %673 = vector.multi_reduction <add>, %670, %cst_166 [1] : vector<15x64xf32> to vector<15xf32>
    %674 = vector.shape_cast %673 : vector<15xf32> to vector<15x1xf32>
    %cst_167 = arith.constant 6.400000e+01 : f32
    %675 = vector.broadcast %cst_167 : f32 to vector<15x1xf32>
    %676 = arith.divf %674, %675 : vector<15x1xf32>
    %677 = vector.broadcast %676 : vector<15x1xf32> to vector<15x64xf32>
    %678 = arith.subf %670, %677 : vector<15x64xf32>
    %679 = arith.mulf %678, %678 : vector<15x64xf32>
    %cst_168 = arith.constant dense<0.000000e+00> : vector<15xf32>
    %680 = vector.multi_reduction <add>, %679, %cst_168 [1] : vector<15x64xf32> to vector<15xf32>
    %681 = vector.shape_cast %680 : vector<15xf32> to vector<15x1xf32>
    %cst_169 = arith.constant 6.400000e+01 : f32
    %682 = vector.broadcast %cst_169 : f32 to vector<15x1xf32>
    %683 = arith.divf %681, %682 : vector<15x1xf32>
    %684 = vector.broadcast %676 : vector<15x1xf32> to vector<15x64xf32>
    %685 = arith.subf %670, %684 : vector<15x64xf32>
    %cst_170 = arith.constant 9.99999974E-6 : f32
    %686 = vector.broadcast %cst_170 : f32 to vector<15x1xf32>
    %687 = arith.addf %683, %686 : vector<15x1xf32>
    %688 = math.rsqrt %687 : vector<15x1xf32>
    %689 = vector.broadcast %688 : vector<15x1xf32> to vector<15x64xf32>
    %690 = arith.mulf %685, %689 : vector<15x64xf32>
    %691 = vector.broadcast %671 : vector<1x64xf32> to vector<15x64xf32>
    %692 = arith.mulf %690, %691 : vector<15x64xf32>
    %693 = vector.broadcast %672 : vector<1x64xf32> to vector<15x64xf32>
    %694 = arith.addf %692, %693 : vector<15x64xf32>
    %c1_171 = arith.constant 1 : index
    %c0_172 = arith.constant 0 : index
    %c0_173 = arith.constant 0 : index
    %695 = vector.load %arg12[%c1_171, %c0_172, %c0_173] : memref<2x64x256xbf16, #tpu.memory_space<vmem>>, vector<1x64x256xbf16>
    %696 = vector.shape_cast %695 : vector<1x64x256xbf16> to vector<64x256xbf16>
    %697 = arith.truncf %694 : vector<15x64xf32> to vector<15x64xbf16>
    %cst_174 = arith.constant dense<0.000000e+00> : vector<15x256xf32>
    %698 = tpu.matmul %697, %696, %cst_174 {dimension_numbers = #tpu.dot_dimension_numbers<[1], [0], [0], [1], [0, 0, 1, 1], [], []>} : vector<15x64xbf16>, vector<64x256xbf16>, vector<15x256xf32> -> vector<15x256xf32>
    %699 = vector.extract_strided_slice %388 {offsets = [19, 0], sizes = [1, 256], strides = [1, 1]} : vector<28x256xf32> to vector<1x256xf32>
    %700 = vector.broadcast %699 : vector<1x256xf32> to vector<15x256xf32>
    %701 = arith.addf %698, %700 : vector<15x256xf32>
    %702 = arith.negf %701 : vector<15x256xf32>
    %703 = math.exp %702 : vector<15x256xf32>
    %cst_175 = arith.constant 1.000000e+00 : f32
    %704 = vector.broadcast %cst_175 : f32 to vector<15x256xf32>
    %705 = arith.addf %704, %703 : vector<15x256xf32>
    %706 = arith.divf %704, %705 : vector<15x256xf32>
    %707 = arith.mulf %701, %706 : vector<15x256xf32>
    %c1_176 = arith.constant 1 : index
    %c0_177 = arith.constant 0 : index
    %c0_178 = arith.constant 0 : index
    %708 = vector.load %arg13[%c1_176, %c0_177, %c0_178] : memref<2x256x64xbf16, #tpu.memory_space<vmem>>, vector<1x256x64xbf16>
    %709 = vector.shape_cast %708 : vector<1x256x64xbf16> to vector<256x64xbf16>
    %710 = arith.truncf %707 : vector<15x256xf32> to vector<15x256xbf16>
    %cst_179 = arith.constant dense<0.000000e+00> : vector<15x64xf32>
    %711 = tpu.matmul %710, %709, %cst_179 {dimension_numbers = #tpu.dot_dimension_numbers<[1], [0], [0], [1], [0, 0, 1, 1], [], []>} : vector<15x256xbf16>, vector<256x64xbf16>, vector<15x64xf32> -> vector<15x64xf32>
    %712 = vector.extract_strided_slice %388 {offsets = [20, 0], sizes = [1, 64], strides = [1, 1]} : vector<28x256xf32> to vector<1x64xf32>
    %713 = vector.broadcast %712 : vector<1x64xf32> to vector<15x64xf32>
    %714 = arith.addf %711, %713 : vector<15x64xf32>
    %cst_180 = arith.constant 5.000000e-01 : f32
    %715 = vector.broadcast %cst_180 : f32 to vector<15x64xf32>
    %716 = arith.mulf %715, %714 : vector<15x64xf32>
    %717 = arith.addf %670, %716 : vector<15x64xf32>
    %718 = vector.extract_strided_slice %388 {offsets = [21, 0], sizes = [1, 64], strides = [1, 1]} : vector<28x256xf32> to vector<1x64xf32>
    %719 = vector.extract_strided_slice %388 {offsets = [22, 0], sizes = [1, 64], strides = [1, 1]} : vector<28x256xf32> to vector<1x64xf32>
    %cst_181 = arith.constant dense<0.000000e+00> : vector<15xf32>
    %720 = vector.multi_reduction <add>, %717, %cst_181 [1] : vector<15x64xf32> to vector<15xf32>
    %721 = vector.shape_cast %720 : vector<15xf32> to vector<15x1xf32>
    %cst_182 = arith.constant 6.400000e+01 : f32
    %722 = vector.broadcast %cst_182 : f32 to vector<15x1xf32>
    %723 = arith.divf %721, %722 : vector<15x1xf32>
    %724 = vector.broadcast %723 : vector<15x1xf32> to vector<15x64xf32>
    %725 = arith.subf %717, %724 : vector<15x64xf32>
    %726 = arith.mulf %725, %725 : vector<15x64xf32>
    %cst_183 = arith.constant dense<0.000000e+00> : vector<15xf32>
    %727 = vector.multi_reduction <add>, %726, %cst_183 [1] : vector<15x64xf32> to vector<15xf32>
    %728 = vector.shape_cast %727 : vector<15xf32> to vector<15x1xf32>
    %cst_184 = arith.constant 6.400000e+01 : f32
    %729 = vector.broadcast %cst_184 : f32 to vector<15x1xf32>
    %730 = arith.divf %728, %729 : vector<15x1xf32>
    %731 = vector.broadcast %723 : vector<15x1xf32> to vector<15x64xf32>
    %732 = arith.subf %717, %731 : vector<15x64xf32>
    %cst_185 = arith.constant 9.99999974E-6 : f32
    %733 = vector.broadcast %cst_185 : f32 to vector<15x1xf32>
    %734 = arith.addf %730, %733 : vector<15x1xf32>
    %735 = math.rsqrt %734 : vector<15x1xf32>
    %736 = vector.broadcast %735 : vector<15x1xf32> to vector<15x64xf32>
    %737 = arith.mulf %732, %736 : vector<15x64xf32>
    %738 = vector.broadcast %718 : vector<1x64xf32> to vector<15x64xf32>
    %739 = arith.mulf %737, %738 : vector<15x64xf32>
    %740 = vector.broadcast %719 : vector<1x64xf32> to vector<15x64xf32>
    %741 = arith.addf %739, %740 : vector<15x64xf32>
    %742 = vector.broadcast %6 : vector<15x1xf32> to vector<15x64xf32>
    %743 = arith.mulf %741, %742 : vector<15x64xf32>
    %c0_186 = arith.constant 0 : index
    %c0_187 = arith.constant 0 : index
    %744 = vector.load %arg5[%c0_186, %c0_187] : memref<64x128xbf16, #tpu.memory_space<vmem>>, vector<64x128xbf16>
    %745 = arith.truncf %743 : vector<15x64xf32> to vector<15x64xbf16>
    %cst_188 = arith.constant dense<0.000000e+00> : vector<15x128xf32>
    %746 = tpu.matmul %745, %744, %cst_188 {dimension_numbers = #tpu.dot_dimension_numbers<[1], [0], [0], [1], [0, 0, 1, 1], [], []>} : vector<15x64xbf16>, vector<64x128xbf16>, vector<15x128xf32> -> vector<15x128xf32>
    %747 = vector.broadcast %18 : vector<1x128xf32> to vector<15x128xf32>
    %748 = arith.addf %746, %747 : vector<15x128xf32>
    %cst_189 = arith.constant dense<0xFF800000> : vector<15xf32>
    %749 = vector.multi_reduction <maximumf>, %748, %cst_189 [1] : vector<15x128xf32> to vector<15xf32>
    %750 = vector.shape_cast %749 : vector<15xf32> to vector<15x1xf32>
    %751 = vector.broadcast %750 : vector<15x1xf32> to vector<15x128xf32>
    %752 = arith.subf %748, %751 : vector<15x128xf32>
    %753 = math.exp %752 : vector<15x128xf32>
    %cst_190 = arith.constant dense<0.000000e+00> : vector<15xf32>
    %754 = vector.multi_reduction <add>, %753, %cst_190 [1] : vector<15x128xf32> to vector<15xf32>
    %755 = vector.shape_cast %754 : vector<15xf32> to vector<15x1xf32>
    %756 = math.log %755 : vector<15x1xf32>
    %757 = vector.broadcast %756 : vector<15x1xf32> to vector<15x128xf32>
    %758 = arith.subf %752, %757 : vector<15x128xf32>
    %c0_191 = arith.constant 0 : index
    %c0_192 = arith.constant 0 : index
    %c0_193 = arith.constant 0 : index
    %759 = vector.load %arg15[%c0_191, %c0_192, %c0_193] : memref<1x15x128xf32, #tpu.memory_space<vmem>>, vector<1x15x128xf32>
    %760 = vector.shape_cast %759 : vector<1x15x128xf32> to vector<15x128xf32>
    %761 = vector.shape_cast %758 : vector<15x128xf32> to vector<1x15x128xf32>
    tpu.vector_store %arg15[%c0_191, %c0_192, %c0_193], %761 {strides = array<i32>} : memref<1x15x128xf32, #tpu.memory_space<vmem>>, vector<1x15x128xf32>,
    return
  }
  func.func @transform_0(%arg0: i32, %arg1: memref<2xi32, #tpu.memory_space<smem>>) -> (i32, i32, i32) {
    %c0_i32 = arith.constant 0 : i32
    %c0_i32_0 = arith.constant 0 : i32
    %c0_i32_1 = arith.constant 0 : i32
    return %arg0, %c0_i32, %c0_i32_0 : i32, i32, i32
  }
  func.func @transform_1(%arg0: i32, %arg1: memref<2xi32, #tpu.memory_space<smem>>) -> (i32, i32) {
    %c0_i32 = arith.constant 0 : i32
    %c0_i32_0 = arith.constant 0 : i32
    %c0_i32_1 = arith.constant 0 : i32
    return %c0_i32, %c0_i32_0 : i32, i32
  }
  func.func @transform_2(%arg0: i32, %arg1: memref<2xi32, #tpu.memory_space<smem>>) -> (i32, i32) {
    %c0_i32 = arith.constant 0 : i32
    %c0_i32_0 = arith.constant 0 : i32
    %c0_i32_1 = arith.constant 0 : i32
    return %c0_i32, %c0_i32_0 : i32, i32
  }
  func.func @transform_3(%arg0: i32, %arg1: memref<2xi32, #tpu.memory_space<smem>>) -> (i32, i32) {
    %c0_i32 = arith.constant 0 : i32
    %c0_i32_0 = arith.constant 0 : i32
    %c0_i32_1 = arith.constant 0 : i32
    return %c0_i32, %c0_i32_0 : i32, i32
  }
  func.func @transform_4(%arg0: i32, %arg1: memref<2xi32, #tpu.memory_space<smem>>) -> (i32, i32, i32) {
    %c0_i32 = arith.constant 0 : i32
    %c0_i32_0 = arith.constant 0 : i32
    %c0_i32_1 = arith.constant 0 : i32
    %c0_i32_2 = arith.constant 0 : i32
    return %c0_i32, %c0_i32_0, %c0_i32_1 : i32, i32, i32
  }
  func.func @transform_5(%arg0: i32, %arg1: memref<2xi32, #tpu.memory_space<smem>>) -> (i32, i32, i32) {
    %c0_i32 = arith.constant 0 : i32
    %c0_i32_0 = arith.constant 0 : i32
    %c0_i32_1 = arith.constant 0 : i32
    %c0_i32_2 = arith.constant 0 : i32
    return %c0_i32, %c0_i32_0, %c0_i32_1 : i32, i32, i32
  }
  func.func @transform_6(%arg0: i32, %arg1: memref<2xi32, #tpu.memory_space<smem>>) -> (i32, i32, i32) {
    %c0_i32 = arith.constant 0 : i32
    %c0_i32_0 = arith.constant 0 : i32
    %c0_i32_1 = arith.constant 0 : i32
    %c0_i32_2 = arith.constant 0 : i32
    return %c0_i32, %c0_i32_0, %c0_i32_1 : i32, i32, i32
  }
  func.func @transform_7(%arg0: i32, %arg1: memref<2xi32, #tpu.memory_space<smem>>) -> (i32, i32, i32) {
    %c0_i32 = arith.constant 0 : i32
    %c0_i32_0 = arith.constant 0 : i32
    %c0_i32_1 = arith.constant 0 : i32
    %c0_i32_2 = arith.constant 0 : i32
    return %c0_i32, %c0_i32_0, %c0_i32_1 : i32, i32, i32
  }
  func.func @transform_8(%arg0: i32, %arg1: memref<2xi32, #tpu.memory_space<smem>>) -> (i32, i32, i32) {
    %c0_i32 = arith.constant 0 : i32
    %c0_i32_0 = arith.constant 0 : i32
    %c0_i32_1 = arith.constant 0 : i32
    %c0_i32_2 = arith.constant 0 : i32
    return %c0_i32, %c0_i32_0, %c0_i32_1 : i32, i32, i32
  }
  func.func @transform_9(%arg0: i32, %arg1: memref<2xi32, #tpu.memory_space<smem>>) -> (i32, i32, i32) {
    %c0_i32 = arith.constant 0 : i32
    %c0_i32_0 = arith.constant 0 : i32
    %c0_i32_1 = arith.constant 0 : i32
    %c0_i32_2 = arith.constant 0 : i32
    return %c0_i32, %c0_i32_0, %c0_i32_1 : i32, i32, i32
  }
  func.func @transform_10(%arg0: i32, %arg1: memref<2xi32, #tpu.memory_space<smem>>) -> (i32, i32, i32) {
    %c0_i32 = arith.constant 0 : i32
    %c0_i32_0 = arith.constant 0 : i32
    %c0_i32_1 = arith.constant 0 : i32
    %c0_i32_2 = arith.constant 0 : i32
    return %c0_i32, %c0_i32_0, %c0_i32_1 : i32, i32, i32
  }
  func.func @transform_11(%arg0: i32, %arg1: memref<2xi32, #tpu.memory_space<smem>>) -> (i32, i32, i32) {
    %c0_i32 = arith.constant 0 : i32
    %c0_i32_0 = arith.constant 0 : i32
    %c0_i32_1 = arith.constant 0 : i32
    %c0_i32_2 = arith.constant 0 : i32
    return %c0_i32, %c0_i32_0, %c0_i32_1 : i32, i32, i32
  }
  func.func @transform_12(%arg0: i32, %arg1: memref<2xi32, #tpu.memory_space<smem>>) -> (i32, i32, i32) {
    %c0_i32 = arith.constant 0 : i32
    %c0_i32_0 = arith.constant 0 : i32
    %c0_i32_1 = arith.constant 0 : i32
    %c0_i32_2 = arith.constant 0 : i32
    return %c0_i32, %c0_i32_0, %c0_i32_1 : i32, i32, i32
  }
  func.func @transform_13(%arg0: i32, %arg1: memref<2xi32, #tpu.memory_space<smem>>) -> (i32, i32, i32) {
    %c0_i32 = arith.constant 0 : i32
    %c0_i32_0 = arith.constant 0 : i32
    %c0_i32_1 = arith.constant 0 : i32
    return %arg0, %c0_i32, %c0_i32_0 : i32, i32, i32
  }
}

</mosaic_0001>

<llo_original>
// kernel: model_forward.2
$region0: #{model_forward.2}
  #allocation0 [shape = 'u32[]', space=smem, size = 0x4, offset = 0x4, fixed_abs, tag = 'smem constant byte address 0x4 - core index']
  #allocation1 [shape = 'u32[72,128]{1,0:T(1,128)}', space=vmem, size = 0x9000, scoped, tag = 'internal scratch']
  #allocation2 [shape = 's32[1]{0}', space=sflag, size = 0x4, scoped, tag = 'scoped memory for model_forward.2']
  #allocation3 [shape = 'u8[512]{0}', space=smem, size = 0x200, scoped, tag = 'prefetched SMEM operand 0']
  %s0 = inlined_call_operand.vmem [shape: s32[2], index: 0, kind: input, shape index: {}]
  %s1 = inlined_call_operand.vmem [shape: f32[2,63,64], index: 1, kind: input, shape index: {}]
  %s2 = inlined_call_operand.vmem [shape: f32[1,64], index: 2, kind: input, shape index: {}]
  %s3 = inlined_call_operand.vmem [shape: bf16[64,66], index: 3, kind: input, shape index: {}]
  %s4 = inlined_call_operand.vmem [shape: bf16[66,32], index: 4, kind: input, shape index: {}]
  %s5 = inlined_call_operand.vmem [shape: f32[4,15,63], index: 5, kind: input, shape index: {}]
  %s6 = inlined_call_operand.vmem [shape: f32[2,15,128], index: 6, kind: output, shape index: {}]
  %s7 = sld [smem:[#allocation0]]
  $region53: #{model_forward.2} parent=0
    _
  %s9 = ssub.s32 1, %s7
  %s10 = scalar_select 0, %s9, %s7
  %s12 = sshll.u32 %s0, 4
  %s13 = int_to_ptr.vmem [resolvable:$true] %s12
  %15 = dma.vmem_to_smem %s13, 16, [#allocation3], [#allocation2]
  %17 = dma.done [#allocation2], 16
  %18 = sfence
  loop: start=0, step=1, limit=4
  $region2: #{model_forward.2} parent=0 // loop_pre_header
    _
  $region3: #{model_forward.2} parent=0 // loop_header
    %s20 = sphi 0, %s24
    %p21 = scmp.ge.s32.totalorder %s20, 4
    %s30 = sphi 0, %s32
    %s33 = sphi 0, %s30
    %s34 = sphi 0, %s33
    %s50 = sphi 0, %s34
    %s54 = sphi 0, %s54
    %s56 = sphi 0, %s54
    %s57 = sphi 0, %s56
    %s71 = sphi 0, %s57
    %s75 = sphi 0, %s75
    %s77 = sphi 0, %s75
    %s78 = sphi 0, %s77
    %s92 = sphi 0, %s78
    %s96 = sphi 0, %s96
    %s98 = sphi 0, %s96
    %s99 = sphi 0, %s98
    %s113 = sphi 0, %s99
    %s117 = sphi 0, %s117
    %s119 = sphi 0, %s117
    %s120 = sphi 0, %s119
    %s134 = sphi 0, %s120
    %s140 = sphi 0, %s142
    %s143 = sphi 0, %s140
    %s144 = sphi 0, %s143
    %s160 = sphi 0, %s144
  $region4: #{model_forward.2} parent=0 // loop_header_branch
    %23 = sbr.rel (%p21) target = $region8
  $region5: #{model_forward.2} parent=0 // loop_body
    %s25 = ssub.s32 %s20, 1
    %s26 = ssub.s32 %s20, 2
    %s27 = sadd.s32 %s20, 1
    %s28 = ssub.s32 %s20, %s27
    %p29 = scmp.eq.s32.totalorder %s28, 0
    %s31 = sadd.s32 %s30, 1
    %s32 = scalar_select %p29, %s30, %s31
    %p35 = pneg %p29
    %p36 = scmp.eq.s32.totalorder %s20, 1
    %p37 = por %p35, %p36
    %p38 = scmp.ne.s32.totalorder %s30, %s33
    %p39 = scmp.eq.s32.totalorder %s20, 0
    %p40 = por %p38, %p39
    %p41 = scmp.ne.s32.totalorder %s30, %s33
    %p42 = scmp.eq.s32.totalorder %s25, 1
    %p43 = por %p41, %p42
    %p44 = scmp.ne.s32.totalorder %s33, %s34
    %p45 = scmp.eq.s32.totalorder %s25, 0
    %p46 = por %p44, %p45
    %p47 = scmp.ne.s32.totalorder %s33, %s34
    %p48 = scmp.eq.s32.totalorder %s26, 1
    %p49 = por %p47, %p48
    %p51 = scmp.ne.s32.totalorder %s34, %s50
    %p52 = scmp.eq.s32.totalorder %s26, 0
    %p53 = por %p51, %p52
    %s55 = sadd.s32 %s54, 1
    %p58 = scmp.eq.s32.totalorder %s20, 1
    %p59 = scmp.ne.s32.totalorder %s54, %s56
    %p60 = scmp.eq.s32.totalorder %s20, 0
    %p61 = por %p59, %p60
    %p62 = scmp.ne.s32.totalorder %s54, %s56
    %p63 = scmp.eq.s32.totalorder %s25, 1
    %p64 = por %p62, %p63
    %p65 = scmp.ne.s32.totalorder %s56, %s57
    %p66 = scmp.eq.s32.totalorder %s25, 0
    %p67 = por %p65, %p66
    %p68 = scmp.ne.s32.totalorder %s56, %s57
    %p69 = scmp.eq.s32.totalorder %s26, 1
    %p70 = por %p68, %p69
    %p72 = scmp.ne.s32.totalorder %s57, %s71
    %p73 = scmp.eq.s32.totalorder %s26, 0
    %p74 = por %p72, %p73
    %s76 = sadd.s32 %s75, 1
    %p79 = scmp.eq.s32.totalorder %s20, 1
    %p80 = scmp.ne.s32.totalorder %s75, %s77
    %p81 = scmp.eq.s32.totalorder %s20, 0
    %p82 = por %p80, %p81
    %p83 = scmp.ne.s32.totalorder %s75, %s77
    %p84 = scmp.eq.s32.totalorder %s25, 1
    %p85 = por %p83, %p84
    %p86 = scmp.ne.s32.totalorder %s77, %s78
    %p87 = scmp.eq.s32.totalorder %s25, 0
    %p88 = por %p86, %p87
    %p89 = scmp.ne.s32.totalorder %s77, %s78
    %p90 = scmp.eq.s32.totalorder %s26, 1
    %p91 = por %p89, %p90
    %p93 = scmp.ne.s32.totalorder %s78, %s92
    %p94 = scmp.eq.s32.totalorder %s26, 0
    %p95 = por %p93, %p94
    %s97 = sadd.s32 %s96, 1
    %p100 = scmp.eq.s32.totalorder %s20, 1
    %p101 = scmp.ne.s32.totalorder %s96, %s98
    %p102 = scmp.eq.s32.totalorder %s20, 0
    %p103 = por %p101, %p102
    %p104 = scmp.ne.s32.totalorder %s96, %s98
    %p105 = scmp.eq.s32.totalorder %s25, 1
    %p106 = por %p104, %p105
    %p107 = scmp.ne.s32.totalorder %s98, %s99
    %p108 = scmp.eq.s32.totalorder %s25, 0
    %p109 = por %p107, %p108
    %p110 = scmp.ne.s32.totalorder %s98, %s99
    %p111 = scmp.eq.s32.totalorder %s26, 1
    %p112 = por %p110, %p111
    %p114 = scmp.ne.s32.totalorder %s99, %s113
    %p115 = scmp.eq.s32.totalorder %s26, 0
    %p116 = por %p114, %p115
    %s118 = sadd.s32 %s117, 1
    %p121 = scmp.eq.s32.totalorder %s20, 1
    %p122 = scmp.ne.s32.totalorder %s117, %s119
    %p123 = scmp.eq.s32.totalorder %s20, 0
    %p124 = por %p122, %p123
    %p125 = scmp.ne.s32.totalorder %s117, %s119
    %p126 = scmp.eq.s32.totalorder %s25, 1
    %p127 = por %p125, %p126
    %p128 = scmp.ne.s32.totalorder %s119, %s120
    %p129 = scmp.eq.s32.totalorder %s25, 0
    %p130 = por %p128, %p129
    %p131 = scmp.ne.s32.totalorder %s119, %s120
    %p132 = scmp.eq.s32.totalorder %s26, 1
    %p133 = por %p131, %p132
    %p135 = scmp.ne.s32.totalorder %s120, %s134
    %p136 = scmp.eq.s32.totalorder %s26, 0
    %p137 = por %p135, %p136
    %s138 = ssub.s32 %s20, %s27
    %p139 = scmp.eq.s32.totalorder %s138, 0
    %s141 = sadd.s32 %s140, 1
    %s142 = scalar_select %p139, %s140, %s141
    %p145 = pneg %p139
    %p146 = scmp.eq.s32.totalorder %s20, 1
    %p147 = por %p145, %p146
    %p148 = scmp.ne.s32.totalorder %s140, %s143
    %p149 = scmp.eq.s32.totalorder %s20, 0
    %p150 = por %p148, %p149
    %p151 = scmp.ne.s32.totalorder %s140, %s143
    %p152 = scmp.eq.s32.totalorder %s25, 1
    %p153 = por %p151, %p152
    %p154 = scmp.ne.s32.totalorder %s143, %s144
    %p155 = scmp.eq.s32.totalorder %s25, 0
    %p156 = por %p154, %p155
    %p157 = scmp.ne.s32.totalorder %s143, %s144
    %p158 = scmp.eq.s32.totalorder %s26, 1
    %p159 = por %p157, %p158
    %p161 = scmp.ne.s32.totalorder %s144, %s160
    %p162 = scmp.eq.s32.totalorder %s26, 0
    %p163 = por %p161, %p162
    %p164 = scmp.le.s32.totalorder 1, %s20
    %p165 = scmp.lt.s32.totalorder %s20, 3
    %p166 = pnand %p164, %p165
    %p167 = pneg %p166
    // Predicated region
    $region9: #{model_forward.2} parent=5 // pred_check
      _
    $region10: #{model_forward.2} parent=5 // pred_check_branch
      %169 = sbr.rel (%p166) target = $region12
    $region11: #{model_forward.2} parent=5 // pred_region
      %s170 = ssub.s32 %s20, 1
      // Predicated region
      $region13: #{model_forward.2} parent=11 // pred_check
        %p171 = pneg %p67
      $region14: #{model_forward.2} parent=11 // pred_check_branch
        %173 = sbr.rel (%p171) target = $region16
      $region15: #{model_forward.2} parent=11 // pred_region
        _
      $region16: #{model_forward.2} parent=11 // pred_fallthru
        _
      // Predicated region
      $region17: #{model_forward.2} parent=11 // pred_check
        %p174 = pneg %p88
      $region18: #{model_forward.2} parent=11 // pred_check_branch
        %176 = sbr.rel (%p174) target = $region20
      $region19: #{model_forward.2} parent=11 // pred_region
        _
      $region20: #{model_forward.2} parent=11 // pred_fallthru
        _
      // Predicated region
      $region21: #{model_forward.2} parent=11 // pred_check
        %p177 = pneg %p109
      $region22: #{model_forward.2} parent=11 // pred_check_branch
        %179 = sbr.rel (%p177) target = $region24
      $region23: #{model_forward.2} parent=11 // pred_region
        _
      $region24: #{model_forward.2} parent=11 // pred_fallthru
        _
      // Predicated region
      $region25: #{model_forward.2} parent=11 // pred_check
        %p180 = pneg %p130
      $region26: #{model_forward.2} parent=11 // pred_check_branch
        %182 = sbr.rel (%p180) target = $region28
      $region27: #{model_forward.2} parent=11 // pred_region
        _
      $region28: #{model_forward.2} parent=11 // pred_fallthru
        _
    $region12: #{model_forward.2} parent=5 // pred_fallthru
      _
    %p183 = scmp.lt.s32.totalorder %s20, 2
    // Predicated region
    $region29: #{model_forward.2} parent=5 // pred_check
      %p184 = pneg %p183
    $region30: #{model_forward.2} parent=5 // pred_check_branch
      %186 = sbr.rel (%p184) target = $region32
    $region31: #{model_forward.2} parent=5 // pred_region
      // Predicated region
      $region33: #{model_forward.2} parent=31 // pred_check
        %p187 = pneg %p40
      $region34: #{model_forward.2} parent=31 // pred_check_branch
        %189 = sbr.rel (%p187) target = $region36
      $region35: #{model_forward.2} parent=31 // pred_region
        %p190 = scmp.lt.s32.totalorder %s20, 1
        %s191 = scalar_select %p190, %s20, 1
        %s192 = smul.addr %s191, 8
        %s193 = smul.addr %s192, 8
        %s194 = scalar_lea.vmem %s1, %s193
      $region36: #{model_forward.2} parent=31 // pred_fallthru
        _
    $region32: #{model_forward.2} parent=5 // pred_fallthru
      _
    %p195 = scmp.le.s32.totalorder 1, %s20
    %p196 = scmp.lt.s32.totalorder %s20, 3
    %p197 = pnand %p195, %p196
    %p198 = pneg %p197
    // Predicated region
    $region37: #{model_forward.2} parent=5 // pred_check
      _
    $region38: #{model_forward.2} parent=5 // pred_check_branch
      %200 = sbr.rel (%p197) target = $region40
    $region39: #{model_forward.2} parent=5 // pred_region
      %s201 = ssub.s32 %s20, 1
      %p202 = scmp.lt.s32.totalorder %s25, 1
      %s203 = scalar_select %p202, %s25, 1
      %s204 = smul.addr %s203, 8
      %s205 = smul.addr %s204, 8
      %s206 = scalar_lea.vmem %s1, %s205
      %p207 = pneg %p46
      %p208 = pneg %p43
      %p209 = pneg %p67
      %p210 = pneg %p64
      %p211 = pneg %p88
      %p212 = pneg %p85
      %p213 = pneg %p109
      %p214 = pneg %p106
      %p215 = pneg %p130
      %p216 = pneg %p127
      %p217 = pneg %p156
      %p218 = pneg %p153
      %p219 = scmp.lt.s32.totalorder %s25, 1
      %s220 = scalar_select %p219, %s25, 1
      %s221 = smul.addr %s220, 2
      %s222 = smul.addr %s221, 8
      %s223 = scalar_lea.vmem %s6, %s222
      %p224 = scmp.lt.s32.totalorder %s25, 1
      %s225 = scalar_select %p224, %s25, 1
      %s226 = smul.addr %s225, 8
      %s227 = smul.addr %s226, 8
      %s228 = scalar_lea.vmem %s1, %s227
      %p229 = scmp.lt.s32.totalorder %s25, 1
      %s230 = scalar_select %p229, %s25, 1
      %s231 = smul.addr %s230, 2
      %s232 = smul.addr %s231, 8
      %s233 = scalar_lea.vmem %s6, %s232
      %s235 = sld [smem:[#allocation3 + %s25]]
      %v236 = vlaneseq
      %v237 = vshrl.u32 %v236, 7
      %v238 = vadd.s32 %v237, 8
      %v239 = vadd.s32 %v237, 16
      %v240 = vadd.s32 %v237, 24
      %v241 = vadd.s32 %v237, 32
      %v242 = vadd.s32 %v237, 40
      %v243 = vadd.s32 %v237, 48
      %v244 = vadd.s32 %v237, 56
      %v245 = vstv %s235
      %vm246 = vcmp.lt.s32.totalorder %v237, %v245
      %vm247 = vcmp.lt.s32.totalorder %v238, %v245
      %vm248 = vcmp.lt.s32.totalorder %v239, %v245
      %vm249 = vcmp.lt.s32.totalorder %v240, %v245
      %vm250 = vcmp.lt.s32.totalorder %v241, %v245
      %vm251 = vcmp.lt.s32.totalorder %v242, %v245
      %vm252 = vcmp.lt.s32.totalorder %v243, %v245
      %vm253 = vcmp.lt.s32.totalorder %v244, %v245
      %v254 = vsel %vm246, 1, 0
      %v255 = vsel %vm247, 1, 0
      %v256 = vsel %vm248, 1, 0
      %v257 = vsel %vm249, 1, 0
      %v258 = vsel %vm250, 1, 0
      %v259 = vsel %vm251, 1, 0
      %v260 = vsel %vm252, 1, 0
      %v261 = vsel %vm253, 1, 0
      %v262 = vcvt.s32.f32 %v254
      %v263 = vcvt.s32.f32 %v255
      %v264 = vcvt.s32.f32 %v256
      %v265 = vcvt.s32.f32 %v257
      %v266 = vcvt.s32.f32 %v258
      %v267 = vcvt.s32.f32 %v259
      %v268 = vcvt.s32.f32 %v260
      %v269 = vcvt.s32.f32 %v261
      %v270 = vld [vmem:[%s228] sm:$0xff]
      %v271 = vld [vmem:[%s228 + $0x8] sm:$0xff]
      %v272 = vld [vmem:[%s228 + $0x10] sm:$0xff]
      %v273 = vld [vmem:[%s228 + $0x18] sm:$0xff]
      %v274 = vld [vmem:[%s228 + $0x20] sm:$0xff]
      %v275 = vld [vmem:[%s228 + $0x28] sm:$0xff]
      %v276 = vld [vmem:[%s228 + $0x30] sm:$0xff]
      %v277 = vld [vmem:[%s228 + $0x38] sm:$0x7f]
      %v278 = vld [vmem:[%s2] sm:$0x1]
      %v280 = vperm.slane %v278, 0
      %v282 = vmul.f32 %v270, %v280
      %v283 = vmul.f32 %v271, %v280
      %v284 = vmul.f32 %v272, %v280
      %v285 = vmul.f32 %v273, %v280
      %v286 = vmul.f32 %v274, %v280
      %v287 = vmul.f32 %v275, %v280
      %v288 = vmul.f32 %v276, %v280
      %v289 = vmul.f32 %v277, %v280
      %v290 = vpack.c.bf16 %v283, %v282
      %v291 = vpack.c.bf16 %v285, %v284
      %v292 = vpack.c.bf16 %v287, %v286
      %v293 = vpack.c.bf16 %v289, %v288
      %v294 = vld [vmem:[%s3] sm:$0xf]
      %v295 = vld [vmem:[%s3 + $0x4] sm:$0xf]
      %v296 = vld [vmem:[%s3 + $0x8] sm:$0xf]
      %v297 = vld [vmem:[%s3 + $0xc] sm:$0xf]
      %v298 = vld [vmem:[%s3 + $0x10] sm:$0xf]
      %v299 = vld [vmem:[%s3 + $0x14] sm:$0xf]
      %v300 = vld [vmem:[%s3 + $0x18] sm:$0xf]
      %v301 = vld [vmem:[%s3 + $0x1c] sm:$0xf]
      %v310 = vunpack.c.l.b16 %v294
      %v311 = vunpack.c.l.b16 %v295
      %v312 = vunpack.c.l.b16 %v296
      %v313 = vunpack.c.l.b16 %v297
      %v314 = vunpack.c.l.b16 %v298
      %v315 = vunpack.c.l.b16 %v299
      %v316 = vunpack.c.l.b16 %v300
      %v317 = vunpack.c.l.b16 %v301
      %v318 = vpack.c.b16 %v311, %v310
      %v319 = vpack.c.b16 %v313, %v312
      %v320 = vpack.c.b16 %v315, %v314
      %v321 = vpack.c.b16 %v317, %v316
      %vm326 = vcmask 523264
      %v328 = vsel %vm326, %v290, 0
      %v331 = vsel %vm326, %v291, 0
      %v334 = vsel %vm326, %v292, 0
      %v337 = vsel %vm326, %v293, 0
      %339 = vmatpush.bf16.msra.mxu0 0
      %340 = vmatpush.bf16.msra.mxu0 0
      %341 = vmatpush.bf16.msra.mxu0 0
      %342 = vmatpush.bf16.msra.mxu0 0
      %343 = vmatpush.bf16.msra.mxu0 %v321
      %344 = vmatpush.bf16.msra.mxu0 %v320
      %345 = vmatpush.bf16.msra.mxu0 %v319
      %346 = vmatpush.bf16.msra.mxu0 %v318
      %347 = vmatmul.bf16.gmra.mxu0 %v328
      %v348 = vpop.f32.mrf.mxu0
      %v349 = vadd.f32 0.0, %v348
      %v350 = vpop.f32.mrf.mxu0
      %v351 = vadd.f32 0.0, %v350
      %352 = vmatmul.bf16.gmra.mxu0 %v331
      %v353 = vpop.f32.mrf.mxu0
      %v354 = vadd.f32 0.0, %v353
      %v355 = vpop.f32.mrf.mxu0
      %v356 = vadd.f32 0.0, %v355
      %357 = vmatmul.bf16.gmra.mxu0 %v334
      %v358 = vpop.f32.mrf.mxu0
      %v359 = vadd.f32 0.0, %v358
      %v360 = vpop.f32.mrf.mxu0
      %v361 = vadd.f32 0.0, %v360
      %362 = vmatmul.bf16.gmra.mxu0 %v337
      %v363 = vpop.f32.mrf.mxu0
      %v364 = vadd.f32 0.0, %v363
      %v365 = vpop.f32.mrf.mxu0
      %v366 = vadd.f32 0.0, %v365
      %367 = vdwg.mxu0
      %v368 = vmul.f32 %v349, %v349
      %v369 = vmul.f32 %v351, %v351
      %v370 = vmul.f32 %v354, %v354
      %v371 = vmul.f32 %v356, %v356
      %v372 = vmul.f32 %v359, %v359
      %v373 = vmul.f32 %v361, %v361
      %v374 = vmul.f32 %v364, %v364
      %v375 = vmul.f32 %v366, %v366
      %v376 = vpack.c.bf16 %v369, %v368
      %v377 = vpack.c.bf16 %v371, %v370
      %v378 = vpack.c.bf16 %v373, %v372
      %v379 = vpack.c.bf16 %v375, %v374
      %v380 = vld [vmem:[%s4] sm:$0xf]
      %v381 = vld [vmem:[%s4 + $0x4] sm:$0xf]
      %v382 = vld [vmem:[%s4 + $0x8] sm:$0xf]
      %v383 = vld [vmem:[%s4 + $0xc] sm:$0xf]
      %v384 = vld [vmem:[%s4 + $0x10] sm:$0xf]
      %v385 = vld [vmem:[%s4 + $0x14] sm:$0xf]
      %v386 = vld [vmem:[%s4 + $0x18] sm:$0xf]
      %v387 = vld [vmem:[%s4 + $0x1c] sm:$0xf]
      %v388 = vld [vmem:[%s4 + $0x20] sm:$0x1]
      %v398 = vunpack.c.l.b16 %v380
      %v399 = vunpack.c.l.b16 %v381
      %v400 = vunpack.c.l.b16 %v382
      %v401 = vunpack.c.l.b16 %v383
      %v402 = vunpack.c.l.b16 %v384
      %v403 = vunpack.c.l.b16 %v385
      %v404 = vunpack.c.l.b16 %v386
      %v405 = vunpack.c.l.b16 %v387
      %v406 = vunpack.c.l.b16 %v388
      %v407 = vpack.c.b16 %v399, %v398
      %v408 = vpack.c.b16 %v401, %v400
      %v409 = vpack.c.b16 %v403, %v402
      %v410 = vpack.c.b16 %v405, %v404
      %v411 = vpack.c.b16 %v406, %v406
      %vm416 = vcmask 539648
      %v418 = vsel %vm416, %v376, 0
      %v421 = vsel %vm416, %v377, 0
      %v424 = vsel %vm416, %v378, 0
      %v427 = vsel %vm416, %v379, 0
      %vm429 = vcmask 1040384
      %v431 = vsel %vm429, %v411, 0
      %433 = vmatpush.bf16.msra.mxu0 0
      %434 = vmatpush.bf16.msra.mxu0 0
      %435 = vmatpush.bf16.msra.mxu0 0
      %436 = vmatpush.bf16.msra.mxu0 %v431
      %437 = vmatpush.bf16.msra.mxu0 %v410
      %438 = vmatpush.bf16.msra.mxu0 %v409
      %439 = vmatpush.bf16.msra.mxu0 %v408
      %440 = vmatpush.bf16.msra.mxu0 %v407
      %441 = vmatmul.bf16.gmra.mxu0 %v418
      %v442 = vpop.f32.mrf.mxu0
      %v443 = vadd.f32 5.9604645e-08, %v442
      %v444 = vpop.f32.mrf.mxu0
      %v445 = vadd.f32 5.9604645e-08, %v444
      %446 = vmatmul.bf16.gmra.mxu0 %v421
      %v447 = vpop.f32.mrf.mxu0
      %v448 = vadd.f32 5.9604645e-08, %v447
      %v449 = vpop.f32.mrf.mxu0
      %v450 = vadd.f32 5.9604645e-08, %v449
      %451 = vmatmul.bf16.gmra.mxu0 %v424
      %v452 = vpop.f32.mrf.mxu0
      %v453 = vadd.f32 5.9604645e-08, %v452
      %v454 = vpop.f32.mrf.mxu0
      %v455 = vadd.f32 5.9604645e-08, %v454
      %456 = vmatmul.bf16.gmra.mxu0 %v427
      %v457 = vpop.f32.mrf.mxu0
      %v458 = vadd.f32 5.9604645e-08, %v457
      %v459 = vpop.f32.mrf.mxu0
      %v460 = vadd.f32 5.9604645e-08, %v459
      %461 = vdwg.mxu0
      %v462 = vlog2.pop %v443
      %v463 = vmul.f32 %v462, 0.6931472
      %v464 = vlog2.pop %v445
      %v465 = vmul.f32 %v464, 0.6931472
      %v466 = vlog2.pop %v448
      %v467 = vmul.f32 %v466, 0.6931472
      %v468 = vlog2.pop %v450
      %v469 = vmul.f32 %v468, 0.6931472
      %v470 = vlog2.pop %v453
      %v471 = vmul.f32 %v470, 0.6931472
      %v472 = vlog2.pop %v455
      %v473 = vmul.f32 %v472, 0.6931472
      %v474 = vlog2.pop %v458
      %v475 = vmul.f32 %v474, 0.6931472
      %v476 = vlog2.pop %v460
      %v477 = vmul.f32 %v476, 0.6931472
      %v478 = vadd.f32 %v262, %v263
      %v479 = vadd.f32 %v478, %v264
      %v480 = vadd.f32 %v479, %v265
      %v481 = vadd.f32 %v480, %v266
      %v482 = vadd.f32 %v481, %v267
      %v483 = vadd.f32 %v482, %v268
      %vm484 = vcmask 1046528
      %v485 = vsel %vm484, %v269, 0.0
      %v486 = vadd.f32 %v483, %v485
      %v487 = vrot.slane %v486, 4
      %v488 = vadd.f32 %v486, %v487
      %v489 = vrot.slane %v488, 2
      %v490 = vadd.f32 %v488, %v489
      %v491 = vrot.slane %v490, 1
      %v492 = vadd.f32 %v490, %v491
      %v493 = vmax.f32 %v492, 1.0
      %v494 = vrcp.pop %v493
      %v495 = vmul.f32 %v463, %v262
      %v496 = vmul.f32 %v465, %v263
      %v497 = vmul.f32 %v467, %v264
      %v498 = vmul.f32 %v469, %v265
      %v499 = vmul.f32 %v471, %v266
      %v500 = vmul.f32 %v473, %v267
      %v501 = vmul.f32 %v475, %v268
      %v502 = vmul.f32 %v477, %v269
      %vm503 = vcmask 261120
      %v504 = vsel %vm503, %v495, 0.0
      %v505 = vsel %vm503, %v496, 0.0
      %v506 = vadd.f32 %v504, %v505
      %v507 = vsel %vm503, %v497, 0.0
      %v508 = vadd.f32 %v506, %v507
      %v509 = vsel %vm503, %v498, 0.0
      %v510 = vadd.f32 %v508, %v509
      %v511 = vsel %vm503, %v499, 0.0
      %v512 = vadd.f32 %v510, %v511
      %v513 = vsel %vm503, %v500, 0.0
      %v514 = vadd.f32 %v512, %v513
      %v515 = vsel %vm503, %v501, 0.0
      %v516 = vadd.f32 %v514, %v515
      %vm517 = vcmask 260096
      %v518 = vsel %vm517, %v502, 0.0
      %v519 = vadd.f32 %v516, %v518
      %v520 = vrot.slane %v519, 4
      %v521 = vadd.f32 %v519, %v520
      %v522 = vrot.slane %v521, 2
      %v523 = vadd.f32 %v521, %v522
      %v524 = vrot.slane %v523, 1
      %v525 = vadd.f32 %v523, %v524
      %v526 = vmul.f32 %v525, %v494
      %v527 = vsub.f32 %v463, %v526
      %v528 = vsub.f32 %v465, %v526
      %v529 = vsub.f32 %v467, %v526
      %v530 = vsub.f32 %v469, %v526
      %v531 = vsub.f32 %v471, %v526
      %v532 = vsub.f32 %v473, %v526
      %v533 = vsub.f32 %v475, %v526
      %v534 = vsub.f32 %v477, %v526
      %v535 = vmul.f32 %v527, %v262
      %v536 = vmul.f32 %v528, %v263
      %v537 = vmul.f32 %v529, %v264
      %v538 = vmul.f32 %v530, %v265
      %v539 = vmul.f32 %v531, %v266
      %v540 = vmul.f32 %v532, %v267
      %v541 = vmul.f32 %v533, %v268
      %v542 = vmul.f32 %v534, %v269
      %v543 = vmul.f32 %v535, %v535
      %v544 = vmul.f32 %v536, %v536
      %v545 = vmul.f32 %v537, %v537
      %v546 = vmul.f32 %v538, %v538
      %v547 = vmul.f32 %v539, %v539
      %v548 = vmul.f32 %v540, %v540
      %v549 = vmul.f32 %v541, %v541
      %v550 = vmul.f32 %v542, %v542
      %v551 = vsel %vm503, %v543, 0.0
      %v552 = vsel %vm503, %v544, 0.0
      %v553 = vadd.f32 %v551, %v552
      %v554 = vsel %vm503, %v545, 0.0
      %v555 = vadd.f32 %v553, %v554
      %v556 = vsel %vm503, %v546, 0.0
      %v557 = vadd.f32 %v555, %v556
      %v558 = vsel %vm503, %v547, 0.0
      %v559 = vadd.f32 %v557, %v558
      %v560 = vsel %vm503, %v548, 0.0
      %v561 = vadd.f32 %v559, %v560
      %v562 = vsel %vm503, %v549, 0.0
      %v563 = vadd.f32 %v561, %v562
      %v564 = vsel %vm517, %v550, 0.0
      %v565 = vadd.f32 %v563, %v564
      %v566 = vrot.slane %v565, 4
      %v567 = vadd.f32 %v565, %v566
      %v568 = vrot.slane %v567, 2
      %v569 = vadd.f32 %v567, %v568
      %v570 = vrot.slane %v569, 1
      %v571 = vadd.f32 %v569, %v570
      %v572 = vsub.f32 %v492, 1.0
      %v573 = vmax.f32 %v572, 1.0
      %v574 = vrcp.pop %v573
      %v575 = vmul.f32 %v573, %v574
      %v576 = vsub.f32 1.0, %v575
      %v577 = vmul.f32 %v574, %v576
      %v578 = vadd.f32 %v574, %v577
      %vm579 = vweird.f32 %v573
      %vm580 = vweird.f32 %v574
      %vm581 = vmor %vm579, %vm580
      %v582 = vsel %vm581, %v574, %v578
      %v583 = vand.u32 2147483647, %v573
      %vm584 = vcmp.eq.f32.partialorder %v583, 8.507059e+37
      %v585 = vand.u32 %v573, 2147483648
      %v586 = vor.u32 1.1754944e-38, %v585
      %v587 = vsel %vm584, %v586, %v582
      %v588 = vmul.f32 %v571, %v587
      %v589 = vrsqrt.pop %v588
      %v590 = vmul.f32 %v589, %v588
      %v591 = vmul.f32 %v590, %v589
      %v592 = vmul.f32 0.5, %v591
      %v593 = vsub.f32 1.5, %v592
      %v594 = vmul.f32 %v589, %v593
      %v595 = vmul.f32 %v588, %v594
      %vm596 = vcmp.eq.f32.partialorder %v588, inf
      %v597 = vsel %vm596, %v588, %v595
      %vm598 = vcmp.eq.f32.partialorder %v588, 0.0
      %v599 = vand.u32 %v588, 2147483648
      %v600 = vsel %vm598, %v599, %v597
      %v601 = vadd.f32 %v600, 1e-05
      %v602 = vrcp.pop %v601
      %v603 = vmul.f32 %v527, %v602
      %v604 = vmul.f32 %v528, %v602
      %v605 = vmul.f32 %v529, %v602
      %v606 = vmul.f32 %v530, %v602
      %v607 = vmul.f32 %v531, %v602
      %v608 = vmul.f32 %v532, %v602
      %v609 = vmul.f32 %v533, %v602
      %v610 = vmul.f32 %v534, %v602
      %v611 = vmul.f32 %v603, %v262
      %v612 = vmul.f32 %v604, %v263
      %v613 = vmul.f32 %v605, %v264
      %v614 = vmul.f32 %v606, %v265
      %v615 = vmul.f32 %v607, %v266
      %v616 = vmul.f32 %v608, %v267
      %v617 = vmul.f32 %v609, %v268
      %v618 = vmul.f32 %v610, %v269
      %v619 = vld [vmem:[%s5] sm:$0xff]
      %v620 = vld [vmem:[%s5 + $0x8] sm:$0x7f]
      %vm621 = vcmask 515072
      %v623 = vsel %vm621, %v619, 0
      %v626 = vsel %vm621, %v620, 0
      %v629 = vsel %vm484, %v618, 0
      %631 = vmatpush.msra.mxu0 0.0
      %632 = vmatpush.msra.mxu0 0.0
      %633 = vmatpush.msra.mxu0 0.0
      %634 = vmatpush.msra.mxu0 0.0
      %635 = vmatpush.msra.mxu0 0.0
      %636 = vmatpush.msra.mxu0 0.0
      %637 = vmatpush.msra.mxu0 0.0
      %638 = vmatpush.msra.mxu0 0.0
      %639 = vmatpush.msra.mxu0 %v629
      %640 = vmatpush.msra.mxu0 %v617
      %641 = vmatpush.msra.mxu0 %v616
      %642 = vmatpush.msra.mxu0 %v615
      %643 = vmatpush.msra.mxu0 %v614
      %644 = vmatpush.msra.mxu0 %v613
      %645 = vmatpush.msra.mxu0 %v612
      %646 = vmatpush.msra.mxu0 %v611
      %647 = vmatmul.f32.gmra.mxu0 %v623
      %v648 = vpop.f32.mrf.mxu0
      %v649 = vadd.f32 0.0, %v648
      %650 = vmatmul.f32.gmra.mxu0 %v626
      %v651 = vpop.f32.mrf.mxu0
      %v652 = vadd.f32 0.0, %v651
      %653 = vdwg.mxu0
      %s654 = scalar_lea.vmem %s5, 16
      %v655 = vld [vmem:[%s654] sm:$0xff]
      %v656 = vld [vmem:[%s654 + $0x8] sm:$0x7f]
      %v658 = vsel %vm621, %v655, 0
      %v661 = vsel %vm621, %v656, 0
      %663 = vmatpush.msra.mxu0 0.0
      %664 = vmatpush.msra.mxu0 0.0
      %665 = vmatpush.msra.mxu0 0.0
      %666 = vmatpush.msra.mxu0 0.0
      %667 = vmatpush.msra.mxu0 0.0
      %668 = vmatpush.msra.mxu0 0.0
      %669 = vmatpush.msra.mxu0 0.0
      %670 = vmatpush.msra.mxu0 0.0
      %671 = vmatpush.msra.mxu0 %v629
      %672 = vmatpush.msra.mxu0 %v617
      %673 = vmatpush.msra.mxu0 %v616
      %674 = vmatpush.msra.mxu0 %v615
      %675 = vmatpush.msra.mxu0 %v614
      %676 = vmatpush.msra.mxu0 %v613
      %677 = vmatpush.msra.mxu0 %v612
      %678 = vmatpush.msra.mxu0 %v611
      %679 = vmatmul.f32.gmra.mxu0 %v658
      %v680 = vpop.f32.mrf.mxu0
      %v681 = vadd.f32 0.0, %v680
      %682 = vmatmul.f32.gmra.mxu0 %v661
      %v683 = vpop.f32.mrf.mxu0
      %v684 = vadd.f32 0.0, %v683
      %685 = vdwg.mxu0
      %s686 = scalar_lea.vmem %s5, 32
      %v687 = vld [vmem:[%s686] sm:$0xff]
      %v688 = vld [vmem:[%s686 + $0x8] sm:$0x7f]
      %v690 = vsel %vm621, %v687, 0
      %v693 = vsel %vm621, %v688, 0
      %695 = vmatpush.msra.mxu0 0.0
      %696 = vmatpush.msra.mxu0 0.0
      %697 = vmatpush.msra.mxu0 0.0
      %698 = vmatpush.msra.mxu0 0.0
      %699 = vmatpush.msra.mxu0 0.0
      %700 = vmatpush.msra.mxu0 0.0
      %701 = vmatpush.msra.mxu0 0.0
      %702 = vmatpush.msra.mxu0 0.0
      %703 = vmatpush.msra.mxu0 %v629
      %704 = vmatpush.msra.mxu0 %v617
      %705 = vmatpush.msra.mxu0 %v616
      %706 = vmatpush.msra.mxu0 %v615
      %707 = vmatpush.msra.mxu0 %v614
      %708 = vmatpush.msra.mxu0 %v613
      %709 = vmatpush.msra.mxu0 %v612
      %710 = vmatpush.msra.mxu0 %v611
      %711 = vmatmul.f32.gmra.mxu0 %v690
      %v712 = vpop.f32.mrf.mxu0
      %v713 = vadd.f32 0.0, %v712
      %714 = vmatmul.f32.gmra.mxu0 %v693
      %v715 = vpop.f32.mrf.mxu0
      %v716 = vadd.f32 0.0, %v715
      %717 = vdwg.mxu0
      %s718 = scalar_lea.vmem %s5, 48
      %v719 = vld [vmem:[%s718] sm:$0xff]
      %v720 = vld [vmem:[%s718 + $0x8] sm:$0x7f]
      %v722 = vsel %vm621, %v719, 0
      %v725 = vsel %vm621, %v720, 0
      %727 = vmatpush.msra.mxu0 0.0
      %728 = vmatpush.msra.mxu0 0.0
      %729 = vmatpush.msra.mxu0 0.0
      %730 = vmatpush.msra.mxu0 0.0
      %731 = vmatpush.msra.mxu0 0.0
      %732 = vmatpush.msra.mxu0 0.0
      %733 = vmatpush.msra.mxu0 0.0
      %734 = vmatpush.msra.mxu0 0.0
      %735 = vmatpush.msra.mxu0 %v629
      %736 = vmatpush.msra.mxu0 %v617
      %737 = vmatpush.msra.mxu0 %v616
      %738 = vmatpush.msra.mxu0 %v615
      %739 = vmatpush.msra.mxu0 %v614
      %740 = vmatpush.msra.mxu0 %v613
      %741 = vmatpush.msra.mxu0 %v612
      %742 = vmatpush.msra.mxu0 %v611
      %743 = vmatmul.f32.gmra.mxu0 %v722
      %v744 = vpop.f32.mrf.mxu0
      %v745 = vadd.f32 0.0, %v744
      %746 = vmatmul.f32.gmra.mxu0 %v725
      %v747 = vpop.f32.mrf.mxu0
      %v748 = vadd.f32 0.0, %v747
      %749 = vdwg.mxu0
      %752 = vrot.lane.b32.xlu0 %v681, 32
      %v753 = vpop.permute.xlu0 %752
      %754 = vrot.lane.b32.xlu0 %v684, 32
      %v755 = vpop.permute.xlu0 %754
      %760 = vrot.lane.b32.xlu0 %v713, 64
      %v761 = vpop.permute.xlu0 %760
      %762 = vrot.lane.b32.xlu0 %v716, 64
      %v763 = vpop.permute.xlu0 %762
      %768 = vrot.lane.b32.xlu0 %v745, 96
      %v769 = vpop.permute.xlu0 %768
      %770 = vrot.lane.b32.xlu0 %v748, 96
      %v771 = vpop.permute.xlu0 %770
      %v774 = vsel %vm503, %v649, %v753
      %v775 = vsel %vm503, %v652, %v755
      %v776 = vsel %vm326, %v774, %v761
      %v777 = vsel %vm326, %v775, %v763
      %vm778 = vcmask 785408
      %v779 = vsel %vm778, %v776, %v769
      %v780 = vsel %vm778, %v777, %v771
      %781 = vst [vmem:[%s233] sm:$0xff] %v779
      %782 = vst [vmem:[%s233 + $0x8] sm:$0x7f] %v780
      %p783 = scmp.lt.s32.totalorder %s25, 1
      %s784 = scalar_select %p783, %s25, 1
      %s785 = smul.addr %s784, 2
      %s786 = smul.addr %s785, 8
      %s787 = scalar_lea.vmem %s6, %s786
      // Predicated region
      $region41: #{model_forward.2} parent=39 // pred_check
        %p788 = pneg %p153
      $region42: #{model_forward.2} parent=39 // pred_check_branch
        %790 = sbr.rel (%p788) target = $region44
      $region43: #{model_forward.2} parent=39 // pred_region
        _
      $region44: #{model_forward.2} parent=39 // pred_fallthru
        _
    $region40: #{model_forward.2} parent=5 // pred_fallthru
      _
    %p791 = scmp.le.s32.totalorder 2, %s20
    // Predicated region
    $region45: #{model_forward.2} parent=5 // pred_check
      %p792 = pneg %p791
    $region46: #{model_forward.2} parent=5 // pred_check_branch
      %794 = sbr.rel (%p792) target = $region48
    $region47: #{model_forward.2} parent=5 // pred_region
      %s795 = ssub.s32 %s20, 2
      // Predicated region
      $region49: #{model_forward.2} parent=47 // pred_check
        %p796 = pneg %p159
      $region50: #{model_forward.2} parent=47 // pred_check_branch
        %798 = sbr.rel (%p796) target = $region52
      $region51: #{model_forward.2} parent=47 // pred_region
        %p799 = scmp.lt.s32.totalorder %s26, 1
        %s800 = scalar_select %p799, %s26, 1
        %s801 = smul.addr %s800, 2
        %s802 = smul.addr %s801, 8
        %s803 = scalar_lea.vmem %s6, %s802
      $region52: #{model_forward.2} parent=47 // pred_fallthru
        _
    $region48: #{model_forward.2} parent=5 // pred_fallthru
      _
  $region6: #{model_forward.2} parent=0 // loop_footer
    %s24 = sadd.s32 1, %s20
  $region7: #{model_forward.2} parent=0 // loop_footer_branch
    %19 = sbr.rel target = $region3
  $region8: #{model_forward.2} parent=0 // loop_exit
    _

// kernel: model_forward.3
$region0: #{model_forward.3}
  #allocation0 [shape = 'u32[]', space=smem, size = 0x4, offset = 0x4, fixed_abs, tag = 'smem constant byte address 0x4 - core index']
  #allocation1 [shape = 'u32[72,128]{1,0:T(1,128)}', space=vmem, size = 0x9000, scoped, tag = 'internal scratch']
  #allocation2 [shape = 's32[1]{0}', space=sflag, size = 0x4, scoped, tag = 'scoped memory for model_forward.3']
  #allocation3 [shape = 'u8[512]{0}', space=smem, size = 0x200, scoped, tag = 'prefetched SMEM operand 0']
  %s0 = inlined_call_operand.vmem [shape: s32[2], index: 0, kind: input, shape index: {}]
  %s1 = inlined_call_operand.vmem [shape: f32[2,15,128], index: 1, kind: input, shape index: {}]
  %s2 = inlined_call_operand.vmem [shape: bf16[128,64], index: 2, kind: input, shape index: {}]
  %s3 = inlined_call_operand.vmem [shape: f32[2,128], index: 3, kind: input, shape index: {}]
  %s4 = inlined_call_operand.vmem [shape: bf16[64,128], index: 4, kind: input, shape index: {}]
  %s5 = inlined_call_operand.vmem [shape: bf16[2,64,256], index: 5, kind: input, shape index: {}]
  %s6 = inlined_call_operand.vmem [shape: bf16[2,256,64], index: 6, kind: input, shape index: {}]
  %s7 = inlined_call_operand.vmem [shape: bf16[2,64,192], index: 7, kind: input, shape index: {}]
  %s8 = inlined_call_operand.vmem [shape: bf16[2,64,64], index: 8, kind: input, shape index: {}]
  %s9 = inlined_call_operand.vmem [shape: bf16[2,64,128], index: 9, kind: input, shape index: {}]
  %s10 = inlined_call_operand.vmem [shape: bf16[2,64,64], index: 10, kind: input, shape index: {}]
  %s11 = inlined_call_operand.vmem [shape: bf16[2,64,256], index: 11, kind: input, shape index: {}]
  %s12 = inlined_call_operand.vmem [shape: bf16[2,256,64], index: 12, kind: input, shape index: {}]
  %s13 = inlined_call_operand.vmem [shape: f32[2,28,256], index: 13, kind: input, shape index: {}]
  %s14 = inlined_call_operand.vmem [shape: f32[2,15,128], index: 14, kind: output, shape index: {}]
  %s15 = sld [smem:[#allocation0]]
  $region85: #{model_forward.3} parent=0
    _
  %s17 = ssub.s32 1, %s15
  %s18 = scalar_select 0, %s17, %s15
  %s20 = sshll.u32 %s0, 4
  %s21 = int_to_ptr.vmem [resolvable:$true] %s20
  %23 = dma.vmem_to_smem %s21, 16, [#allocation3], [#allocation2]
  %25 = dma.done [#allocation2], 16
  %26 = sfence
  loop: start=0, step=1, limit=4
  $region2: #{model_forward.3} parent=0 // loop_pre_header
    _
  $region3: #{model_forward.3} parent=0 // loop_header
    %s28 = sphi 0, %s32
    %p29 = scmp.ge.s32.totalorder %s28, 4
    %s38 = sphi 0, %s40
    %s41 = sphi 0, %s38
    %s42 = sphi 0, %s41
    %s58 = sphi 0, %s42
    %s62 = sphi 0, %s62
    %s64 = sphi 0, %s62
    %s65 = sphi 0, %s64
    %s79 = sphi 0, %s65
    %s83 = sphi 0, %s83
    %s85 = sphi 0, %s83
    %s86 = sphi 0, %s85
    %s100 = sphi 0, %s86
    %s104 = sphi 0, %s104
    %s106 = sphi 0, %s104
    %s107 = sphi 0, %s106
    %s121 = sphi 0, %s107
    %s125 = sphi 0, %s125
    %s127 = sphi 0, %s125
    %s128 = sphi 0, %s127
    %s142 = sphi 0, %s128
    %s146 = sphi 0, %s146
    %s148 = sphi 0, %s146
    %s149 = sphi 0, %s148
    %s163 = sphi 0, %s149
    %s167 = sphi 0, %s167
    %s169 = sphi 0, %s167
    %s170 = sphi 0, %s169
    %s184 = sphi 0, %s170
    %s188 = sphi 0, %s188
    %s190 = sphi 0, %s188
    %s191 = sphi 0, %s190
    %s205 = sphi 0, %s191
    %s209 = sphi 0, %s209
    %s211 = sphi 0, %s209
    %s212 = sphi 0, %s211
    %s226 = sphi 0, %s212
    %s230 = sphi 0, %s230
    %s232 = sphi 0, %s230
    %s233 = sphi 0, %s232
    %s247 = sphi 0, %s233
    %s251 = sphi 0, %s251
    %s253 = sphi 0, %s251
    %s254 = sphi 0, %s253
    %s268 = sphi 0, %s254
    %s272 = sphi 0, %s272
    %s274 = sphi 0, %s272
    %s275 = sphi 0, %s274
    %s289 = sphi 0, %s275
    %s293 = sphi 0, %s293
    %s295 = sphi 0, %s293
    %s296 = sphi 0, %s295
    %s310 = sphi 0, %s296
    %s316 = sphi 0, %s318
    %s319 = sphi 0, %s316
    %s320 = sphi 0, %s319
    %s336 = sphi 0, %s320
  $region4: #{model_forward.3} parent=0 // loop_header_branch
    %31 = sbr.rel (%p29) target = $region8
  $region5: #{model_forward.3} parent=0 // loop_body
    %s33 = ssub.s32 %s28, 1
    %s34 = ssub.s32 %s28, 2
    %s35 = sadd.s32 %s28, 1
    %s36 = ssub.s32 %s28, %s35
    %p37 = scmp.eq.s32.totalorder %s36, 0
    %s39 = sadd.s32 %s38, 1
    %s40 = scalar_select %p37, %s38, %s39
    %p43 = pneg %p37
    %p44 = scmp.eq.s32.totalorder %s28, 1
    %p45 = por %p43, %p44
    %p46 = scmp.ne.s32.totalorder %s38, %s41
    %p47 = scmp.eq.s32.totalorder %s28, 0
    %p48 = por %p46, %p47
    %p49 = scmp.ne.s32.totalorder %s38, %s41
    %p50 = scmp.eq.s32.totalorder %s33, 1
    %p51 = por %p49, %p50
    %p52 = scmp.ne.s32.totalorder %s41, %s42
    %p53 = scmp.eq.s32.totalorder %s33, 0
    %p54 = por %p52, %p53
    %p55 = scmp.ne.s32.totalorder %s41, %s42
    %p56 = scmp.eq.s32.totalorder %s34, 1
    %p57 = por %p55, %p56
    %p59 = scmp.ne.s32.totalorder %s42, %s58
    %p60 = scmp.eq.s32.totalorder %s34, 0
    %p61 = por %p59, %p60
    %s63 = sadd.s32 %s62, 1
    %p66 = scmp.eq.s32.totalorder %s28, 1
    %p67 = scmp.ne.s32.totalorder %s62, %s64
    %p68 = scmp.eq.s32.totalorder %s28, 0
    %p69 = por %p67, %p68
    %p70 = scmp.ne.s32.totalorder %s62, %s64
    %p71 = scmp.eq.s32.totalorder %s33, 1
    %p72 = por %p70, %p71
    %p73 = scmp.ne.s32.totalorder %s64, %s65
    %p74 = scmp.eq.s32.totalorder %s33, 0
    %p75 = por %p73, %p74
    %p76 = scmp.ne.s32.totalorder %s64, %s65
    %p77 = scmp.eq.s32.totalorder %s34, 1
    %p78 = por %p76, %p77
    %p80 = scmp.ne.s32.totalorder %s65, %s79
    %p81 = scmp.eq.s32.totalorder %s34, 0
    %p82 = por %p80, %p81
    %s84 = sadd.s32 %s83, 1
    %p87 = scmp.eq.s32.totalorder %s28, 1
    %p88 = scmp.ne.s32.totalorder %s83, %s85
    %p89 = scmp.eq.s32.totalorder %s28, 0
    %p90 = por %p88, %p89
    %p91 = scmp.ne.s32.totalorder %s83, %s85
    %p92 = scmp.eq.s32.totalorder %s33, 1
    %p93 = por %p91, %p92
    %p94 = scmp.ne.s32.totalorder %s85, %s86
    %p95 = scmp.eq.s32.totalorder %s33, 0
    %p96 = por %p94, %p95
    %p97 = scmp.ne.s32.totalorder %s85, %s86
    %p98 = scmp.eq.s32.totalorder %s34, 1
    %p99 = por %p97, %p98
    %p101 = scmp.ne.s32.totalorder %s86, %s100
    %p102 = scmp.eq.s32.totalorder %s34, 0
    %p103 = por %p101, %p102
    %s105 = sadd.s32 %s104, 1
    %p108 = scmp.eq.s32.totalorder %s28, 1
    %p109 = scmp.ne.s32.totalorder %s104, %s106
    %p110 = scmp.eq.s32.totalorder %s28, 0
    %p111 = por %p109, %p110
    %p112 = scmp.ne.s32.totalorder %s104, %s106
    %p113 = scmp.eq.s32.totalorder %s33, 1
    %p114 = por %p112, %p113
    %p115 = scmp.ne.s32.totalorder %s106, %s107
    %p116 = scmp.eq.s32.totalorder %s33, 0
    %p117 = por %p115, %p116
    %p118 = scmp.ne.s32.totalorder %s106, %s107
    %p119 = scmp.eq.s32.totalorder %s34, 1
    %p120 = por %p118, %p119
    %p122 = scmp.ne.s32.totalorder %s107, %s121
    %p123 = scmp.eq.s32.totalorder %s34, 0
    %p124 = por %p122, %p123
    %s126 = sadd.s32 %s125, 1
    %p129 = scmp.eq.s32.totalorder %s28, 1
    %p130 = scmp.ne.s32.totalorder %s125, %s127
    %p131 = scmp.eq.s32.totalorder %s28, 0
    %p132 = por %p130, %p131
    %p133 = scmp.ne.s32.totalorder %s125, %s127
    %p134 = scmp.eq.s32.totalorder %s33, 1
    %p135 = por %p133, %p134
    %p136 = scmp.ne.s32.totalorder %s127, %s128
    %p137 = scmp.eq.s32.totalorder %s33, 0
    %p138 = por %p136, %p137
    %p139 = scmp.ne.s32.totalorder %s127, %s128
    %p140 = scmp.eq.s32.totalorder %s34, 1
    %p141 = por %p139, %p140
    %p143 = scmp.ne.s32.totalorder %s128, %s142
    %p144 = scmp.eq.s32.totalorder %s34, 0
    %p145 = por %p143, %p144
    %s147 = sadd.s32 %s146, 1
    %p150 = scmp.eq.s32.totalorder %s28, 1
    %p151 = scmp.ne.s32.totalorder %s146, %s148
    %p152 = scmp.eq.s32.totalorder %s28, 0
    %p153 = por %p151, %p152
    %p154 = scmp.ne.s32.totalorder %s146, %s148
    %p155 = scmp.eq.s32.totalorder %s33, 1
    %p156 = por %p154, %p155
    %p157 = scmp.ne.s32.totalorder %s148, %s149
    %p158 = scmp.eq.s32.totalorder %s33, 0
    %p159 = por %p157, %p158
    %p160 = scmp.ne.s32.totalorder %s148, %s149
    %p161 = scmp.eq.s32.totalorder %s34, 1
    %p162 = por %p160, %p161
    %p164 = scmp.ne.s32.totalorder %s149, %s163
    %p165 = scmp.eq.s32.totalorder %s34, 0
    %p166 = por %p164, %p165
    %s168 = sadd.s32 %s167, 1
    %p171 = scmp.eq.s32.totalorder %s28, 1
    %p172 = scmp.ne.s32.totalorder %s167, %s169
    %p173 = scmp.eq.s32.totalorder %s28, 0
    %p174 = por %p172, %p173
    %p175 = scmp.ne.s32.totalorder %s167, %s169
    %p176 = scmp.eq.s32.totalorder %s33, 1
    %p177 = por %p175, %p176
    %p178 = scmp.ne.s32.totalorder %s169, %s170
    %p179 = scmp.eq.s32.totalorder %s33, 0
    %p180 = por %p178, %p179
    %p181 = scmp.ne.s32.totalorder %s169, %s170
    %p182 = scmp.eq.s32.totalorder %s34, 1
    %p183 = por %p181, %p182
    %p185 = scmp.ne.s32.totalorder %s170, %s184
    %p186 = scmp.eq.s32.totalorder %s34, 0
    %p187 = por %p185, %p186
    %s189 = sadd.s32 %s188, 1
    %p192 = scmp.eq.s32.totalorder %s28, 1
    %p193 = scmp.ne.s32.totalorder %s188, %s190
    %p194 = scmp.eq.s32.totalorder %s28, 0
    %p195 = por %p193, %p194
    %p196 = scmp.ne.s32.totalorder %s188, %s190
    %p197 = scmp.eq.s32.totalorder %s33, 1
    %p198 = por %p196, %p197
    %p199 = scmp.ne.s32.totalorder %s190, %s191
    %p200 = scmp.eq.s32.totalorder %s33, 0
    %p201 = por %p199, %p200
    %p202 = scmp.ne.s32.totalorder %s190, %s191
    %p203 = scmp.eq.s32.totalorder %s34, 1
    %p204 = por %p202, %p203
    %p206 = scmp.ne.s32.totalorder %s191, %s205
    %p207 = scmp.eq.s32.totalorder %s34, 0
    %p208 = por %p206, %p207
    %s210 = sadd.s32 %s209, 1
    %p213 = scmp.eq.s32.totalorder %s28, 1
    %p214 = scmp.ne.s32.totalorder %s209, %s211
    %p215 = scmp.eq.s32.totalorder %s28, 0
    %p216 = por %p214, %p215
    %p217 = scmp.ne.s32.totalorder %s209, %s211
    %p218 = scmp.eq.s32.totalorder %s33, 1
    %p219 = por %p217, %p218
    %p220 = scmp.ne.s32.totalorder %s211, %s212
    %p221 = scmp.eq.s32.totalorder %s33, 0
    %p222 = por %p220, %p221
    %p223 = scmp.ne.s32.totalorder %s211, %s212
    %p224 = scmp.eq.s32.totalorder %s34, 1
    %p225 = por %p223, %p224
    %p227 = scmp.ne.s32.totalorder %s212, %s226
    %p228 = scmp.eq.s32.totalorder %s34, 0
    %p229 = por %p227, %p228
    %s231 = sadd.s32 %s230, 1
    %p234 = scmp.eq.s32.totalorder %s28, 1
    %p235 = scmp.ne.s32.totalorder %s230, %s232
    %p236 = scmp.eq.s32.totalorder %s28, 0
    %p237 = por %p235, %p236
    %p238 = scmp.ne.s32.totalorder %s230, %s232
    %p239 = scmp.eq.s32.totalorder %s33, 1
    %p240 = por %p238, %p239
    %p241 = scmp.ne.s32.totalorder %s232, %s233
    %p242 = scmp.eq.s32.totalorder %s33, 0
    %p243 = por %p241, %p242
    %p244 = scmp.ne.s32.totalorder %s232, %s233
    %p245 = scmp.eq.s32.totalorder %s34, 1
    %p246 = por %p244, %p245
    %p248 = scmp.ne.s32.totalorder %s233, %s247
    %p249 = scmp.eq.s32.totalorder %s34, 0
    %p250 = por %p248, %p249
    %s252 = sadd.s32 %s251, 1
    %p255 = scmp.eq.s32.totalorder %s28, 1
    %p256 = scmp.ne.s32.totalorder %s251, %s253
    %p257 = scmp.eq.s32.totalorder %s28, 0
    %p258 = por %p256, %p257
    %p259 = scmp.ne.s32.totalorder %s251, %s253
    %p260 = scmp.eq.s32.totalorder %s33, 1
    %p261 = por %p259, %p260
    %p262 = scmp.ne.s32.totalorder %s253, %s254
    %p263 = scmp.eq.s32.totalorder %s33, 0
    %p264 = por %p262, %p263
    %p265 = scmp.ne.s32.totalorder %s253, %s254
    %p266 = scmp.eq.s32.totalorder %s34, 1
    %p267 = por %p265, %p266
    %p269 = scmp.ne.s32.totalorder %s254, %s268
    %p270 = scmp.eq.s32.totalorder %s34, 0
    %p271 = por %p269, %p270
    %s273 = sadd.s32 %s272, 1
    %p276 = scmp.eq.s32.totalorder %s28, 1
    %p277 = scmp.ne.s32.totalorder %s272, %s274
    %p278 = scmp.eq.s32.totalorder %s28, 0
    %p279 = por %p277, %p278
    %p280 = scmp.ne.s32.totalorder %s272, %s274
    %p281 = scmp.eq.s32.totalorder %s33, 1
    %p282 = por %p280, %p281
    %p283 = scmp.ne.s32.totalorder %s274, %s275
    %p284 = scmp.eq.s32.totalorder %s33, 0
    %p285 = por %p283, %p284
    %p286 = scmp.ne.s32.totalorder %s274, %s275
    %p287 = scmp.eq.s32.totalorder %s34, 1
    %p288 = por %p286, %p287
    %p290 = scmp.ne.s32.totalorder %s275, %s289
    %p291 = scmp.eq.s32.totalorder %s34, 0
    %p292 = por %p290, %p291
    %s294 = sadd.s32 %s293, 1
    %p297 = scmp.eq.s32.totalorder %s28, 1
    %p298 = scmp.ne.s32.totalorder %s293, %s295
    %p299 = scmp.eq.s32.totalorder %s28, 0
    %p300 = por %p298, %p299
    %p301 = scmp.ne.s32.totalorder %s293, %s295
    %p302 = scmp.eq.s32.totalorder %s33, 1
    %p303 = por %p301, %p302
    %p304 = scmp.ne.s32.totalorder %s295, %s296
    %p305 = scmp.eq.s32.totalorder %s33, 0
    %p306 = por %p304, %p305
    %p307 = scmp.ne.s32.totalorder %s295, %s296
    %p308 = scmp.eq.s32.totalorder %s34, 1
    %p309 = por %p307, %p308
    %p311 = scmp.ne.s32.totalorder %s296, %s310
    %p312 = scmp.eq.s32.totalorder %s34, 0
    %p313 = por %p311, %p312
    %s314 = ssub.s32 %s28, %s35
    %p315 = scmp.eq.s32.totalorder %s314, 0
    %s317 = sadd.s32 %s316, 1
    %s318 = scalar_select %p315, %s316, %s317
    %p321 = pneg %p315
    %p322 = scmp.eq.s32.totalorder %s28, 1
    %p323 = por %p321, %p322
    %p324 = scmp.ne.s32.totalorder %s316, %s319
    %p325 = scmp.eq.s32.totalorder %s28, 0
    %p326 = por %p324, %p325
    %p327 = scmp.ne.s32.totalorder %s316, %s319
    %p328 = scmp.eq.s32.totalorder %s33, 1
    %p329 = por %p327, %p328
    %p330 = scmp.ne.s32.totalorder %s319, %s320
    %p331 = scmp.eq.s32.totalorder %s33, 0
    %p332 = por %p330, %p331
    %p333 = scmp.ne.s32.totalorder %s319, %s320
    %p334 = scmp.eq.s32.totalorder %s34, 1
    %p335 = por %p333, %p334
    %p337 = scmp.ne.s32.totalorder %s320, %s336
    %p338 = scmp.eq.s32.totalorder %s34, 0
    %p339 = por %p337, %p338
    %p340 = scmp.le.s32.totalorder 1, %s28
    %p341 = scmp.lt.s32.totalorder %s28, 3
    %p342 = pnand %p340, %p341
    %p343 = pneg %p342
    // Predicated region
    $region9: #{model_forward.3} parent=5 // pred_check
      _
    $region10: #{model_forward.3} parent=5 // pred_check_branch
      %345 = sbr.rel (%p342) target = $region12
    $region11: #{model_forward.3} parent=5 // pred_region
      %s346 = ssub.s32 %s28, 1
      // Predicated region
      $region13: #{model_forward.3} parent=11 // pred_check
        %p347 = pneg %p75
      $region14: #{model_forward.3} parent=11 // pred_check_branch
        %349 = sbr.rel (%p347) target = $region16
      $region15: #{model_forward.3} parent=11 // pred_region
        _
      $region16: #{model_forward.3} parent=11 // pred_fallthru
        _
      // Predicated region
      $region17: #{model_forward.3} parent=11 // pred_check
        %p350 = pneg %p96
      $region18: #{model_forward.3} parent=11 // pred_check_branch
        %352 = sbr.rel (%p350) target = $region20
      $region19: #{model_forward.3} parent=11 // pred_region
        _
      $region20: #{model_forward.3} parent=11 // pred_fallthru
        _
      // Predicated region
      $region21: #{model_forward.3} parent=11 // pred_check
        %p353 = pneg %p117
      $region22: #{model_forward.3} parent=11 // pred_check_branch
        %355 = sbr.rel (%p353) target = $region24
      $region23: #{model_forward.3} parent=11 // pred_region
        _
      $region24: #{model_forward.3} parent=11 // pred_fallthru
        _
      // Predicated region
      $region25: #{model_forward.3} parent=11 // pred_check
        %p356 = pneg %p138
      $region26: #{model_forward.3} parent=11 // pred_check_branch
        %358 = sbr.rel (%p356) target = $region28
      $region27: #{model_forward.3} parent=11 // pred_region
        _
      $region28: #{model_forward.3} parent=11 // pred_fallthru
        _
      // Predicated region
      $region29: #{model_forward.3} parent=11 // pred_check
        %p359 = pneg %p159
      $region30: #{model_forward.3} parent=11 // pred_check_branch
        %361 = sbr.rel (%p359) target = $region32
      $region31: #{model_forward.3} parent=11 // pred_region
        _
      $region32: #{model_forward.3} parent=11 // pred_fallthru
        _
      // Predicated region
      $region33: #{model_forward.3} parent=11 // pred_check
        %p362 = pneg %p180
      $region34: #{model_forward.3} parent=11 // pred_check_branch
        %364 = sbr.rel (%p362) target = $region36
      $region35: #{model_forward.3} parent=11 // pred_region
        _
      $region36: #{model_forward.3} parent=11 // pred_fallthru
        _
      // Predicated region
      $region37: #{model_forward.3} parent=11 // pred_check
        %p365 = pneg %p201
      $region38: #{model_forward.3} parent=11 // pred_check_branch
        %367 = sbr.rel (%p365) target = $region40
      $region39: #{model_forward.3} parent=11 // pred_region
        _
      $region40: #{model_forward.3} parent=11 // pred_fallthru
        _
      // Predicated region
      $region41: #{model_forward.3} parent=11 // pred_check
        %p368 = pneg %p222
      $region42: #{model_forward.3} parent=11 // pred_check_branch
        %370 = sbr.rel (%p368) target = $region44
      $region43: #{model_forward.3} parent=11 // pred_region
        _
      $region44: #{model_forward.3} parent=11 // pred_fallthru
        _
      // Predicated region
      $region45: #{model_forward.3} parent=11 // pred_check
        %p371 = pneg %p243
      $region46: #{model_forward.3} parent=11 // pred_check_branch
        %373 = sbr.rel (%p371) target = $region48
      $region47: #{model_forward.3} parent=11 // pred_region
        _
      $region48: #{model_forward.3} parent=11 // pred_fallthru
        _
      // Predicated region
      $region49: #{model_forward.3} parent=11 // pred_check
        %p374 = pneg %p264
      $region50: #{model_forward.3} parent=11 // pred_check_branch
        %376 = sbr.rel (%p374) target = $region52
      $region51: #{model_forward.3} parent=11 // pred_region
        _
      $region52: #{model_forward.3} parent=11 // pred_fallthru
        _
      // Predicated region
      $region53: #{model_forward.3} parent=11 // pred_check
        %p377 = pneg %p285
      $region54: #{model_forward.3} parent=11 // pred_check_branch
        %379 = sbr.rel (%p377) target = $region56
      $region55: #{model_forward.3} parent=11 // pred_region
        _
      $region56: #{model_forward.3} parent=11 // pred_fallthru
        _
      // Predicated region
      $region57: #{model_forward.3} parent=11 // pred_check
        %p380 = pneg %p306
      $region58: #{model_forward.3} parent=11 // pred_check_branch
        %382 = sbr.rel (%p380) target = $region60
      $region59: #{model_forward.3} parent=11 // pred_region
        _
      $region60: #{model_forward.3} parent=11 // pred_fallthru
        _
    $region12: #{model_forward.3} parent=5 // pred_fallthru
      _
    %p383 = scmp.lt.s32.totalorder %s28, 2
    // Predicated region
    $region61: #{model_forward.3} parent=5 // pred_check
      %p384 = pneg %p383
    $region62: #{model_forward.3} parent=5 // pred_check_branch
      %386 = sbr.rel (%p384) target = $region64
    $region63: #{model_forward.3} parent=5 // pred_region
      // Predicated region
      $region65: #{model_forward.3} parent=63 // pred_check
        %p387 = pneg %p48
      $region66: #{model_forward.3} parent=63 // pred_check_branch
        %389 = sbr.rel (%p387) target = $region68
      $region67: #{model_forward.3} parent=63 // pred_region
        %p390 = scmp.lt.s32.totalorder %s28, 1
        %s391 = scalar_select %p390, %s28, 1
        %s392 = smul.addr %s391, 2
        %s393 = smul.addr %s392, 8
        %s394 = scalar_lea.vmem %s1, %s393
      $region68: #{model_forward.3} parent=63 // pred_fallthru
        _
    $region64: #{model_forward.3} parent=5 // pred_fallthru
      _
    %p395 = scmp.le.s32.totalorder 1, %s28
    %p396 = scmp.lt.s32.totalorder %s28, 3
    %p397 = pnand %p395, %p396
    %p398 = pneg %p397
    // Predicated region
    $region69: #{model_forward.3} parent=5 // pred_check
      _
    $region70: #{model_forward.3} parent=5 // pred_check_branch
      %400 = sbr.rel (%p397) target = $region72
    $region71: #{model_forward.3} parent=5 // pred_region
      %s401 = ssub.s32 %s28, 1
      %p402 = scmp.lt.s32.totalorder %s33, 1
      %s403 = scalar_select %p402, %s33, 1
      %s404 = smul.addr %s403, 2
      %s405 = smul.addr %s404, 8
      %s406 = scalar_lea.vmem %s1, %s405
      %p407 = pneg %p54
      %p408 = pneg %p51
      %p409 = pneg %p75
      %p410 = pneg %p72
      %p411 = pneg %p96
      %p412 = pneg %p93
      %p413 = pneg %p117
      %p414 = pneg %p114
      %p415 = pneg %p138
      %p416 = pneg %p135
      %p417 = pneg %p159
      %p418 = pneg %p156
      %p419 = pneg %p180
      %p420 = pneg %p177
      %p421 = pneg %p201
      %p422 = pneg %p198
      %p423 = pneg %p222
      %p424 = pneg %p219
      %p425 = pneg %p243
      %p426 = pneg %p240
      %p427 = pneg %p264
      %p428 = pneg %p261
      %p429 = pneg %p285
      %p430 = pneg %p282
      %p431 = pneg %p306
      %p432 = pneg %p303
      %p433 = pneg %p332
      %p434 = pneg %p329
      %p435 = scmp.lt.s32.totalorder %s33, 1
      %s436 = scalar_select %p435, %s33, 1
      %s437 = smul.addr %s436, 2
      %s438 = smul.addr %s437, 8
      %s439 = scalar_lea.vmem %s14, %s438
      %p440 = scmp.lt.s32.totalorder %s33, 1
      %s441 = scalar_select %p440, %s33, 1
      %s442 = smul.addr %s441, 2
      %s443 = smul.addr %s442, 8
      %s444 = scalar_lea.vmem %s1, %s443
      %p445 = scmp.lt.s32.totalorder %s33, 1
      %s446 = scalar_select %p445, %s33, 1
      %s447 = smul.addr %s446, 2
      %s448 = smul.addr %s447, 8
      %s449 = scalar_lea.vmem %s14, %s448
      %s451 = sld [smem:[#allocation3 + %s33]]
      %v452 = vlaneseq
      %v453 = vshrl.u32 %v452, 7
      %v454 = vadd.s32 %v453, 8
      %v455 = vstv %s451
      %vm456 = vcmp.lt.s32.totalorder %v453, %v455
      %vm457 = vcmp.lt.s32.totalorder %v454, %v455
      %v458 = vsel %vm456, 1, 0
      %v459 = vsel %vm457, 1, 0
      %v460 = vcvt.s32.f32 %v458
      %v461 = vcvt.s32.f32 %v459
      %v462 = vlaneseq
      %v463 = vand.u32 %v462, 127
      %vm464 = vcmp.lt.s32.totalorder %v463, %v455
      %v465 = vsel %vm464, 1, 0
      %v466 = vcvt.s32.f32 %v465
      %v467 = vsub.f32 %v466, 1.0
      %v468 = vmul.f32 %v467, 1e+09
      %v469 = vld [vmem:[%s3] sm:$0x3]
      %v470 = vld [vmem:[%s444] sm:$0xff]
      %v471 = vld [vmem:[%s444 + $0x8] sm:$0x7f]
      %v472 = vld [vmem:[%s2] sm:$0xf]
      %v473 = vld [vmem:[%s2 + $0x4] sm:$0xf]
      %v474 = vld [vmem:[%s2 + $0x8] sm:$0xf]
      %v475 = vld [vmem:[%s2 + $0xc] sm:$0xf]
      %v476 = vld [vmem:[%s2 + $0x10] sm:$0xf]
      %v477 = vld [vmem:[%s2 + $0x14] sm:$0xf]
      %v478 = vld [vmem:[%s2 + $0x18] sm:$0xf]
      %v479 = vld [vmem:[%s2 + $0x1c] sm:$0xf]
      %v480 = vld [vmem:[%s2 + $0x20] sm:$0xf]
      %v481 = vld [vmem:[%s2 + $0x24] sm:$0xf]
      %v482 = vld [vmem:[%s2 + $0x28] sm:$0xf]
      %v483 = vld [vmem:[%s2 + $0x2c] sm:$0xf]
      %v484 = vld [vmem:[%s2 + $0x30] sm:$0xf]
      %v485 = vld [vmem:[%s2 + $0x34] sm:$0xf]
      %v486 = vld [vmem:[%s2 + $0x38] sm:$0xf]
      %v487 = vld [vmem:[%s2 + $0x3c] sm:$0xf]
      %v488 = vpack.c.bf16 %v471, %v470
      %v489 = vperm.slane %v469, 0
      %v506 = vunpack.c.l.b16 %v472
      %v507 = vunpack.c.l.b16 %v473
      %v508 = vunpack.c.l.b16 %v474
      %v509 = vunpack.c.l.b16 %v475
      %v510 = vunpack.c.l.b16 %v476
      %v511 = vunpack.c.l.b16 %v477
      %v512 = vunpack.c.l.b16 %v478
      %v513 = vunpack.c.l.b16 %v479
      %v514 = vunpack.c.l.b16 %v480
      %v515 = vunpack.c.l.b16 %v481
      %v516 = vunpack.c.l.b16 %v482
      %v517 = vunpack.c.l.b16 %v483
      %v518 = vunpack.c.l.b16 %v484
      %v519 = vunpack.c.l.b16 %v485
      %v520 = vunpack.c.l.b16 %v486
      %v521 = vunpack.c.l.b16 %v487
      %v522 = vpack.c.b16 %v507, %v506
      %v523 = vpack.c.b16 %v509, %v508
      %v524 = vpack.c.b16 %v511, %v510
      %v525 = vpack.c.b16 %v513, %v512
      %v526 = vpack.c.b16 %v515, %v514
      %v527 = vpack.c.b16 %v517, %v516
      %v528 = vpack.c.b16 %v519, %v518
      %v529 = vpack.c.b16 %v521, %v520
      %538 = vmatpush.bf16.msra.mxu0 %v529
      %539 = vmatpush.bf16.msra.mxu0 %v528
      %540 = vmatpush.bf16.msra.mxu0 %v527
      %541 = vmatpush.bf16.msra.mxu0 %v526
      %542 = vmatpush.bf16.msra.mxu0 %v525
      %543 = vmatpush.bf16.msra.mxu0 %v524
      %544 = vmatpush.bf16.msra.mxu0 %v523
      %545 = vmatpush.bf16.msra.mxu0 %v522
      %546 = vmatmul.bf16.gmra.mxu0 %v488
      %v547 = vpop.f32.mrf.mxu0
      %v548 = vadd.f32 %v489, %v547
      %v549 = vpop.f32.mrf.mxu0
      %v550 = vadd.f32 %v489, %v549
      %551 = vdwg.mxu0
      %v552 = vmul.f32 %v548, 8.0
      %v553 = vmul.f32 %v550, 8.0
      %v554 = vmul.f32 %v552, %v460
      %v555 = vmul.f32 %v553, %v461
      %v556 = vld [vmem:[%s13] sm:$0xff]
      %v557 = vld [vmem:[%s13 + $0x8] sm:$0xff]
      %v558 = vld [vmem:[%s13 + $0x10] sm:$0xff]
      %v559 = vld [vmem:[%s13 + $0x20] sm:$0xff]
      %v560 = vld [vmem:[%s13 + $0x28] sm:$0xff]
      %v561 = vld [vmem:[%s13 + $0x30] sm:$0xf]
      %vm562 = vcmask 523264
      %v563 = vsel %vm562, %v554, 0.0
      %564 = vadd.xlane.f32.xlu0 %v563
      %v565 = vpop.xlane.xlu0 %564
      %vm566 = vcmask 522240
      %v567 = vsel %vm566, %v555, 0.0
      %568 = vadd.xlane.f32.xlu0 %v567
      %v569 = vpop.xlane.xlu0 %568
      %v570 = vrcp.pop 64.0
      %v571 = vmul.f32 64.0, %v570
      %v572 = vsub.f32 1.0, %v571
      %v573 = vmul.f32 %v570, %v572
      %v574 = vadd.f32 %v570, %v573
      %vm575 = vweird.f32 %v570
      %v576 = vsel %vm575, %v570, %v574
      %v577 = vmul.f32 %v565, %v576
      %v578 = vmul.f32 %v569, %v576
      %v579 = vsub.f32 %v554, %v577
      %v580 = vsub.f32 %v555, %v578
      %v581 = vmul.f32 %v579, %v579
      %v582 = vmul.f32 %v580, %v580
      %v583 = vsel %vm562, %v581, 0.0
      %584 = vadd.xlane.f32.xlu0 %v583
      %v585 = vpop.xlane.xlu0 %584
      %v586 = vsel %vm566, %v582, 0.0
      %587 = vadd.xlane.f32.xlu0 %v586
      %v588 = vpop.xlane.xlu0 %587
      %v589 = vmul.f32 %v585, %v576
      %v590 = vmul.f32 %v588, %v576
      %v591 = vadd.f32 %v589, 1e-05
      %v592 = vadd.f32 %v590, 1e-05
      %v593 = vrsqrt.pop %v591
      %v594 = vmul.f32 %v593, %v591
      %v595 = vmul.f32 %v594, %v593
      %v596 = vmul.f32 0.5, %v595
      %v597 = vsub.f32 1.5, %v596
      %v598 = vmul.f32 %v593, %v597
      %vm599 = vweird.f32 %v591
      %vm600 = vweird.f32 %v593
      %vm601 = vmor %vm599, %vm600
      %v602 = vsel %vm601, %v593, %v598
      %v603 = vrsqrt.pop %v592
      %v604 = vmul.f32 %v603, %v592
      %v605 = vmul.f32 %v604, %v603
      %v606 = vmul.f32 0.5, %v605
      %v607 = vsub.f32 1.5, %v606
      %v608 = vmul.f32 %v603, %v607
      %vm609 = vweird.f32 %v592
      %vm610 = vweird.f32 %v603
      %vm611 = vmor %vm609, %vm610
      %v612 = vsel %vm611, %v603, %v608
      %v613 = vmul.f32 %v579, %v602
      %v614 = vmul.f32 %v580, %v612
      %v615 = vperm.slane %v556, 0
      %v616 = vmul.f32 %v613, %v615
      %v617 = vmul.f32 %v614, %v615
      %v618 = vperm.slane %v556, 1
      %v619 = vadd.f32 %v616, %v618
      %v620 = vadd.f32 %v617, %v618
      %v621 = vld [vmem:[%s5] sm:$0xff]
      %v622 = vld [vmem:[%s5 + $0x8] sm:$0xff]
      %v623 = vld [vmem:[%s5 + $0x10] sm:$0xff]
      %v624 = vld [vmem:[%s5 + $0x18] sm:$0xff]
      %v625 = vld [vmem:[%s5 + $0x20] sm:$0xff]
      %v626 = vld [vmem:[%s5 + $0x28] sm:$0xff]
      %v627 = vld [vmem:[%s5 + $0x30] sm:$0xff]
      %v628 = vld [vmem:[%s5 + $0x38] sm:$0xff]
      %v629 = vpack.c.bf16 %v620, %v619
      %v630 = vperm.slane %v556, 2
      %v631 = vperm.slane %v557, 2
      %v640 = vunpack.c.l.b16 %v621
      %v641 = vunpack.c.h.b16 %v621
      %v642 = vunpack.c.l.b16 %v622
      %v643 = vunpack.c.h.b16 %v622
      %v644 = vunpack.c.l.b16 %v623
      %v645 = vunpack.c.h.b16 %v623
      %v646 = vunpack.c.l.b16 %v624
      %v647 = vunpack.c.h.b16 %v624
      %v648 = vunpack.c.l.b16 %v625
      %v649 = vunpack.c.h.b16 %v625
      %v650 = vunpack.c.l.b16 %v626
      %v651 = vunpack.c.h.b16 %v626
      %v652 = vunpack.c.l.b16 %v627
      %v653 = vunpack.c.h.b16 %v627
      %v654 = vunpack.c.l.b16 %v628
      %v655 = vunpack.c.h.b16 %v628
      %v656 = vpack.c.b16 %v642, %v640
      %v657 = vpack.c.b16 %v643, %v641
      %v658 = vpack.c.b16 %v646, %v644
      %v659 = vpack.c.b16 %v647, %v645
      %v660 = vpack.c.b16 %v650, %v648
      %v661 = vpack.c.b16 %v651, %v649
      %v662 = vpack.c.b16 %v654, %v652
      %v663 = vpack.c.b16 %v655, %v653
      %v673 = vsel %vm562, %v629, 0
      %675 = vmatpush.bf16.msra.mxu0 0
      %676 = vmatpush.bf16.msra.mxu0 0
      %677 = vmatpush.bf16.msra.mxu0 0
      %678 = vmatpush.bf16.msra.mxu0 0
      %679 = vmatpush.bf16.msra.mxu0 %v662
      %680 = vmatpush.bf16.msra.mxu0 %v660
      %681 = vmatpush.bf16.msra.mxu0 %v658
      %682 = vmatpush.bf16.msra.mxu0 %v656
      %683 = vmatmul.bf16.gmra.mxu0 %v673
      %v684 = vpop.f32.mrf.mxu0
      %v685 = vadd.f32 %v630, %v684
      %v686 = vpop.f32.mrf.mxu0
      %v687 = vadd.f32 %v630, %v686
      %688 = vdwg.mxu0
      %689 = vmatpush.bf16.msra.mxu0 0
      %690 = vmatpush.bf16.msra.mxu0 0
      %691 = vmatpush.bf16.msra.mxu0 0
      %692 = vmatpush.bf16.msra.mxu0 0
      %693 = vmatpush.bf16.msra.mxu0 %v663
      %694 = vmatpush.bf16.msra.mxu0 %v661
      %695 = vmatpush.bf16.msra.mxu0 %v659
      %696 = vmatpush.bf16.msra.mxu0 %v657
      %697 = vmatmul.bf16.gmra.mxu0 %v673
      %v698 = vpop.f32.mrf.mxu0
      %v699 = vadd.f32 %v631, %v698
      %v700 = vpop.f32.mrf.mxu0
      %v701 = vadd.f32 %v631, %v700
      %702 = vdwg.mxu0
      %v703 = vxor.u32 %v685, 2147483648
      %v704 = vxor.u32 %v699, 2147483648
      %v705 = vxor.u32 %v687, 2147483648
      %v706 = vxor.u32 %v701, 2147483648
      %v707 = vmul.f32 %v703, 1.442695
      %v708 = vpow.pop %v707
      %v709 = vmul.f32 %v704, 1.442695
      %v710 = vpow.pop %v709
      %v711 = vmul.f32 %v705, 1.442695
      %v712 = vpow.pop %v711
      %v713 = vmul.f32 %v706, 1.442695
      %v714 = vpow.pop %v713
      %v715 = vadd.f32 %v708, 1.0
      %v716 = vadd.f32 %v710, 1.0
      %v717 = vadd.f32 %v712, 1.0
      %v718 = vadd.f32 %v714, 1.0
      %v719 = vrcp.pop %v715
      %v720 = vmul.f32 %v715, %v719
      %v721 = vsub.f32 1.0, %v720
      %v722 = vmul.f32 %v719, %v721
      %v723 = vadd.f32 %v719, %v722
      %vm724 = vweird.f32 %v715
      %vm725 = vweird.f32 %v719
      %vm726 = vmor %vm724, %vm725
      %v727 = vsel %vm726, %v719, %v723
      %v728 = vand.u32 2147483647, %v715
      %vm729 = vcmp.eq.f32.partialorder %v728, 8.507059e+37
      %v730 = vand.u32 %v715, 2147483648
      %v731 = vor.u32 1.1754944e-38, %v730
      %v732 = vsel %vm729, %v731, %v727
      %v733 = vmul.f32 1.0, %v732
      %v734 = vrcp.pop %v716
      %v735 = vmul.f32 %v716, %v734
      %v736 = vsub.f32 1.0, %v735
      %v737 = vmul.f32 %v734, %v736
      %v738 = vadd.f32 %v734, %v737
      %vm739 = vweird.f32 %v716
      %vm740 = vweird.f32 %v734
      %vm741 = vmor %vm739, %vm740
      %v742 = vsel %vm741, %v734, %v738
      %v743 = vand.u32 2147483647, %v716
      %vm744 = vcmp.eq.f32.partialorder %v743, 8.507059e+37
      %v745 = vand.u32 %v716, 2147483648
      %v746 = vor.u32 1.1754944e-38, %v745
      %v747 = vsel %vm744, %v746, %v742
      %v748 = vmul.f32 1.0, %v747
      %v749 = vrcp.pop %v717
      %v750 = vmul.f32 %v717, %v749
      %v751 = vsub.f32 1.0, %v750
      %v752 = vmul.f32 %v749, %v751
      %v753 = vadd.f32 %v749, %v752
      %vm754 = vweird.f32 %v717
      %vm755 = vweird.f32 %v749
      %vm756 = vmor %vm754, %vm755
      %v757 = vsel %vm756, %v749, %v753
      %v758 = vand.u32 2147483647, %v717
      %vm759 = vcmp.eq.f32.partialorder %v758, 8.507059e+37
      %v760 = vand.u32 %v717, 2147483648
      %v761 = vor.u32 1.1754944e-38, %v760
      %v762 = vsel %vm759, %v761, %v757
      %v763 = vmul.f32 1.0, %v762
      %v764 = vrcp.pop %v718
      %v765 = vmul.f32 %v718, %v764
      %v766 = vsub.f32 1.0, %v765
      %v767 = vmul.f32 %v764, %v766
      %v768 = vadd.f32 %v764, %v767
      %vm769 = vweird.f32 %v718
      %vm770 = vweird.f32 %v764
      %vm771 = vmor %vm769, %vm770
      %v772 = vsel %vm771, %v764, %v768
      %v773 = vand.u32 2147483647, %v718
      %vm774 = vcmp.eq.f32.partialorder %v773, 8.507059e+37
      %v775 = vand.u32 %v718, 2147483648
      %v776 = vor.u32 1.1754944e-38, %v775
      %v777 = vsel %vm774, %v776, %v772
      %v778 = vmul.f32 1.0, %v777
      %v779 = vmul.f32 %v685, %v733
      %v780 = vmul.f32 %v699, %v748
      %v781 = vmul.f32 %v687, %v763
      %v782 = vmul.f32 %v701, %v778
      %v783 = vld [vmem:[%s6] sm:$0xf]
      %v784 = vld [vmem:[%s6 + $0x4] sm:$0xf]
      %v785 = vld [vmem:[%s6 + $0x8] sm:$0xf]
      %v786 = vld [vmem:[%s6 + $0xc] sm:$0xf]
      %v787 = vld [vmem:[%s6 + $0x10] sm:$0xf]
      %v788 = vld [vmem:[%s6 + $0x14] sm:$0xf]
      %v789 = vld [vmem:[%s6 + $0x18] sm:$0xf]
      %v790 = vld [vmem:[%s6 + $0x1c] sm:$0xf]
      %v791 = vld [vmem:[%s6 + $0x20] sm:$0xf]
      %v792 = vld [vmem:[%s6 + $0x24] sm:$0xf]
      %v793 = vld [vmem:[%s6 + $0x28] sm:$0xf]
      %v794 = vld [vmem:[%s6 + $0x2c] sm:$0xf]
      %v795 = vld [vmem:[%s6 + $0x30] sm:$0xf]
      %v796 = vld [vmem:[%s6 + $0x34] sm:$0xf]
      %v797 = vld [vmem:[%s6 + $0x38] sm:$0xf]
      %v798 = vld [vmem:[%s6 + $0x3c] sm:$0xf]
      %v799 = vld [vmem:[%s6 + $0x40] sm:$0xf]
      %v800 = vld [vmem:[%s6 + $0x44] sm:$0xf]
      %v801 = vld [vmem:[%s6 + $0x48] sm:$0xf]
      %v802 = vld [vmem:[%s6 + $0x4c] sm:$0xf]
      %v803 = vld [vmem:[%s6 + $0x50] sm:$0xf]
      %v804 = vld [vmem:[%s6 + $0x54] sm:$0xf]
      %v805 = vld [vmem:[%s6 + $0x58] sm:$0xf]
      %v806 = vld [vmem:[%s6 + $0x5c] sm:$0xf]
      %v807 = vld [vmem:[%s6 + $0x60] sm:$0xf]
      %v808 = vld [vmem:[%s6 + $0x64] sm:$0xf]
      %v809 = vld [vmem:[%s6 + $0x68] sm:$0xf]
      %v810 = vld [vmem:[%s6 + $0x6c] sm:$0xf]
      %v811 = vld [vmem:[%s6 + $0x70] sm:$0xf]
      %v812 = vld [vmem:[%s6 + $0x74] sm:$0xf]
      %v813 = vld [vmem:[%s6 + $0x78] sm:$0xf]
      %v814 = vld [vmem:[%s6 + $0x7c] sm:$0xf]
      %v815 = vpack.c.bf16 %v781, %v779
      %v816 = vpack.c.bf16 %v782, %v780
      %v817 = vperm.slane %v556, 3
      %v850 = vunpack.c.l.b16 %v783
      %v851 = vunpack.c.l.b16 %v784
      %v852 = vunpack.c.l.b16 %v785
      %v853 = vunpack.c.l.b16 %v786
      %v854 = vunpack.c.l.b16 %v787
      %v855 = vunpack.c.l.b16 %v788
      %v856 = vunpack.c.l.b16 %v789
      %v857 = vunpack.c.l.b16 %v790
      %v858 = vunpack.c.l.b16 %v791
      %v859 = vunpack.c.l.b16 %v792
      %v860 = vunpack.c.l.b16 %v793
      %v861 = vunpack.c.l.b16 %v794
      %v862 = vunpack.c.l.b16 %v795
      %v863 = vunpack.c.l.b16 %v796
      %v864 = vunpack.c.l.b16 %v797
      %v865 = vunpack.c.l.b16 %v798
      %v866 = vunpack.c.l.b16 %v799
      %v867 = vunpack.c.l.b16 %v800
      %v868 = vunpack.c.l.b16 %v801
      %v869 = vunpack.c.l.b16 %v802
      %v870 = vunpack.c.l.b16 %v803
      %v871 = vunpack.c.l.b16 %v804
      %v872 = vunpack.c.l.b16 %v805
      %v873 = vunpack.c.l.b16 %v806
      %v874 = vunpack.c.l.b16 %v807
      %v875 = vunpack.c.l.b16 %v808
      %v876 = vunpack.c.l.b16 %v809
      %v877 = vunpack.c.l.b16 %v810
      %v878 = vunpack.c.l.b16 %v811
      %v879 = vunpack.c.l.b16 %v812
      %v880 = vunpack.c.l.b16 %v813
      %v881 = vunpack.c.l.b16 %v814
      %v882 = vpack.c.b16 %v851, %v850
      %v883 = vpack.c.b16 %v853, %v852
      %v884 = vpack.c.b16 %v855, %v854
      %v885 = vpack.c.b16 %v857, %v856
      %v886 = vpack.c.b16 %v859, %v858
      %v887 = vpack.c.b16 %v861, %v860
      %v888 = vpack.c.b16 %v863, %v862
      %v889 = vpack.c.b16 %v865, %v864
      %v890 = vpack.c.b16 %v867, %v866
      %v891 = vpack.c.b16 %v869, %v868
      %v892 = vpack.c.b16 %v871, %v870
      %v893 = vpack.c.b16 %v873, %v872
      %v894 = vpack.c.b16 %v875, %v874
      %v895 = vpack.c.b16 %v877, %v876
      %v896 = vpack.c.b16 %v879, %v878
      %v897 = vpack.c.b16 %v881, %v880
      %914 = vmatpush.bf16.msra.mxu0 %v889
      %915 = vmatpush.bf16.msra.mxu0 %v888
      %916 = vmatpush.bf16.msra.mxu0 %v887
      %917 = vmatpush.bf16.msra.mxu0 %v886
      %918 = vmatpush.bf16.msra.mxu0 %v885
      %919 = vmatpush.bf16.msra.mxu0 %v884
      %920 = vmatpush.bf16.msra.mxu0 %v883
      %921 = vmatpush.bf16.msra.mxu0 %v882
      %922 = vmatmul.bf16.gmra.mxu0 %v815
      %v923 = vpop.f32.mrf.mxu0
      %v924 = vadd.f32 %v817, %v923
      %v925 = vpop.f32.mrf.mxu0
      %v926 = vadd.f32 %v817, %v925
      %927 = vdwg.mxu0
      %928 = vmatpush.bf16.msra.mxu0 %v897
      %929 = vmatpush.bf16.msra.mxu0 %v896
      %930 = vmatpush.bf16.msra.mxu0 %v895
      %931 = vmatpush.bf16.msra.mxu0 %v894
      %932 = vmatpush.bf16.msra.mxu0 %v893
      %933 = vmatpush.bf16.msra.mxu0 %v892
      %934 = vmatpush.bf16.msra.mxu0 %v891
      %935 = vmatpush.bf16.msra.mxu0 %v890
      %936 = vmatmul.bf16.gmra.mxu0 %v816
      %v937 = vpop.f32.mrf.mxu0
      %v938 = vadd.f32 %v924, %v937
      %v939 = vpop.f32.mrf.mxu0
      %v940 = vadd.f32 %v926, %v939
      %941 = vdwg.mxu0
      %v942 = vmul.f32 %v938, 0.5
      %v943 = vmul.f32 %v940, 0.5
      %v944 = vadd.f32 %v554, %v942
      %v945 = vadd.f32 %v555, %v943
      %v946 = vsel %vm562, %v944, 0.0
      %947 = vadd.xlane.f32.xlu0 %v946
      %v948 = vpop.xlane.xlu0 %947
      %v949 = vsel %vm566, %v945, 0.0
      %950 = vadd.xlane.f32.xlu0 %v949
      %v951 = vpop.xlane.xlu0 %950
      %v952 = vmul.f32 %v948, %v576
      %v953 = vmul.f32 %v951, %v576
      %v954 = vsub.f32 %v944, %v952
      %v955 = vsub.f32 %v945, %v953
      %v956 = vmul.f32 %v954, %v954
      %v957 = vmul.f32 %v955, %v955
      %v958 = vsel %vm562, %v956, 0.0
      %959 = vadd.xlane.f32.xlu0 %v958
      %v960 = vpop.xlane.xlu0 %959
      %v961 = vsel %vm566, %v957, 0.0
      %962 = vadd.xlane.f32.xlu0 %v961
      %v963 = vpop.xlane.xlu0 %962
      %v964 = vmul.f32 %v960, %v576
      %v965 = vmul.f32 %v963, %v576
      %v966 = vadd.f32 %v964, 1e-05
      %v967 = vadd.f32 %v965, 1e-05
      %v968 = vrsqrt.pop %v966
      %v969 = vmul.f32 %v968, %v966
      %v970 = vmul.f32 %v969, %v968
      %v971 = vmul.f32 0.5, %v970
      %v972 = vsub.f32 1.5, %v971
      %v973 = vmul.f32 %v968, %v972
      %vm974 = vweird.f32 %v966
      %vm975 = vweird.f32 %v968
      %vm976 = vmor %vm974, %vm975
      %v977 = vsel %vm976, %v968, %v973
      %v978 = vrsqrt.pop %v967
      %v979 = vmul.f32 %v978, %v967
      %v980 = vmul.f32 %v979, %v978
      %v981 = vmul.f32 0.5, %v980
      %v982 = vsub.f32 1.5, %v981
      %v983 = vmul.f32 %v978, %v982
      %vm984 = vweird.f32 %v967
      %vm985 = vweird.f32 %v978
      %vm986 = vmor %vm984, %vm985
      %v987 = vsel %vm986, %v978, %v983
      %v988 = vmul.f32 %v954, %v977
      %v989 = vmul.f32 %v955, %v987
      %v990 = vperm.slane %v556, 4
      %v991 = vmul.f32 %v988, %v990
      %v992 = vmul.f32 %v989, %v990
      %v993 = vperm.slane %v556, 5
      %v994 = vadd.f32 %v991, %v993
      %v995 = vadd.f32 %v992, %v993
      %v996 = vld [vmem:[%s7] sm:$0xff]
      %v997 = vld [vmem:[%s7 + $0x8] sm:$0xff]
      %v998 = vld [vmem:[%s7 + $0x10] sm:$0xff]
      %v999 = vld [vmem:[%s7 + $0x18] sm:$0xff]
      %v1000 = vld [vmem:[%s7 + $0x20] sm:$0xff]
      %v1001 = vld [vmem:[%s7 + $0x28] sm:$0xff]
      %v1002 = vld [vmem:[%s7 + $0x30] sm:$0xff]
      %v1003 = vld [vmem:[%s7 + $0x38] sm:$0xff]
      %v1004 = vpack.c.bf16 %v995, %v994
      %v1005 = vperm.slane %v556, 6
      %v1006 = vperm.slane %v557, 6
      %v1015 = vunpack.c.l.b16 %v996
      %v1016 = vunpack.c.h.b16 %v996
      %v1017 = vunpack.c.l.b16 %v997
      %v1018 = vunpack.c.h.b16 %v997
      %v1019 = vunpack.c.l.b16 %v998
      %v1020 = vunpack.c.h.b16 %v998
      %v1021 = vunpack.c.l.b16 %v999
      %v1022 = vunpack.c.h.b16 %v999
      %v1023 = vunpack.c.l.b16 %v1000
      %v1024 = vunpack.c.h.b16 %v1000
      %v1025 = vunpack.c.l.b16 %v1001
      %v1026 = vunpack.c.h.b16 %v1001
      %v1027 = vunpack.c.l.b16 %v1002
      %v1028 = vunpack.c.h.b16 %v1002
      %v1029 = vunpack.c.l.b16 %v1003
      %v1030 = vunpack.c.h.b16 %v1003
      %v1031 = vpack.c.b16 %v1017, %v1015
      %v1032 = vpack.c.b16 %v1018, %v1016
      %v1033 = vpack.c.b16 %v1021, %v1019
      %v1034 = vpack.c.b16 %v1022, %v1020
      %v1035 = vpack.c.b16 %v1025, %v1023
      %v1036 = vpack.c.b16 %v1026, %v1024
      %v1037 = vpack.c.b16 %v1029, %v1027
      %v1038 = vpack.c.b16 %v1030, %v1028
      %v1048 = vsel %vm562, %v1004, 0
      %1050 = vmatpush.bf16.msra.mxu0 0
      %1051 = vmatpush.bf16.msra.mxu0 0
      %1052 = vmatpush.bf16.msra.mxu0 0
      %1053 = vmatpush.bf16.msra.mxu0 0
      %1054 = vmatpush.bf16.msra.mxu0 %v1037
      %1055 = vmatpush.bf16.msra.mxu0 %v1035
      %1056 = vmatpush.bf16.msra.mxu0 %v1033
      %1057 = vmatpush.bf16.msra.mxu0 %v1031
      %1058 = vmatmul.bf16.gmra.mxu0 %v1048
      %v1059 = vpop.f32.mrf.mxu0
      %v1060 = vadd.f32 %v1005, %v1059
      %v1061 = vpop.f32.mrf.mxu0
      %v1062 = vadd.f32 %v1005, %v1061
      %1063 = vdwg.mxu0
      %1064 = vmatpush.bf16.msra.mxu0 0
      %1065 = vmatpush.bf16.msra.mxu0 0
      %1066 = vmatpush.bf16.msra.mxu0 0
      %1067 = vmatpush.bf16.msra.mxu0 0
      %1068 = vmatpush.bf16.msra.mxu0 %v1038
      %1069 = vmatpush.bf16.msra.mxu0 %v1036
      %1070 = vmatpush.bf16.msra.mxu0 %v1034
      %1071 = vmatpush.bf16.msra.mxu0 %v1032
      %1072 = vmatmul.bf16.gmra.mxu0 %v1048
      %v1073 = vpop.f32.mrf.mxu0
      %v1074 = vadd.f32 %v1006, %v1073
      %v1075 = vpop.f32.mrf.mxu0
      %v1076 = vadd.f32 %v1006, %v1075
      %1077 = vdwg.mxu0
      %v1078 = vpack.c.bf16 %v1062, %v1060
      %v1079 = vpack.c.bf16 %v1076, %v1074
      %1081 = vrot.lane.b32.xlu0 %v1078, 64
      %v1082 = vpop.permute.xlu0 %1081
      %vm1083 = vcmask 130048
      %v1085 = vsel %vm1083, %v1078, 0
      %v1088 = vsel %vm1083, %v1082, 0
      %1090 = vmatpush.bf16.xpose.msra.mxu0 0
      %1091 = vmatpush.bf16.xpose.msra.mxu0 0
      %1092 = vmatpush.bf16.xpose.msra.mxu0 0
      %1093 = vmatpush.bf16.xpose.msra.mxu0 0
      %1094 = vmatpush.bf16.xpose.msra.mxu0 0
      %1095 = vmatpush.bf16.xpose.msra.mxu0 0
      %1096 = vmatpush.bf16.xpose.msra.mxu0 0
      %1097 = vmatpush.bf16.xpose.msra.mxu0 %v1088
      %1098 = vmatmul.bf16.gmra.mxu0 %v1085
      %v1099 = vpop.f32.mrf.mxu0
      %v1100 = vadd.f32 0.0, %v1099
      %v1101 = vpop.f32.mrf.mxu0
      %v1102 = vadd.f32 0.0, %v1101
      %1103 = vdwg.mxu0
      %v1104 = vmul.f32 %v1100, 0.25
      %v1105 = vmul.f32 %v1102, 0.25
      %v1106 = vadd.f32 %v1104, %v468
      %v1107 = vadd.f32 %v1105, %v468
      %vm1108 = vcmask 121856
      %v1109 = vsel %vm1108, %v1106, -inf
      %1110 = vmax.xlane.f32.xlu0 %v1109
      %v1111 = vpop.xlane.xlu0 %1110
      %vm1112 = vcmask 120832
      %v1113 = vsel %vm1112, %v1107, -inf
      %1114 = vmax.xlane.f32.xlu0 %v1113
      %v1115 = vpop.xlane.xlu0 %1114
      %v1116 = vsub.f32 %v1106, %v1111
      %v1117 = vsub.f32 %v1107, %v1115
      %v1118 = vmul.f32 %v1116, 1.442695
      %v1119 = vpow.pop %v1118
      %v1120 = vmul.f32 %v1117, 1.442695
      %v1121 = vpow.pop %v1120
      %v1122 = vsel %vm1108, %v1119, 0.0
      %1123 = vadd.xlane.f32.xlu0 %v1122
      %v1124 = vpop.xlane.xlu0 %1123
      %v1125 = vsel %vm1112, %v1121, 0.0
      %1126 = vadd.xlane.f32.xlu0 %v1125
      %v1127 = vpop.xlane.xlu0 %1126
      %v1128 = vrcp.pop %v1124
      %v1129 = vrcp.pop %v1127
      %v1130 = vmul.f32 %v1119, %v1128
      %v1131 = vmul.f32 %v1121, %v1129
      %v1132 = vpack.c.bf16 %v1131, %v1130
      %v1134 = vsel %vm1108, %v1132, 0
      %vm1136 = vcmask 1046528
      %vm1137 = vcmask 1047552
      %v1138 = vsel %vm1136, 4294967295, 65535
      %v1139 = vsel %vm1137, %v1138, 0
      %v1141 = vand.u32 %v1079, %v1139
      %1143 = vmatpush.bf16.msra.mxu0 0
      %1144 = vmatpush.bf16.msra.mxu0 0
      %1145 = vmatpush.bf16.msra.mxu0 0
      %1146 = vmatpush.bf16.msra.mxu0 0
      %1147 = vmatpush.bf16.msra.mxu0 0
      %1148 = vmatpush.bf16.msra.mxu0 0
      %1149 = vmatpush.bf16.msra.mxu0 0
      %1150 = vmatpush.bf16.msra.mxu0 %v1141
      %1151 = vmatmul.bf16.gmra.mxu0 %v1134
      %v1152 = vpop.f32.mrf.mxu0
      %v1153 = vadd.f32 0.0, %v1152
      %v1154 = vpop.f32.mrf.mxu0
      %v1155 = vadd.f32 0.0, %v1154
      %1156 = vdwg.mxu0
      %1157 = vrot.lane.b32.xlu0 %v1078, 112
      %v1158 = vpop.permute.xlu0 %1157
      %1159 = vrot.lane.b32.xlu0 %v1078, 48
      %v1160 = vpop.permute.xlu0 %1159
      %v1162 = vsel %vm1083, %v1158, 0
      %v1165 = vsel %vm1083, %v1160, 0
      %1167 = vmatpush.bf16.xpose.msra.mxu0 0
      %1168 = vmatpush.bf16.xpose.msra.mxu0 0
      %1169 = vmatpush.bf16.xpose.msra.mxu0 0
      %1170 = vmatpush.bf16.xpose.msra.mxu0 0
      %1171 = vmatpush.bf16.xpose.msra.mxu0 0
      %1172 = vmatpush.bf16.xpose.msra.mxu0 0
      %1173 = vmatpush.bf16.xpose.msra.mxu0 0
      %1174 = vmatpush.bf16.xpose.msra.mxu0 %v1165
      %1175 = vmatmul.bf16.gmra.mxu0 %v1162
      %v1176 = vpop.f32.mrf.mxu0
      %v1177 = vadd.f32 0.0, %v1176
      %v1178 = vpop.f32.mrf.mxu0
      %v1179 = vadd.f32 0.0, %v1178
      %1180 = vdwg.mxu0
      %v1181 = vmul.f32 %v1177, 0.25
      %v1182 = vmul.f32 %v1179, 0.25
      %v1183 = vadd.f32 %v1181, %v468
      %v1184 = vadd.f32 %v1182, %v468
      %v1185 = vsel %vm1108, %v1183, -inf
      %1186 = vmax.xlane.f32.xlu0 %v1185
      %v1187 = vpop.xlane.xlu0 %1186
      %v1188 = vsel %vm1112, %v1184, -inf
      %1189 = vmax.xlane.f32.xlu0 %v1188
      %v1190 = vpop.xlane.xlu0 %1189
      %v1191 = vsub.f32 %v1183, %v1187
      %v1192 = vsub.f32 %v1184, %v1190
      %v1193 = vmul.f32 %v1191, 1.442695
      %v1194 = vpow.pop %v1193
      %v1195 = vmul.f32 %v1192, 1.442695
      %v1196 = vpow.pop %v1195
      %v1197 = vsel %vm1108, %v1194, 0.0
      %1198 = vadd.xlane.f32.xlu0 %v1197
      %v1199 = vpop.xlane.xlu0 %1198
      %v1200 = vsel %vm1112, %v1196, 0.0
      %1201 = vadd.xlane.f32.xlu0 %v1200
      %v1202 = vpop.xlane.xlu0 %1201
      %v1203 = vrcp.pop %v1199
      %v1204 = vrcp.pop %v1202
      %v1205 = vmul.f32 %v1194, %v1203
      %v1206 = vmul.f32 %v1196, %v1204
      %v1207 = vpack.c.bf16 %v1206, %v1205
      %1209 = vrot.lane.b32.xlu0 %v1079, 112
      %v1210 = vpop.permute.xlu0 %1209
      %v1212 = vsel %vm1108, %v1207, 0
      %v1215 = vand.u32 %v1210, %v1139
      %1217 = vmatpush.bf16.msra.mxu0 0
      %1218 = vmatpush.bf16.msra.mxu0 0
      %1219 = vmatpush.bf16.msra.mxu0 0
      %1220 = vmatpush.bf16.msra.mxu0 0
      %1221 = vmatpush.bf16.msra.mxu0 0
      %1222 = vmatpush.bf16.msra.mxu0 0
      %1223 = vmatpush.bf16.msra.mxu0 0
      %1224 = vmatpush.bf16.msra.mxu0 %v1215
      %1225 = vmatmul.bf16.gmra.mxu0 %v1212
      %v1226 = vpop.f32.mrf.mxu0
      %v1227 = vadd.f32 0.0, %v1226
      %v1228 = vpop.f32.mrf.mxu0
      %v1229 = vadd.f32 0.0, %v1228
      %1230 = vdwg.mxu0
      %1231 = vrot.lane.b32.xlu0 %v1078, 96
      %v1232 = vpop.permute.xlu0 %1231
      %1233 = vrot.lane.b32.xlu0 %v1078, 32
      %v1234 = vpop.permute.xlu0 %1233
      %v1236 = vsel %vm1083, %v1232, 0
      %v1239 = vsel %vm1083, %v1234, 0
      %1241 = vmatpush.bf16.xpose.msra.mxu0 0
      %1242 = vmatpush.bf16.xpose.msra.mxu0 0
      %1243 = vmatpush.bf16.xpose.msra.mxu0 0
      %1244 = vmatpush.bf16.xpose.msra.mxu0 0
      %1245 = vmatpush.bf16.xpose.msra.mxu0 0
      %1246 = vmatpush.bf16.xpose.msra.mxu0 0
      %1247 = vmatpush.bf16.xpose.msra.mxu0 0
      %1248 = vmatpush.bf16.xpose.msra.mxu0 %v1239
      %1249 = vmatmul.bf16.gmra.mxu0 %v1236
      %v1250 = vpop.f32.mrf.mxu0
      %v1251 = vadd.f32 0.0, %v1250
      %v1252 = vpop.f32.mrf.mxu0
      %v1253 = vadd.f32 0.0, %v1252
      %1254 = vdwg.mxu0
      %v1255 = vmul.f32 %v1251, 0.25
      %v1256 = vmul.f32 %v1253, 0.25
      %v1257 = vadd.f32 %v1255, %v468
      %v1258 = vadd.f32 %v1256, %v468
      %v1259 = vsel %vm1108, %v1257, -inf
      %1260 = vmax.xlane.f32.xlu0 %v1259
      %v1261 = vpop.xlane.xlu0 %1260
      %v1262 = vsel %vm1112, %v1258, -inf
      %1263 = vmax.xlane.f32.xlu0 %v1262
      %v1264 = vpop.xlane.xlu0 %1263
      %v1265 = vsub.f32 %v1257, %v1261
      %v1266 = vsub.f32 %v1258, %v1264
      %v1267 = vmul.f32 %v1265, 1.442695
      %v1268 = vpow.pop %v1267
      %v1269 = vmul.f32 %v1266, 1.442695
      %v1270 = vpow.pop %v1269
      %v1271 = vsel %vm1108, %v1268, 0.0
      %1272 = vadd.xlane.f32.xlu0 %v1271
      %v1273 = vpop.xlane.xlu0 %1272
      %v1274 = vsel %vm1112, %v1270, 0.0
      %1275 = vadd.xlane.f32.xlu0 %v1274
      %v1276 = vpop.xlane.xlu0 %1275
      %v1277 = vrcp.pop %v1273
      %v1278 = vrcp.pop %v1276
      %v1279 = vmul.f32 %v1268, %v1277
      %v1280 = vmul.f32 %v1270, %v1278
      %v1281 = vpack.c.bf16 %v1280, %v1279
      %1282 = vrot.lane.b32.xlu0 %v1079, 96
      %v1283 = vpop.permute.xlu0 %1282
      %v1285 = vsel %vm1108, %v1281, 0
      %v1288 = vand.u32 %v1283, %v1139
      %1290 = vmatpush.bf16.msra.mxu0 0
      %1291 = vmatpush.bf16.msra.mxu0 0
      %1292 = vmatpush.bf16.msra.mxu0 0
      %1293 = vmatpush.bf16.msra.mxu0 0
      %1294 = vmatpush.bf16.msra.mxu0 0
      %1295 = vmatpush.bf16.msra.mxu0 0
      %1296 = vmatpush.bf16.msra.mxu0 0
      %1297 = vmatpush.bf16.msra.mxu0 %v1288
      %1298 = vmatmul.bf16.gmra.mxu0 %v1285
      %v1299 = vpop.f32.mrf.mxu0
      %v1300 = vadd.f32 0.0, %v1299
      %v1301 = vpop.f32.mrf.mxu0
      %v1302 = vadd.f32 0.0, %v1301
      %1303 = vdwg.mxu0
      %1304 = vrot.lane.b32.xlu0 %v1078, 80
      %v1305 = vpop.permute.xlu0 %1304
      %1306 = vrot.lane.b32.xlu0 %v1078, 16
      %v1307 = vpop.permute.xlu0 %1306
      %v1309 = vsel %vm1083, %v1305, 0
      %v1312 = vsel %vm1083, %v1307, 0
      %1314 = vmatpush.bf16.xpose.msra.mxu0 0
      %1315 = vmatpush.bf16.xpose.msra.mxu0 0
      %1316 = vmatpush.bf16.xpose.msra.mxu0 0
      %1317 = vmatpush.bf16.xpose.msra.mxu0 0
      %1318 = vmatpush.bf16.xpose.msra.mxu0 0
      %1319 = vmatpush.bf16.xpose.msra.mxu0 0
      %1320 = vmatpush.bf16.xpose.msra.mxu0 0
      %1321 = vmatpush.bf16.xpose.msra.mxu0 %v1312
      %1322 = vmatmul.bf16.gmra.mxu0 %v1309
      %v1323 = vpop.f32.mrf.mxu0
      %v1324 = vadd.f32 0.0, %v1323
      %v1325 = vpop.f32.mrf.mxu0
      %v1326 = vadd.f32 0.0, %v1325
      %1327 = vdwg.mxu0
      %v1328 = vmul.f32 %v1324, 0.25
      %v1329 = vmul.f32 %v1326, 0.25
      %v1330 = vadd.f32 %v1328, %v468
      %v1331 = vadd.f32 %v1329, %v468
      %v1332 = vsel %vm1108, %v1330, -inf
      %1333 = vmax.xlane.f32.xlu0 %v1332
      %v1334 = vpop.xlane.xlu0 %1333
      %v1335 = vsel %vm1112, %v1331, -inf
      %1336 = vmax.xlane.f32.xlu0 %v1335
      %v1337 = vpop.xlane.xlu0 %1336
      %v1338 = vsub.f32 %v1330, %v1334
      %v1339 = vsub.f32 %v1331, %v1337
      %v1340 = vmul.f32 %v1338, 1.442695
      %v1341 = vpow.pop %v1340
      %v1342 = vmul.f32 %v1339, 1.442695
      %v1343 = vpow.pop %v1342
      %v1344 = vsel %vm1108, %v1341, 0.0
      %1345 = vadd.xlane.f32.xlu0 %v1344
      %v1346 = vpop.xlane.xlu0 %1345
      %v1347 = vsel %vm1112, %v1343, 0.0
      %1348 = vadd.xlane.f32.xlu0 %v1347
      %v1349 = vpop.xlane.xlu0 %1348
      %v1350 = vrcp.pop %v1346
      %v1351 = vrcp.pop %v1349
      %v1352 = vmul.f32 %v1341, %v1350
      %v1353 = vmul.f32 %v1343, %v1351
      %v1354 = vpack.c.bf16 %v1353, %v1352
      %1355 = vrot.lane.b32.xlu0 %v1079, 80
      %v1356 = vpop.permute.xlu0 %1355
      %v1358 = vsel %vm1108, %v1354, 0
      %v1361 = vand.u32 %v1356, %v1139
      %1363 = vmatpush.bf16.msra.mxu0 0
      %1364 = vmatpush.bf16.msra.mxu0 0
      %1365 = vmatpush.bf16.msra.mxu0 0
      %1366 = vmatpush.bf16.msra.mxu0 0
      %1367 = vmatpush.bf16.msra.mxu0 0
      %1368 = vmatpush.bf16.msra.mxu0 0
      %1369 = vmatpush.bf16.msra.mxu0 0
      %1370 = vmatpush.bf16.msra.mxu0 %v1361
      %1371 = vmatmul.bf16.gmra.mxu0 %v1358
      %v1372 = vpop.f32.mrf.mxu0
      %v1373 = vadd.f32 0.0, %v1372
      %v1374 = vpop.f32.mrf.mxu0
      %v1375 = vadd.f32 0.0, %v1374
      %1376 = vdwg.mxu0
      %1379 = vrot.lane.b32.xlu0 %v1227, 16
      %v1380 = vpop.permute.xlu0 %1379
      %1381 = vrot.lane.b32.xlu0 %v1229, 16
      %v1382 = vpop.permute.xlu0 %1381
      %1387 = vrot.lane.b32.xlu0 %v1300, 32
      %v1388 = vpop.permute.xlu0 %1387
      %1389 = vrot.lane.b32.xlu0 %v1302, 32
      %v1390 = vpop.permute.xlu0 %1389
      %1395 = vrot.lane.b32.xlu0 %v1373, 48
      %v1396 = vpop.permute.xlu0 %1395
      %1397 = vrot.lane.b32.xlu0 %v1375, 48
      %v1398 = vpop.permute.xlu0 %1397
      %v1401 = vsel %vm1083, %v1153, %v1380
      %v1402 = vsel %vm1083, %v1155, %v1382
      %vm1403 = vcmask 261120
      %v1404 = vsel %vm1403, %v1401, %v1388
      %v1405 = vsel %vm1403, %v1402, %v1390
      %vm1406 = vcmask 392192
      %v1407 = vsel %vm1406, %v1404, %v1396
      %v1408 = vsel %vm1406, %v1405, %v1398
      %v1409 = vld [vmem:[%s8] sm:$0xf]
      %v1410 = vld [vmem:[%s8 + $0x4] sm:$0xf]
      %v1411 = vld [vmem:[%s8 + $0x8] sm:$0xf]
      %v1412 = vld [vmem:[%s8 + $0xc] sm:$0xf]
      %v1413 = vld [vmem:[%s8 + $0x10] sm:$0xf]
      %v1414 = vld [vmem:[%s8 + $0x14] sm:$0xf]
      %v1415 = vld [vmem:[%s8 + $0x18] sm:$0xf]
      %v1416 = vld [vmem:[%s8 + $0x1c] sm:$0xf]
      %v1417 = vpack.c.bf16 %v1408, %v1407
      %v1426 = vunpack.c.l.b16 %v1409
      %v1427 = vunpack.c.l.b16 %v1410
      %v1428 = vunpack.c.l.b16 %v1411
      %v1429 = vunpack.c.l.b16 %v1412
      %v1430 = vunpack.c.l.b16 %v1413
      %v1431 = vunpack.c.l.b16 %v1414
      %v1432 = vunpack.c.l.b16 %v1415
      %v1433 = vunpack.c.l.b16 %v1416
      %v1434 = vpack.c.b16 %v1427, %v1426
      %v1435 = vpack.c.b16 %v1429, %v1428
      %v1436 = vpack.c.b16 %v1431, %v1430
      %v1437 = vpack.c.b16 %v1433, %v1432
      %v1443 = vsel %vm562, %v1417, 0
      %1445 = vmatpush.bf16.msra.mxu0 0
      %1446 = vmatpush.bf16.msra.mxu0 0
      %1447 = vmatpush.bf16.msra.mxu0 0
      %1448 = vmatpush.bf16.msra.mxu0 0
      %1449 = vmatpush.bf16.msra.mxu0 %v1437
      %1450 = vmatpush.bf16.msra.mxu0 %v1436
      %1451 = vmatpush.bf16.msra.mxu0 %v1435
      %1452 = vmatpush.bf16.msra.mxu0 %v1434
      %1453 = vmatmul.bf16.gmra.mxu0 %v1443
      %v1454 = vpop.f32.mrf.mxu0
      %v1455 = vadd.f32 0.0, %v1454
      %v1456 = vpop.f32.mrf.mxu0
      %v1457 = vadd.f32 0.0, %v1456
      %1458 = vdwg.mxu0
      %v1459 = vadd.f32 %v944, %v1455
      %v1460 = vadd.f32 %v945, %v1457
      %v1461 = vperm.slane %v556, 7
      %v1462 = vadd.f32 %v1459, %v1461
      %v1463 = vadd.f32 %v1460, %v1461
      %v1464 = vmul.f32 %v1462, %v460
      %v1465 = vmul.f32 %v1463, %v461
      %v1466 = vsel %vm562, %v1464, 0.0
      %1467 = vadd.xlane.f32.xlu0 %v1466
      %v1468 = vpop.xlane.xlu0 %1467
      %v1469 = vsel %vm566, %v1465, 0.0
      %1470 = vadd.xlane.f32.xlu0 %v1469
      %v1471 = vpop.xlane.xlu0 %1470
      %v1472 = vmul.f32 %v1468, %v576
      %v1473 = vmul.f32 %v1471, %v576
      %v1474 = vsub.f32 %v1464, %v1472
      %v1475 = vsub.f32 %v1465, %v1473
      %v1476 = vmul.f32 %v1474, %v1474
      %v1477 = vmul.f32 %v1475, %v1475
      %v1478 = vsel %vm562, %v1476, 0.0
      %1479 = vadd.xlane.f32.xlu0 %v1478
      %v1480 = vpop.xlane.xlu0 %1479
      %v1481 = vsel %vm566, %v1477, 0.0
      %1482 = vadd.xlane.f32.xlu0 %v1481
      %v1483 = vpop.xlane.xlu0 %1482
      %v1484 = vmul.f32 %v1480, %v576
      %v1485 = vmul.f32 %v1483, %v576
      %v1486 = vadd.f32 %v1484, 1e-05
      %v1487 = vadd.f32 %v1485, 1e-05
      %v1488 = vrsqrt.pop %v1486
      %v1489 = vmul.f32 %v1488, %v1486
      %v1490 = vmul.f32 %v1489, %v1488
      %v1491 = vmul.f32 0.5, %v1490
      %v1492 = vsub.f32 1.5, %v1491
      %v1493 = vmul.f32 %v1488, %v1492
      %vm1494 = vweird.f32 %v1486
      %vm1495 = vweird.f32 %v1488
      %vm1496 = vmor %vm1494, %vm1495
      %v1497 = vsel %vm1496, %v1488, %v1493
      %v1498 = vrsqrt.pop %v1487
      %v1499 = vmul.f32 %v1498, %v1487
      %v1500 = vmul.f32 %v1499, %v1498
      %v1501 = vmul.f32 0.5, %v1500
      %v1502 = vsub.f32 1.5, %v1501
      %v1503 = vmul.f32 %v1498, %v1502
      %vm1504 = vweird.f32 %v1487
      %vm1505 = vweird.f32 %v1498
      %vm1506 = vmor %vm1504, %vm1505
      %v1507 = vsel %vm1506, %v1498, %v1503
      %v1508 = vmul.f32 %v1474, %v1497
      %v1509 = vmul.f32 %v1475, %v1507
      %v1510 = vperm.slane %v558, 0
      %v1511 = vmul.f32 %v1508, %v1510
      %v1512 = vmul.f32 %v1509, %v1510
      %v1513 = vperm.slane %v558, 1
      %v1514 = vadd.f32 %v1511, %v1513
      %v1515 = vadd.f32 %v1512, %v1513
      %v1516 = vld [vmem:[%s9] sm:$0xf]
      %v1517 = vld [vmem:[%s9 + $0x4] sm:$0xf]
      %v1518 = vld [vmem:[%s9 + $0x8] sm:$0xf]
      %v1519 = vld [vmem:[%s9 + $0xc] sm:$0xf]
      %v1520 = vld [vmem:[%s9 + $0x10] sm:$0xf]
      %v1521 = vld [vmem:[%s9 + $0x14] sm:$0xf]
      %v1522 = vld [vmem:[%s9 + $0x18] sm:$0xf]
      %v1523 = vld [vmem:[%s9 + $0x1c] sm:$0xf]
      %v1524 = vpack.c.bf16 %v1515, %v1514
      %v1525 = vperm.slane %v558, 2
      %v1534 = vunpack.c.l.b16 %v1516
      %v1535 = vunpack.c.l.b16 %v1517
      %v1536 = vunpack.c.l.b16 %v1518
      %v1537 = vunpack.c.l.b16 %v1519
      %v1538 = vunpack.c.l.b16 %v1520
      %v1539 = vunpack.c.l.b16 %v1521
      %v1540 = vunpack.c.l.b16 %v1522
      %v1541 = vunpack.c.l.b16 %v1523
      %v1542 = vpack.c.b16 %v1535, %v1534
      %v1543 = vpack.c.b16 %v1537, %v1536
      %v1544 = vpack.c.b16 %v1539, %v1538
      %v1545 = vpack.c.b16 %v1541, %v1540
      %v1551 = vsel %vm562, %v1524, 0
      %1553 = vmatpush.bf16.msra.mxu0 0
      %1554 = vmatpush.bf16.msra.mxu0 0
      %1555 = vmatpush.bf16.msra.mxu0 0
      %1556 = vmatpush.bf16.msra.mxu0 0
      %1557 = vmatpush.bf16.msra.mxu0 %v1545
      %1558 = vmatpush.bf16.msra.mxu0 %v1544
      %1559 = vmatpush.bf16.msra.mxu0 %v1543
      %1560 = vmatpush.bf16.msra.mxu0 %v1542
      %1561 = vmatmul.bf16.gmra.mxu0 %v1551
      %v1562 = vpop.f32.mrf.mxu0
      %v1563 = vadd.f32 %v1525, %v1562
      %v1564 = vpop.f32.mrf.mxu0
      %v1565 = vadd.f32 %v1525, %v1564
      %1566 = vdwg.mxu0
      %v1567 = vxor.u32 %v1563, 2147483648
      %v1568 = vxor.u32 %v1565, 2147483648
      %v1569 = vmul.f32 %v1567, 1.442695
      %v1570 = vpow.pop %v1569
      %v1571 = vmul.f32 %v1568, 1.442695
      %v1572 = vpow.pop %v1571
      %v1573 = vadd.f32 %v1570, 1.0
      %v1574 = vadd.f32 %v1572, 1.0
      %v1575 = vrcp.pop %v1573
      %v1576 = vmul.f32 %v1573, %v1575
      %v1577 = vsub.f32 1.0, %v1576
      %v1578 = vmul.f32 %v1575, %v1577
      %v1579 = vadd.f32 %v1575, %v1578
      %vm1580 = vweird.f32 %v1573
      %vm1581 = vweird.f32 %v1575
      %vm1582 = vmor %vm1580, %vm1581
      %v1583 = vsel %vm1582, %v1575, %v1579
      %v1584 = vand.u32 2147483647, %v1573
      %vm1585 = vcmp.eq.f32.partialorder %v1584, 8.507059e+37
      %v1586 = vand.u32 %v1573, 2147483648
      %v1587 = vor.u32 1.1754944e-38, %v1586
      %v1588 = vsel %vm1585, %v1587, %v1583
      %v1589 = vmul.f32 1.0, %v1588
      %v1590 = vrcp.pop %v1574
      %v1591 = vmul.f32 %v1574, %v1590
      %v1592 = vsub.f32 1.0, %v1591
      %v1593 = vmul.f32 %v1590, %v1592
      %v1594 = vadd.f32 %v1590, %v1593
      %vm1595 = vweird.f32 %v1574
      %vm1596 = vweird.f32 %v1590
      %vm1597 = vmor %vm1595, %vm1596
      %v1598 = vsel %vm1597, %v1590, %v1594
      %v1599 = vand.u32 2147483647, %v1574
      %vm1600 = vcmp.eq.f32.partialorder %v1599, 8.507059e+37
      %v1601 = vand.u32 %v1574, 2147483648
      %v1602 = vor.u32 1.1754944e-38, %v1601
      %v1603 = vsel %vm1600, %v1602, %v1598
      %v1604 = vmul.f32 1.0, %v1603
      %1607 = vrot.lane.b32.xlu0 %v1589, 64
      %v1608 = vpop.permute.xlu0 %1607
      %1609 = vrot.lane.b32.xlu0 %v1604, 64
      %v1610 = vpop.permute.xlu0 %1609
      %v1613 = vmul.f32 %v1563, %v1608
      %v1614 = vmul.f32 %v1565, %v1610
      %v1615 = vmul.f32 %v1613, %v460
      %v1616 = vmul.f32 %v1614, %v461
      %vm1619 = vcmask 1041408
      %v1620 = vrot.slane %v1615, 6
      %v1621 = vrot.slane %v1616, 6
      %v1622 = vsel %vm1619, %v1620, %v1621
      %v1626 = vsel %vm1619, 0.0, %v1620
      %vm1627 = vcmask 1040384
      %v1628 = vsel %vm1627, %v1621, 0.0
      %v1629 = vperm.slane %v559, 7
      %v1630 = vmul.f32 %v1626, %v1629
      %v1631 = vmul.f32 %v1622, %v1629
      %v1632 = vadd.f32 %v1630, 0.0
      %v1633 = vadd.f32 %v1631, 0.0
      %v1634 = vperm.slane %v561, 0
      %v1635 = vmul.f32 %v1626, %v1634
      %v1636 = vmul.f32 %v1622, %v1634
      %v1639 = vrot.slane %v1635, 1
      %v1640 = vrot.slane %v1636, 1
      %v1641 = vsel %vm1136, %v1639, %v1640
      %v1644 = vadd.f32 %v1632, %v1641
      %v1645 = vadd.f32 %v1633, %v1640
      %v1646 = vperm.slane %v561, 1
      %v1647 = vmul.f32 %v1626, %v1646
      %v1648 = vmul.f32 %v1622, %v1646
      %v1649 = vmul.f32 %v1628, %v1646
      %vm1653 = vcmask 1045504
      %v1654 = vrot.slane %v1647, 2
      %v1655 = vrot.slane %v1648, 2
      %v1656 = vsel %vm1653, %v1654, %v1655
      %v1657 = vrot.slane %v1649, 2
      %v1658 = vsel %vm1653, %v1655, %v1657
      %v1661 = vadd.f32 %v1644, %v1656
      %v1662 = vadd.f32 %v1645, %v1658
      %v1663 = vperm.slane %v561, 2
      %v1664 = vmul.f32 %v1626, %v1663
      %v1665 = vmul.f32 %v1622, %v1663
      %v1666 = vmul.f32 %v1628, %v1663
      %vm1670 = vcmask 1044480
      %v1671 = vrot.slane %v1664, 3
      %v1672 = vrot.slane %v1665, 3
      %v1673 = vsel %vm1670, %v1671, %v1672
      %v1674 = vrot.slane %v1666, 3
      %v1675 = vsel %vm1670, %v1672, %v1674
      %v1678 = vadd.f32 %v1661, %v1673
      %v1679 = vadd.f32 %v1662, %v1675
      %v1680 = vperm.slane %v561, 3
      %v1681 = vmul.f32 %v1626, %v1680
      %v1682 = vmul.f32 %v1622, %v1680
      %v1683 = vmul.f32 %v1628, %v1680
      %vm1687 = vcmask 1043456
      %v1688 = vrot.slane %v1681, 4
      %v1689 = vrot.slane %v1682, 4
      %v1690 = vsel %vm1687, %v1688, %v1689
      %v1691 = vrot.slane %v1683, 4
      %v1692 = vsel %vm1687, %v1689, %v1691
      %v1695 = vadd.f32 %v1678, %v1690
      %v1696 = vadd.f32 %v1679, %v1692
      %v1697 = vperm.slane %v558, 3
      %v1698 = vadd.f32 %v1695, %v1697
      %v1699 = vadd.f32 %v1696, %v1697
      %v1700 = vperm.slane %v558, 6
      %v1701 = vsub.f32 %v1698, %v1700
      %v1702 = vsub.f32 %v1699, %v1700
      %v1703 = vadd.f32 %v558, 1e-05
      %v1704 = vrsqrt.pop %v1703
      %v1705 = vmul.f32 %v1704, %v1703
      %v1706 = vmul.f32 %v1705, %v1704
      %v1707 = vmul.f32 0.5, %v1706
      %v1708 = vsub.f32 1.5, %v1707
      %v1709 = vmul.f32 %v1704, %v1708
      %vm1710 = vweird.f32 %v1703
      %vm1711 = vweird.f32 %v1704
      %vm1712 = vmor %vm1710, %vm1711
      %v1713 = vsel %vm1712, %v1704, %v1709
      %v1714 = vperm.slane %v1713, 7
      %v1715 = vmul.f32 %v1701, %v1714
      %v1716 = vmul.f32 %v1702, %v1714
      %v1717 = vperm.slane %v558, 4
      %v1718 = vmul.f32 %v1715, %v1717
      %v1719 = vmul.f32 %v1716, %v1717
      %v1720 = vperm.slane %v558, 5
      %v1721 = vadd.f32 %v1718, %v1720
      %v1722 = vadd.f32 %v1719, %v1720
      %v1723 = vxor.u32 %v1721, 2147483648
      %v1724 = vxor.u32 %v1722, 2147483648
      %v1725 = vmul.f32 %v1723, 1.442695
      %v1726 = vpow.pop %v1725
      %v1727 = vmul.f32 %v1724, 1.442695
      %v1728 = vpow.pop %v1727
      %v1729 = vadd.f32 %v1726, 1.0
      %v1730 = vadd.f32 %v1728, 1.0
      %v1731 = vrcp.pop %v1729
      %v1732 = vmul.f32 %v1729, %v1731
      %v1733 = vsub.f32 1.0, %v1732
      %v1734 = vmul.f32 %v1731, %v1733
      %v1735 = vadd.f32 %v1731, %v1734
      %vm1736 = vweird.f32 %v1729
      %vm1737 = vweird.f32 %v1731
      %vm1738 = vmor %vm1736, %vm1737
      %v1739 = vsel %vm1738, %v1731, %v1735
      %v1740 = vand.u32 2147483647, %v1729
      %vm1741 = vcmp.eq.f32.partialorder %v1740, 8.507059e+37
      %v1742 = vand.u32 %v1729, 2147483648
      %v1743 = vor.u32 1.1754944e-38, %v1742
      %v1744 = vsel %vm1741, %v1743, %v1739
      %v1745 = vmul.f32 1.0, %v1744
      %v1746 = vrcp.pop %v1730
      %v1747 = vmul.f32 %v1730, %v1746
      %v1748 = vsub.f32 1.0, %v1747
      %v1749 = vmul.f32 %v1746, %v1748
      %v1750 = vadd.f32 %v1746, %v1749
      %vm1751 = vweird.f32 %v1730
      %vm1752 = vweird.f32 %v1746
      %vm1753 = vmor %vm1751, %vm1752
      %v1754 = vsel %vm1753, %v1746, %v1750
      %v1755 = vand.u32 2147483647, %v1730
      %vm1756 = vcmp.eq.f32.partialorder %v1755, 8.507059e+37
      %v1757 = vand.u32 %v1730, 2147483648
      %v1758 = vor.u32 1.1754944e-38, %v1757
      %v1759 = vsel %vm1756, %v1758, %v1754
      %v1760 = vmul.f32 1.0, %v1759
      %v1761 = vmul.f32 %v1721, %v1745
      %v1762 = vmul.f32 %v1722, %v1760
      %v1763 = vld [vmem:[%s10] sm:$0xf]
      %v1764 = vld [vmem:[%s10 + $0x4] sm:$0xf]
      %v1765 = vld [vmem:[%s10 + $0x8] sm:$0xf]
      %v1766 = vld [vmem:[%s10 + $0xc] sm:$0xf]
      %v1767 = vld [vmem:[%s10 + $0x10] sm:$0xf]
      %v1768 = vld [vmem:[%s10 + $0x14] sm:$0xf]
      %v1769 = vld [vmem:[%s10 + $0x18] sm:$0xf]
      %v1770 = vld [vmem:[%s10 + $0x1c] sm:$0xf]
      %v1771 = vpack.c.bf16 %v1762, %v1761
      %v1772 = vperm.slane %v559, 0
      %v1781 = vunpack.c.l.b16 %v1763
      %v1782 = vunpack.c.l.b16 %v1764
      %v1783 = vunpack.c.l.b16 %v1765
      %v1784 = vunpack.c.l.b16 %v1766
      %v1785 = vunpack.c.l.b16 %v1767
      %v1786 = vunpack.c.l.b16 %v1768
      %v1787 = vunpack.c.l.b16 %v1769
      %v1788 = vunpack.c.l.b16 %v1770
      %v1789 = vpack.c.b16 %v1782, %v1781
      %v1790 = vpack.c.b16 %v1784, %v1783
      %v1791 = vpack.c.b16 %v1786, %v1785
      %v1792 = vpack.c.b16 %v1788, %v1787
      %v1798 = vsel %vm562, %v1771, 0
      %1800 = vmatpush.bf16.msra.mxu0 0
      %1801 = vmatpush.bf16.msra.mxu0 0
      %1802 = vmatpush.bf16.msra.mxu0 0
      %1803 = vmatpush.bf16.msra.mxu0 0
      %1804 = vmatpush.bf16.msra.mxu0 %v1792
      %1805 = vmatpush.bf16.msra.mxu0 %v1791
      %1806 = vmatpush.bf16.msra.mxu0 %v1790
      %1807 = vmatpush.bf16.msra.mxu0 %v1789
      %1808 = vmatmul.bf16.gmra.mxu0 %v1798
      %v1809 = vpop.f32.mrf.mxu0
      %v1810 = vadd.f32 %v1772, %v1809
      %v1811 = vpop.f32.mrf.mxu0
      %v1812 = vadd.f32 %v1772, %v1811
      %1813 = vdwg.mxu0
      %v1814 = vadd.f32 %v1464, %v1810
      %v1815 = vadd.f32 %v1465, %v1812
      %v1816 = vsel %vm562, %v1814, 0.0
      %1817 = vadd.xlane.f32.xlu0 %v1816
      %v1818 = vpop.xlane.xlu0 %1817
      %v1819 = vsel %vm566, %v1815, 0.0
      %1820 = vadd.xlane.f32.xlu0 %v1819
      %v1821 = vpop.xlane.xlu0 %1820
      %v1822 = vmul.f32 %v1818, %v576
      %v1823 = vmul.f32 %v1821, %v576
      %v1824 = vsub.f32 %v1814, %v1822
      %v1825 = vsub.f32 %v1815, %v1823
      %v1826 = vmul.f32 %v1824, %v1824
      %v1827 = vmul.f32 %v1825, %v1825
      %v1828 = vsel %vm562, %v1826, 0.0
      %1829 = vadd.xlane.f32.xlu0 %v1828
      %v1830 = vpop.xlane.xlu0 %1829
      %v1831 = vsel %vm566, %v1827, 0.0
      %1832 = vadd.xlane.f32.xlu0 %v1831
      %v1833 = vpop.xlane.xlu0 %1832
      %v1834 = vmul.f32 %v1830, %v576
      %v1835 = vmul.f32 %v1833, %v576
      %v1836 = vadd.f32 %v1834, 1e-05
      %v1837 = vadd.f32 %v1835, 1e-05
      %v1838 = vrsqrt.pop %v1836
      %v1839 = vmul.f32 %v1838, %v1836
      %v1840 = vmul.f32 %v1839, %v1838
      %v1841 = vmul.f32 0.5, %v1840
      %v1842 = vsub.f32 1.5, %v1841
      %v1843 = vmul.f32 %v1838, %v1842
      %vm1844 = vweird.f32 %v1836
      %vm1845 = vweird.f32 %v1838
      %vm1846 = vmor %vm1844, %vm1845
      %v1847 = vsel %vm1846, %v1838, %v1843
      %v1848 = vrsqrt.pop %v1837
      %v1849 = vmul.f32 %v1848, %v1837
      %v1850 = vmul.f32 %v1849, %v1848
      %v1851 = vmul.f32 0.5, %v1850
      %v1852 = vsub.f32 1.5, %v1851
      %v1853 = vmul.f32 %v1848, %v1852
      %vm1854 = vweird.f32 %v1837
      %vm1855 = vweird.f32 %v1848
      %vm1856 = vmor %vm1854, %vm1855
      %v1857 = vsel %vm1856, %v1848, %v1853
      %v1858 = vmul.f32 %v1824, %v1847
      %v1859 = vmul.f32 %v1825, %v1857
      %v1860 = vperm.slane %v559, 1
      %v1861 = vmul.f32 %v1858, %v1860
      %v1862 = vmul.f32 %v1859, %v1860
      %v1863 = vperm.slane %v559, 2
      %v1864 = vadd.f32 %v1861, %v1863
      %v1865 = vadd.f32 %v1862, %v1863
      %v1866 = vld [vmem:[%s11] sm:$0xff]
      %v1867 = vld [vmem:[%s11 + $0x8] sm:$0xff]
      %v1868 = vld [vmem:[%s11 + $0x10] sm:$0xff]
      %v1869 = vld [vmem:[%s11 + $0x18] sm:$0xff]
      %v1870 = vld [vmem:[%s11 + $0x20] sm:$0xff]
      %v1871 = vld [vmem:[%s11 + $0x28] sm:$0xff]
      %v1872 = vld [vmem:[%s11 + $0x30] sm:$0xff]
      %v1873 = vld [vmem:[%s11 + $0x38] sm:$0xff]
      %v1874 = vpack.c.bf16 %v1865, %v1864
      %v1875 = vperm.slane %v559, 3
      %v1876 = vperm.slane %v560, 3
      %v1885 = vunpack.c.l.b16 %v1866
      %v1886 = vunpack.c.h.b16 %v1866
      %v1887 = vunpack.c.l.b16 %v1867
      %v1888 = vunpack.c.h.b16 %v1867
      %v1889 = vunpack.c.l.b16 %v1868
      %v1890 = vunpack.c.h.b16 %v1868
      %v1891 = vunpack.c.l.b16 %v1869
      %v1892 = vunpack.c.h.b16 %v1869
      %v1893 = vunpack.c.l.b16 %v1870
      %v1894 = vunpack.c.h.b16 %v1870
      %v1895 = vunpack.c.l.b16 %v1871
      %v1896 = vunpack.c.h.b16 %v1871
      %v1897 = vunpack.c.l.b16 %v1872
      %v1898 = vunpack.c.h.b16 %v1872
      %v1899 = vunpack.c.l.b16 %v1873
      %v1900 = vunpack.c.h.b16 %v1873
      %v1901 = vpack.c.b16 %v1887, %v1885
      %v1902 = vpack.c.b16 %v1888, %v1886
      %v1903 = vpack.c.b16 %v1891, %v1889
      %v1904 = vpack.c.b16 %v1892, %v1890
      %v1905 = vpack.c.b16 %v1895, %v1893
      %v1906 = vpack.c.b16 %v1896, %v1894
      %v1907 = vpack.c.b16 %v1899, %v1897
      %v1908 = vpack.c.b16 %v1900, %v1898
      %v1918 = vsel %vm562, %v1874, 0
      %1920 = vmatpush.bf16.msra.mxu0 0
      %1921 = vmatpush.bf16.msra.mxu0 0
      %1922 = vmatpush.bf16.msra.mxu0 0
      %1923 = vmatpush.bf16.msra.mxu0 0
      %1924 = vmatpush.bf16.msra.mxu0 %v1907
      %1925 = vmatpush.bf16.msra.mxu0 %v1905
      %1926 = vmatpush.bf16.msra.mxu0 %v1903
      %1927 = vmatpush.bf16.msra.mxu0 %v1901
      %1928 = vmatmul.bf16.gmra.mxu0 %v1918
      %v1929 = vpop.f32.mrf.mxu0
      %v1930 = vadd.f32 %v1875, %v1929
      %v1931 = vpop.f32.mrf.mxu0
      %v1932 = vadd.f32 %v1875, %v1931
      %1933 = vdwg.mxu0
      %1934 = vmatpush.bf16.msra.mxu0 0
      %1935 = vmatpush.bf16.msra.mxu0 0
      %1936 = vmatpush.bf16.msra.mxu0 0
      %1937 = vmatpush.bf16.msra.mxu0 0
      %1938 = vmatpush.bf16.msra.mxu0 %v1908
      %1939 = vmatpush.bf16.msra.mxu0 %v1906
      %1940 = vmatpush.bf16.msra.mxu0 %v1904
      %1941 = vmatpush.bf16.msra.mxu0 %v1902
      %1942 = vmatmul.bf16.gmra.mxu0 %v1918
      %v1943 = vpop.f32.mrf.mxu0
      %v1944 = vadd.f32 %v1876, %v1943
      %v1945 = vpop.f32.mrf.mxu0
      %v1946 = vadd.f32 %v1876, %v1945
      %1947 = vdwg.mxu0
      %v1948 = vxor.u32 %v1930, 2147483648
      %v1949 = vxor.u32 %v1944, 2147483648
      %v1950 = vxor.u32 %v1932, 2147483648
      %v1951 = vxor.u32 %v1946, 2147483648
      %v1952 = vmul.f32 %v1948, 1.442695
      %v1953 = vpow.pop %v1952
      %v1954 = vmul.f32 %v1949, 1.442695
      %v1955 = vpow.pop %v1954
      %v1956 = vmul.f32 %v1950, 1.442695
      %v1957 = vpow.pop %v1956
      %v1958 = vmul.f32 %v1951, 1.442695
      %v1959 = vpow.pop %v1958
      %v1960 = vadd.f32 %v1953, 1.0
      %v1961 = vadd.f32 %v1955, 1.0
      %v1962 = vadd.f32 %v1957, 1.0
      %v1963 = vadd.f32 %v1959, 1.0
      %v1964 = vrcp.pop %v1960
      %v1965 = vmul.f32 %v1960, %v1964
      %v1966 = vsub.f32 1.0, %v1965
      %v1967 = vmul.f32 %v1964, %v1966
      %v1968 = vadd.f32 %v1964, %v1967
      %vm1969 = vweird.f32 %v1960
      %vm1970 = vweird.f32 %v1964
      %vm1971 = vmor %vm1969, %vm1970
      %v1972 = vsel %vm1971, %v1964, %v1968
      %v1973 = vand.u32 2147483647, %v1960
      %vm1974 = vcmp.eq.f32.partialorder %v1973, 8.507059e+37
      %v1975 = vand.u32 %v1960, 2147483648
      %v1976 = vor.u32 1.1754944e-38, %v1975
      %v1977 = vsel %vm1974, %v1976, %v1972
      %v1978 = vmul.f32 1.0, %v1977
      %v1979 = vrcp.pop %v1961
      %v1980 = vmul.f32 %v1961, %v1979
      %v1981 = vsub.f32 1.0, %v1980
      %v1982 = vmul.f32 %v1979, %v1981
      %v1983 = vadd.f32 %v1979, %v1982
      %vm1984 = vweird.f32 %v1961
      %vm1985 = vweird.f32 %v1979
      %vm1986 = vmor %vm1984, %vm1985
      %v1987 = vsel %vm1986, %v1979, %v1983
      %v1988 = vand.u32 2147483647, %v1961
      %vm1989 = vcmp.eq.f32.partialorder %v1988, 8.507059e+37
      %v1990 = vand.u32 %v1961, 2147483648
      %v1991 = vor.u32 1.1754944e-38, %v1990
      %v1992 = vsel %vm1989, %v1991, %v1987
      %v1993 = vmul.f32 1.0, %v1992
      %v1994 = vrcp.pop %v1962
      %v1995 = vmul.f32 %v1962, %v1994
      %v1996 = vsub.f32 1.0, %v1995
      %v1997 = vmul.f32 %v1994, %v1996
      %v1998 = vadd.f32 %v1994, %v1997
      %vm1999 = vweird.f32 %v1962
      %vm2000 = vweird.f32 %v1994
      %vm2001 = vmor %vm1999, %vm2000
      %v2002 = vsel %vm2001, %v1994, %v1998
      %v2003 = vand.u32 2147483647, %v1962
      %vm2004 = vcmp.eq.f32.partialorder %v2003, 8.507059e+37
      %v2005 = vand.u32 %v1962, 2147483648
      %v2006 = vor.u32 1.1754944e-38, %v2005
      %v2007 = vsel %vm2004, %v2006, %v2002
      %v2008 = vmul.f32 1.0, %v2007
      %v2009 = vrcp.pop %v1963
      %v2010 = vmul.f32 %v1963, %v2009
      %v2011 = vsub.f32 1.0, %v2010
      %v2012 = vmul.f32 %v2009, %v2011
      %v2013 = vadd.f32 %v2009, %v2012
      %vm2014 = vweird.f32 %v1963
      %vm2015 = vweird.f32 %v2009
      %vm2016 = vmor %vm2014, %vm2015
      %v2017 = vsel %vm2016, %v2009, %v2013
      %v2018 = vand.u32 2147483647, %v1963
      %vm2019 = vcmp.eq.f32.partialorder %v2018, 8.507059e+37
      %v2020 = vand.u32 %v1963, 2147483648
      %v2021 = vor.u32 1.1754944e-38, %v2020
      %v2022 = vsel %vm2019, %v2021, %v2017
      %v2023 = vmul.f32 1.0, %v2022
      %v2024 = vmul.f32 %v1930, %v1978
      %v2025 = vmul.f32 %v1944, %v1993
      %v2026 = vmul.f32 %v1932, %v2008
      %v2027 = vmul.f32 %v1946, %v2023
      %v2028 = vld [vmem:[%s12] sm:$0xf]
      %v2029 = vld [vmem:[%s12 + $0x4] sm:$0xf]
      %v2030 = vld [vmem:[%s12 + $0x8] sm:$0xf]
      %v2031 = vld [vmem:[%s12 + $0xc] sm:$0xf]
      %v2032 = vld [vmem:[%s12 + $0x10] sm:$0xf]
      %v2033 = vld [vmem:[%s12 + $0x14] sm:$0xf]
      %v2034 = vld [vmem:[%s12 + $0x18] sm:$0xf]
      %v2035 = vld [vmem:[%s12 + $0x1c] sm:$0xf]
      %v2036 = vld [vmem:[%s12 + $0x20] sm:$0xf]
      %v2037 = vld [vmem:[%s12 + $0x24] sm:$0xf]
      %v2038 = vld [vmem:[%s12 + $0x28] sm:$0xf]
      %v2039 = vld [vmem:[%s12 + $0x2c] sm:$0xf]
      %v2040 = vld [vmem:[%s12 + $0x30] sm:$0xf]
      %v2041 = vld [vmem:[%s12 + $0x34] sm:$0xf]
      %v2042 = vld [vmem:[%s12 + $0x38] sm:$0xf]
      %v2043 = vld [vmem:[%s12 + $0x3c] sm:$0xf]
      %v2044 = vld [vmem:[%s12 + $0x40] sm:$0xf]
      %v2045 = vld [vmem:[%s12 + $0x44] sm:$0xf]
      %v2046 = vld [vmem:[%s12 + $0x48] sm:$0xf]
      %v2047 = vld [vmem:[%s12 + $0x4c] sm:$0xf]
      %v2048 = vld [vmem:[%s12 + $0x50] sm:$0xf]
      %v2049 = vld [vmem:[%s12 + $0x54] sm:$0xf]
      %v2050 = vld [vmem:[%s12 + $0x58] sm:$0xf]
      %v2051 = vld [vmem:[%s12 + $0x5c] sm:$0xf]
      %v2052 = vld [vmem:[%s12 + $0x60] sm:$0xf]
      %v2053 = vld [vmem:[%s12 + $0x64] sm:$0xf]
      %v2054 = vld [vmem:[%s12 + $0x68] sm:$0xf]
      %v2055 = vld [vmem:[%s12 + $0x6c] sm:$0xf]
      %v2056 = vld [vmem:[%s12 + $0x70] sm:$0xf]
      %v2057 = vld [vmem:[%s12 + $0x74] sm:$0xf]
      %v2058 = vld [vmem:[%s12 + $0x78] sm:$0xf]
      %v2059 = vld [vmem:[%s12 + $0x7c] sm:$0xf]
      %v2060 = vpack.c.bf16 %v2026, %v2024
      %v2061 = vpack.c.bf16 %v2027, %v2025
      %v2062 = vperm.slane %v559, 4
      %v2095 = vunpack.c.l.b16 %v2028
      %v2096 = vunpack.c.l.b16 %v2029
      %v2097 = vunpack.c.l.b16 %v2030
      %v2098 = vunpack.c.l.b16 %v2031
      %v2099 = vunpack.c.l.b16 %v2032
      %v2100 = vunpack.c.l.b16 %v2033
      %v2101 = vunpack.c.l.b16 %v2034
      %v2102 = vunpack.c.l.b16 %v2035
      %v2103 = vunpack.c.l.b16 %v2036
      %v2104 = vunpack.c.l.b16 %v2037
      %v2105 = vunpack.c.l.b16 %v2038
      %v2106 = vunpack.c.l.b16 %v2039
      %v2107 = vunpack.c.l.b16 %v2040
      %v2108 = vunpack.c.l.b16 %v2041
      %v2109 = vunpack.c.l.b16 %v2042
      %v2110 = vunpack.c.l.b16 %v2043
      %v2111 = vunpack.c.l.b16 %v2044
      %v2112 = vunpack.c.l.b16 %v2045
      %v2113 = vunpack.c.l.b16 %v2046
      %v2114 = vunpack.c.l.b16 %v2047
      %v2115 = vunpack.c.l.b16 %v2048
      %v2116 = vunpack.c.l.b16 %v2049
      %v2117 = vunpack.c.l.b16 %v2050
      %v2118 = vunpack.c.l.b16 %v2051
      %v2119 = vunpack.c.l.b16 %v2052
      %v2120 = vunpack.c.l.b16 %v2053
      %v2121 = vunpack.c.l.b16 %v2054
      %v2122 = vunpack.c.l.b16 %v2055
      %v2123 = vunpack.c.l.b16 %v2056
      %v2124 = vunpack.c.l.b16 %v2057
      %v2125 = vunpack.c.l.b16 %v2058
      %v2126 = vunpack.c.l.b16 %v2059
      %v2127 = vpack.c.b16 %v2096, %v2095
      %v2128 = vpack.c.b16 %v2098, %v2097
      %v2129 = vpack.c.b16 %v2100, %v2099
      %v2130 = vpack.c.b16 %v2102, %v2101
      %v2131 = vpack.c.b16 %v2104, %v2103
      %v2132 = vpack.c.b16 %v2106, %v2105
      %v2133 = vpack.c.b16 %v2108, %v2107
      %v2134 = vpack.c.b16 %v2110, %v2109
      %v2135 = vpack.c.b16 %v2112, %v2111
      %v2136 = vpack.c.b16 %v2114, %v2113
      %v2137 = vpack.c.b16 %v2116, %v2115
      %v2138 = vpack.c.b16 %v2118, %v2117
      %v2139 = vpack.c.b16 %v2120, %v2119
      %v2140 = vpack.c.b16 %v2122, %v2121
      %v2141 = vpack.c.b16 %v2124, %v2123
      %v2142 = vpack.c.b16 %v2126, %v2125
      %2159 = vmatpush.bf16.msra.mxu0 %v2134
      %2160 = vmatpush.bf16.msra.mxu0 %v2133
      %2161 = vmatpush.bf16.msra.mxu0 %v2132
      %2162 = vmatpush.bf16.msra.mxu0 %v2131
      %2163 = vmatpush.bf16.msra.mxu0 %v2130
      %2164 = vmatpush.bf16.msra.mxu0 %v2129
      %2165 = vmatpush.bf16.msra.mxu0 %v2128
      %2166 = vmatpush.bf16.msra.mxu0 %v2127
      %2167 = vmatmul.bf16.gmra.mxu0 %v2060
      %v2168 = vpop.f32.mrf.mxu0
      %v2169 = vadd.f32 %v2062, %v2168
      %v2170 = vpop.f32.mrf.mxu0
      %v2171 = vadd.f32 %v2062, %v2170
      %2172 = vdwg.mxu0
      %2173 = vmatpush.bf16.msra.mxu0 %v2142
      %2174 = vmatpush.bf16.msra.mxu0 %v2141
      %2175 = vmatpush.bf16.msra.mxu0 %v2140
      %2176 = vmatpush.bf16.msra.mxu0 %v2139
      %2177 = vmatpush.bf16.msra.mxu0 %v2138
      %2178 = vmatpush.bf16.msra.mxu0 %v2137
      %2179 = vmatpush.bf16.msra.mxu0 %v2136
      %2180 = vmatpush.bf16.msra.mxu0 %v2135
      %2181 = vmatmul.bf16.gmra.mxu0 %v2061
      %v2182 = vpop.f32.mrf.mxu0
      %v2183 = vadd.f32 %v2169, %v2182
      %v2184 = vpop.f32.mrf.mxu0
      %v2185 = vadd.f32 %v2171, %v2184
      %2186 = vdwg.mxu0
      %v2187 = vmul.f32 %v2183, 0.5
      %v2188 = vmul.f32 %v2185, 0.5
      %v2189 = vadd.f32 %v1814, %v2187
      %v2190 = vadd.f32 %v1815, %v2188
      %v2191 = vsel %vm562, %v2189, 0.0
      %2192 = vadd.xlane.f32.xlu0 %v2191
      %v2193 = vpop.xlane.xlu0 %2192
      %v2194 = vsel %vm566, %v2190, 0.0
      %2195 = vadd.xlane.f32.xlu0 %v2194
      %v2196 = vpop.xlane.xlu0 %2195
      %v2197 = vmul.f32 %v2193, %v576
      %v2198 = vmul.f32 %v2196, %v576
      %v2199 = vsub.f32 %v2189, %v2197
      %v2200 = vsub.f32 %v2190, %v2198
      %v2201 = vmul.f32 %v2199, %v2199
      %v2202 = vmul.f32 %v2200, %v2200
      %v2203 = vsel %vm562, %v2201, 0.0
      %2204 = vadd.xlane.f32.xlu0 %v2203
      %v2205 = vpop.xlane.xlu0 %2204
      %v2206 = vsel %vm566, %v2202, 0.0
      %2207 = vadd.xlane.f32.xlu0 %v2206
      %v2208 = vpop.xlane.xlu0 %2207
      %v2209 = vmul.f32 %v2205, %v576
      %v2210 = vmul.f32 %v2208, %v576
      %v2211 = vadd.f32 %v2209, 1e-05
      %v2212 = vadd.f32 %v2210, 1e-05
      %v2213 = vrsqrt.pop %v2211
      %v2214 = vmul.f32 %v2213, %v2211
      %v2215 = vmul.f32 %v2214, %v2213
      %v2216 = vmul.f32 0.5, %v2215
      %v2217 = vsub.f32 1.5, %v2216
      %v2218 = vmul.f32 %v2213, %v2217
      %vm2219 = vweird.f32 %v2211
      %vm2220 = vweird.f32 %v2213
      %vm2221 = vmor %vm2219, %vm2220
      %v2222 = vsel %vm2221, %v2213, %v2218
      %v2223 = vrsqrt.pop %v2212
      %v2224 = vmul.f32 %v2223, %v2212
      %v2225 = vmul.f32 %v2224, %v2223
      %v2226 = vmul.f32 0.5, %v2225
      %v2227 = vsub.f32 1.5, %v2226
      %v2228 = vmul.f32 %v2223, %v2227
      %vm2229 = vweird.f32 %v2212
      %vm2230 = vweird.f32 %v2223
      %vm2231 = vmor %vm2229, %vm2230
      %v2232 = vsel %vm2231, %v2223, %v2228
      %v2233 = vmul.f32 %v2199, %v2222
      %v2234 = vmul.f32 %v2200, %v2232
      %v2235 = vperm.slane %v559, 5
      %v2236 = vmul.f32 %v2233, %v2235
      %v2237 = vmul.f32 %v2234, %v2235
      %v2238 = vperm.slane %v559, 6
      %v2239 = vadd.f32 %v2236, %v2238
      %v2240 = vadd.f32 %v2237, %v2238
      %v2241 = vmul.f32 %v2239, %v460
      %v2242 = vmul.f32 %v2240, %v461
      %s2243 = scalar_lea.vmem %s13, 64
      %v2244 = vld [vmem:[%s2243] sm:$0xff]
      %v2245 = vld [vmem:[%s2243 + $0x8] sm:$0xff]
      %v2246 = vld [vmem:[%s2243 + $0x10] sm:$0xff]
      %v2247 = vld [vmem:[%s2243 + $0x20] sm:$0xff]
      %v2248 = vld [vmem:[%s2243 + $0x28] sm:$0xff]
      %v2249 = vld [vmem:[%s2243 + $0x30] sm:$0xf]
      %v2250 = vsel %vm562, %v2241, 0.0
      %2251 = vadd.xlane.f32.xlu0 %v2250
      %v2252 = vpop.xlane.xlu0 %2251
      %v2253 = vsel %vm566, %v2242, 0.0
      %2254 = vadd.xlane.f32.xlu0 %v2253
      %v2255 = vpop.xlane.xlu0 %2254
      %v2256 = vmul.f32 %v2252, %v576
      %v2257 = vmul.f32 %v2255, %v576
      %v2258 = vsub.f32 %v2241, %v2256
      %v2259 = vsub.f32 %v2242, %v2257
      %v2260 = vmul.f32 %v2258, %v2258
      %v2261 = vmul.f32 %v2259, %v2259
      %v2262 = vsel %vm562, %v2260, 0.0
      %2263 = vadd.xlane.f32.xlu0 %v2262
      %v2264 = vpop.xlane.xlu0 %2263
      %v2265 = vsel %vm566, %v2261, 0.0
      %2266 = vadd.xlane.f32.xlu0 %v2265
      %v2267 = vpop.xlane.xlu0 %2266
      %v2268 = vmul.f32 %v2264, %v576
      %v2269 = vmul.f32 %v2267, %v576
      %v2270 = vadd.f32 %v2268, 1e-05
      %v2271 = vadd.f32 %v2269, 1e-05
      %v2272 = vrsqrt.pop %v2270
      %v2273 = vmul.f32 %v2272, %v2270
      %v2274 = vmul.f32 %v2273, %v2272
      %v2275 = vmul.f32 0.5, %v2274
      %v2276 = vsub.f32 1.5, %v2275
      %v2277 = vmul.f32 %v2272, %v2276
      %vm2278 = vweird.f32 %v2270
      %vm2279 = vweird.f32 %v2272
      %vm2280 = vmor %vm2278, %vm2279
      %v2281 = vsel %vm2280, %v2272, %v2277
      %v2282 = vrsqrt.pop %v2271
      %v2283 = vmul.f32 %v2282, %v2271
      %v2284 = vmul.f32 %v2283, %v2282
      %v2285 = vmul.f32 0.5, %v2284
      %v2286 = vsub.f32 1.5, %v2285
      %v2287 = vmul.f32 %v2282, %v2286
      %vm2288 = vweird.f32 %v2271
      %vm2289 = vweird.f32 %v2282
      %vm2290 = vmor %vm2288, %vm2289
      %v2291 = vsel %vm2290, %v2282, %v2287
      %v2292 = vmul.f32 %v2258, %v2281
      %v2293 = vmul.f32 %v2259, %v2291
      %v2294 = vperm.slane %v2244, 0
      %v2295 = vmul.f32 %v2292, %v2294
      %v2296 = vmul.f32 %v2293, %v2294
      %v2297 = vperm.slane %v2244, 1
      %v2298 = vadd.f32 %v2295, %v2297
      %v2299 = vadd.f32 %v2296, %v2297
      %s2300 = scalar_lea.vmem %s5, 64
      %v2301 = vld [vmem:[%s2300] sm:$0xff]
      %v2302 = vld [vmem:[%s2300 + $0x8] sm:$0xff]
      %v2303 = vld [vmem:[%s2300 + $0x10] sm:$0xff]
      %v2304 = vld [vmem:[%s2300 + $0x18] sm:$0xff]
      %v2305 = vld [vmem:[%s2300 + $0x20] sm:$0xff]
      %v2306 = vld [vmem:[%s2300 + $0x28] sm:$0xff]
      %v2307 = vld [vmem:[%s2300 + $0x30] sm:$0xff]
      %v2308 = vld [vmem:[%s2300 + $0x38] sm:$0xff]
      %v2309 = vpack.c.bf16 %v2299, %v2298
      %v2310 = vperm.slane %v2244, 2
      %v2311 = vperm.slane %v2245, 2
      %v2320 = vunpack.c.l.b16 %v2301
      %v2321 = vunpack.c.h.b16 %v2301
      %v2322 = vunpack.c.l.b16 %v2302
      %v2323 = vunpack.c.h.b16 %v2302
      %v2324 = vunpack.c.l.b16 %v2303
      %v2325 = vunpack.c.h.b16 %v2303
      %v2326 = vunpack.c.l.b16 %v2304
      %v2327 = vunpack.c.h.b16 %v2304
      %v2328 = vunpack.c.l.b16 %v2305
      %v2329 = vunpack.c.h.b16 %v2305
      %v2330 = vunpack.c.l.b16 %v2306
      %v2331 = vunpack.c.h.b16 %v2306
      %v2332 = vunpack.c.l.b16 %v2307
      %v2333 = vunpack.c.h.b16 %v2307
      %v2334 = vunpack.c.l.b16 %v2308
      %v2335 = vunpack.c.h.b16 %v2308
      %v2336 = vpack.c.b16 %v2322, %v2320
      %v2337 = vpack.c.b16 %v2323, %v2321
      %v2338 = vpack.c.b16 %v2326, %v2324
      %v2339 = vpack.c.b16 %v2327, %v2325
      %v2340 = vpack.c.b16 %v2330, %v2328
      %v2341 = vpack.c.b16 %v2331, %v2329
      %v2342 = vpack.c.b16 %v2334, %v2332
      %v2343 = vpack.c.b16 %v2335, %v2333
      %v2353 = vsel %vm562, %v2309, 0
      %2355 = vmatpush.bf16.msra.mxu0 0
      %2356 = vmatpush.bf16.msra.mxu0 0
      %2357 = vmatpush.bf16.msra.mxu0 0
      %2358 = vmatpush.bf16.msra.mxu0 0
      %2359 = vmatpush.bf16.msra.mxu0 %v2342
      %2360 = vmatpush.bf16.msra.mxu0 %v2340
      %2361 = vmatpush.bf16.msra.mxu0 %v2338
      %2362 = vmatpush.bf16.msra.mxu0 %v2336
      %2363 = vmatmul.bf16.gmra.mxu0 %v2353
      %v2364 = vpop.f32.mrf.mxu0
      %v2365 = vadd.f32 %v2310, %v2364
      %v2366 = vpop.f32.mrf.mxu0
      %v2367 = vadd.f32 %v2310, %v2366
      %2368 = vdwg.mxu0
      %2369 = vmatpush.bf16.msra.mxu0 0
      %2370 = vmatpush.bf16.msra.mxu0 0
      %2371 = vmatpush.bf16.msra.mxu0 0
      %2372 = vmatpush.bf16.msra.mxu0 0
      %2373 = vmatpush.bf16.msra.mxu0 %v2343
      %2374 = vmatpush.bf16.msra.mxu0 %v2341
      %2375 = vmatpush.bf16.msra.mxu0 %v2339
      %2376 = vmatpush.bf16.msra.mxu0 %v2337
      %2377 = vmatmul.bf16.gmra.mxu0 %v2353
      %v2378 = vpop.f32.mrf.mxu0
      %v2379 = vadd.f32 %v2311, %v2378
      %v2380 = vpop.f32.mrf.mxu0
      %v2381 = vadd.f32 %v2311, %v2380
      %2382 = vdwg.mxu0
      %v2383 = vxor.u32 %v2365, 2147483648
      %v2384 = vxor.u32 %v2379, 2147483648
      %v2385 = vxor.u32 %v2367, 2147483648
      %v2386 = vxor.u32 %v2381, 2147483648
      %v2387 = vmul.f32 %v2383, 1.442695
      %v2388 = vpow.pop %v2387
      %v2389 = vmul.f32 %v2384, 1.442695
      %v2390 = vpow.pop %v2389
      %v2391 = vmul.f32 %v2385, 1.442695
      %v2392 = vpow.pop %v2391
      %v2393 = vmul.f32 %v2386, 1.442695
      %v2394 = vpow.pop %v2393
      %v2395 = vadd.f32 %v2388, 1.0
      %v2396 = vadd.f32 %v2390, 1.0
      %v2397 = vadd.f32 %v2392, 1.0
      %v2398 = vadd.f32 %v2394, 1.0
      %v2399 = vrcp.pop %v2395
      %v2400 = vmul.f32 %v2395, %v2399
      %v2401 = vsub.f32 1.0, %v2400
      %v2402 = vmul.f32 %v2399, %v2401
      %v2403 = vadd.f32 %v2399, %v2402
      %vm2404 = vweird.f32 %v2395
      %vm2405 = vweird.f32 %v2399
      %vm2406 = vmor %vm2404, %vm2405
      %v2407 = vsel %vm2406, %v2399, %v2403
      %v2408 = vand.u32 2147483647, %v2395
      %vm2409 = vcmp.eq.f32.partialorder %v2408, 8.507059e+37
      %v2410 = vand.u32 %v2395, 2147483648
      %v2411 = vor.u32 1.1754944e-38, %v2410
      %v2412 = vsel %vm2409, %v2411, %v2407
      %v2413 = vmul.f32 1.0, %v2412
      %v2414 = vrcp.pop %v2396
      %v2415 = vmul.f32 %v2396, %v2414
      %v2416 = vsub.f32 1.0, %v2415
      %v2417 = vmul.f32 %v2414, %v2416
      %v2418 = vadd.f32 %v2414, %v2417
      %vm2419 = vweird.f32 %v2396
      %vm2420 = vweird.f32 %v2414
      %vm2421 = vmor %vm2419, %vm2420
      %v2422 = vsel %vm2421, %v2414, %v2418
      %v2423 = vand.u32 2147483647, %v2396
      %vm2424 = vcmp.eq.f32.partialorder %v2423, 8.507059e+37
      %v2425 = vand.u32 %v2396, 2147483648
      %v2426 = vor.u32 1.1754944e-38, %v2425
      %v2427 = vsel %vm2424, %v2426, %v2422
      %v2428 = vmul.f32 1.0, %v2427
      %v2429 = vrcp.pop %v2397
      %v2430 = vmul.f32 %v2397, %v2429
      %v2431 = vsub.f32 1.0, %v2430
      %v2432 = vmul.f32 %v2429, %v2431
      %v2433 = vadd.f32 %v2429, %v2432
      %vm2434 = vweird.f32 %v2397
      %vm2435 = vweird.f32 %v2429
      %vm2436 = vmor %vm2434, %vm2435
      %v2437 = vsel %vm2436, %v2429, %v2433
      %v2438 = vand.u32 2147483647, %v2397
      %vm2439 = vcmp.eq.f32.partialorder %v2438, 8.507059e+37
      %v2440 = vand.u32 %v2397, 2147483648
      %v2441 = vor.u32 1.1754944e-38, %v2440
      %v2442 = vsel %vm2439, %v2441, %v2437
      %v2443 = vmul.f32 1.0, %v2442
      %v2444 = vrcp.pop %v2398
      %v2445 = vmul.f32 %v2398, %v2444
      %v2446 = vsub.f32 1.0, %v2445
      %v2447 = vmul.f32 %v2444, %v2446
      %v2448 = vadd.f32 %v2444, %v2447
      %vm2449 = vweird.f32 %v2398
      %vm2450 = vweird.f32 %v2444
      %vm2451 = vmor %vm2449, %vm2450
      %v2452 = vsel %vm2451, %v2444, %v2448
      %v2453 = vand.u32 2147483647, %v2398
      %vm2454 = vcmp.eq.f32.partialorder %v2453, 8.507059e+37
      %v2455 = vand.u32 %v2398, 2147483648
      %v2456 = vor.u32 1.1754944e-38, %v2455
      %v2457 = vsel %vm2454, %v2456, %v2452
      %v2458 = vmul.f32 1.0, %v2457
      %v2459 = vmul.f32 %v2365, %v2413
      %v2460 = vmul.f32 %v2379, %v2428
      %v2461 = vmul.f32 %v2367, %v2443
      %v2462 = vmul.f32 %v2381, %v2458
      %s2463 = scalar_lea.vmem %s6, 128
      %v2464 = vld [vmem:[%s2463] sm:$0xf]
      %v2465 = vld [vmem:[%s2463 + $0x4] sm:$0xf]
      %v2466 = vld [vmem:[%s2463 + $0x8] sm:$0xf]
      %v2467 = vld [vmem:[%s2463 + $0xc] sm:$0xf]
      %v2468 = vld [vmem:[%s2463 + $0x10] sm:$0xf]
      %v2469 = vld [vmem:[%s2463 + $0x14] sm:$0xf]
      %v2470 = vld [vmem:[%s2463 + $0x18] sm:$0xf]
      %v2471 = vld [vmem:[%s2463 + $0x1c] sm:$0xf]
      %v2472 = vld [vmem:[%s2463 + $0x20] sm:$0xf]
      %v2473 = vld [vmem:[%s2463 + $0x24] sm:$0xf]
      %v2474 = vld [vmem:[%s2463 + $0x28] sm:$0xf]
      %v2475 = vld [vmem:[%s2463 + $0x2c] sm:$0xf]
      %v2476 = vld [vmem:[%s2463 + $0x30] sm:$0xf]
      %v2477 = vld [vmem:[%s2463 + $0x34] sm:$0xf]
      %v2478 = vld [vmem:[%s2463 + $0x38] sm:$0xf]
      %v2479 = vld [vmem:[%s2463 + $0x3c] sm:$0xf]
      %v2480 = vld [vmem:[%s2463 + $0x40] sm:$0xf]
      %v2481 = vld [vmem:[%s2463 + $0x44] sm:$0xf]
      %v2482 = vld [vmem:[%s2463 + $0x48] sm:$0xf]
      %v2483 = vld [vmem:[%s2463 + $0x4c] sm:$0xf]
      %v2484 = vld [vmem:[%s2463 + $0x50] sm:$0xf]
      %v2485 = vld [vmem:[%s2463 + $0x54] sm:$0xf]
      %v2486 = vld [vmem:[%s2463 + $0x58] sm:$0xf]
      %v2487 = vld [vmem:[%s2463 + $0x5c] sm:$0xf]
      %v2488 = vld [vmem:[%s2463 + $0x60] sm:$0xf]
      %v2489 = vld [vmem:[%s2463 + $0x64] sm:$0xf]
      %v2490 = vld [vmem:[%s2463 + $0x68] sm:$0xf]
      %v2491 = vld [vmem:[%s2463 + $0x6c] sm:$0xf]
      %v2492 = vld [vmem:[%s2463 + $0x70] sm:$0xf]
      %v2493 = vld [vmem:[%s2463 + $0x74] sm:$0xf]
      %v2494 = vld [vmem:[%s2463 + $0x78] sm:$0xf]
      %v2495 = vld [vmem:[%s2463 + $0x7c] sm:$0xf]
      %v2496 = vpack.c.bf16 %v2461, %v2459
      %v2497 = vpack.c.bf16 %v2462, %v2460
      %v2498 = vperm.slane %v2244, 3
      %v2531 = vunpack.c.l.b16 %v2464
      %v2532 = vunpack.c.l.b16 %v2465
      %v2533 = vunpack.c.l.b16 %v2466
      %v2534 = vunpack.c.l.b16 %v2467
      %v2535 = vunpack.c.l.b16 %v2468
      %v2536 = vunpack.c.l.b16 %v2469
      %v2537 = vunpack.c.l.b16 %v2470
      %v2538 = vunpack.c.l.b16 %v2471
      %v2539 = vunpack.c.l.b16 %v2472
      %v2540 = vunpack.c.l.b16 %v2473
      %v2541 = vunpack.c.l.b16 %v2474
      %v2542 = vunpack.c.l.b16 %v2475
      %v2543 = vunpack.c.l.b16 %v2476
      %v2544 = vunpack.c.l.b16 %v2477
      %v2545 = vunpack.c.l.b16 %v2478
      %v2546 = vunpack.c.l.b16 %v2479
      %v2547 = vunpack.c.l.b16 %v2480
      %v2548 = vunpack.c.l.b16 %v2481
      %v2549 = vunpack.c.l.b16 %v2482
      %v2550 = vunpack.c.l.b16 %v2483
      %v2551 = vunpack.c.l.b16 %v2484
      %v2552 = vunpack.c.l.b16 %v2485
      %v2553 = vunpack.c.l.b16 %v2486
      %v2554 = vunpack.c.l.b16 %v2487
      %v2555 = vunpack.c.l.b16 %v2488
      %v2556 = vunpack.c.l.b16 %v2489
      %v2557 = vunpack.c.l.b16 %v2490
      %v2558 = vunpack.c.l.b16 %v2491
      %v2559 = vunpack.c.l.b16 %v2492
      %v2560 = vunpack.c.l.b16 %v2493
      %v2561 = vunpack.c.l.b16 %v2494
      %v2562 = vunpack.c.l.b16 %v2495
      %v2563 = vpack.c.b16 %v2532, %v2531
      %v2564 = vpack.c.b16 %v2534, %v2533
      %v2565 = vpack.c.b16 %v2536, %v2535
      %v2566 = vpack.c.b16 %v2538, %v2537
      %v2567 = vpack.c.b16 %v2540, %v2539
      %v2568 = vpack.c.b16 %v2542, %v2541
      %v2569 = vpack.c.b16 %v2544, %v2543
      %v2570 = vpack.c.b16 %v2546, %v2545
      %v2571 = vpack.c.b16 %v2548, %v2547
      %v2572 = vpack.c.b16 %v2550, %v2549
      %v2573 = vpack.c.b16 %v2552, %v2551
      %v2574 = vpack.c.b16 %v2554, %v2553
      %v2575 = vpack.c.b16 %v2556, %v2555
      %v2576 = vpack.c.b16 %v2558, %v2557
      %v2577 = vpack.c.b16 %v2560, %v2559
      %v2578 = vpack.c.b16 %v2562, %v2561
      %2595 = vmatpush.bf16.msra.mxu0 %v2570
      %2596 = vmatpush.bf16.msra.mxu0 %v2569
      %2597 = vmatpush.bf16.msra.mxu0 %v2568
      %2598 = vmatpush.bf16.msra.mxu0 %v2567
      %2599 = vmatpush.bf16.msra.mxu0 %v2566
      %2600 = vmatpush.bf16.msra.mxu0 %v2565
      %2601 = vmatpush.bf16.msra.mxu0 %v2564
      %2602 = vmatpush.bf16.msra.mxu0 %v2563
      %2603 = vmatmul.bf16.gmra.mxu0 %v2496
      %v2604 = vpop.f32.mrf.mxu0
      %v2605 = vadd.f32 %v2498, %v2604
      %v2606 = vpop.f32.mrf.mxu0
      %v2607 = vadd.f32 %v2498, %v2606
      %2608 = vdwg.mxu0
      %2609 = vmatpush.bf16.msra.mxu0 %v2578
      %2610 = vmatpush.bf16.msra.mxu0 %v2577
      %2611 = vmatpush.bf16.msra.mxu0 %v2576
      %2612 = vmatpush.bf16.msra.mxu0 %v2575
      %2613 = vmatpush.bf16.msra.mxu0 %v2574
      %2614 = vmatpush.bf16.msra.mxu0 %v2573
      %2615 = vmatpush.bf16.msra.mxu0 %v2572
      %2616 = vmatpush.bf16.msra.mxu0 %v2571
      %2617 = vmatmul.bf16.gmra.mxu0 %v2497
      %v2618 = vpop.f32.mrf.mxu0
      %v2619 = vadd.f32 %v2605, %v2618
      %v2620 = vpop.f32.mrf.mxu0
      %v2621 = vadd.f32 %v2607, %v2620
      %2622 = vdwg.mxu0
      %v2623 = vmul.f32 %v2619, 0.5
      %v2624 = vmul.f32 %v2621, 0.5
      %v2625 = vadd.f32 %v2241, %v2623
      %v2626 = vadd.f32 %v2242, %v2624
      %v2627 = vsel %vm562, %v2625, 0.0
      %2628 = vadd.xlane.f32.xlu0 %v2627
      %v2629 = vpop.xlane.xlu0 %2628
      %v2630 = vsel %vm566, %v2626, 0.0
      %2631 = vadd.xlane.f32.xlu0 %v2630
      %v2632 = vpop.xlane.xlu0 %2631
      %v2633 = vmul.f32 %v2629, %v576
      %v2634 = vmul.f32 %v2632, %v576
      %v2635 = vsub.f32 %v2625, %v2633
      %v2636 = vsub.f32 %v2626, %v2634
      %v2637 = vmul.f32 %v2635, %v2635
      %v2638 = vmul.f32 %v2636, %v2636
      %v2639 = vsel %vm562, %v2637, 0.0
      %2640 = vadd.xlane.f32.xlu0 %v2639
      %v2641 = vpop.xlane.xlu0 %2640
      %v2642 = vsel %vm566, %v2638, 0.0
      %2643 = vadd.xlane.f32.xlu0 %v2642
      %v2644 = vpop.xlane.xlu0 %2643
      %v2645 = vmul.f32 %v2641, %v576
      %v2646 = vmul.f32 %v2644, %v576
      %v2647 = vadd.f32 %v2645, 1e-05
      %v2648 = vadd.f32 %v2646, 1e-05
      %v2649 = vrsqrt.pop %v2647
      %v2650 = vmul.f32 %v2649, %v2647
      %v2651 = vmul.f32 %v2650, %v2649
      %v2652 = vmul.f32 0.5, %v2651
      %v2653 = vsub.f32 1.5, %v2652
      %v2654 = vmul.f32 %v2649, %v2653
      %vm2655 = vweird.f32 %v2647
      %vm2656 = vweird.f32 %v2649
      %vm2657 = vmor %vm2655, %vm2656
      %v2658 = vsel %vm2657, %v2649, %v2654
      %v2659 = vrsqrt.pop %v2648
      %v2660 = vmul.f32 %v2659, %v2648
      %v2661 = vmul.f32 %v2660, %v2659
      %v2662 = vmul.f32 0.5, %v2661
      %v2663 = vsub.f32 1.5, %v2662
      %v2664 = vmul.f32 %v2659, %v2663
      %vm2665 = vweird.f32 %v2648
      %vm2666 = vweird.f32 %v2659
      %vm2667 = vmor %vm2665, %vm2666
      %v2668 = vsel %vm2667, %v2659, %v2664
      %v2669 = vmul.f32 %v2635, %v2658
      %v2670 = vmul.f32 %v2636, %v2668
      %v2671 = vperm.slane %v2244, 4
      %v2672 = vmul.f32 %v2669, %v2671
      %v2673 = vmul.f32 %v2670, %v2671
      %v2674 = vperm.slane %v2244, 5
      %v2675 = vadd.f32 %v2672, %v2674
      %v2676 = vadd.f32 %v2673, %v2674
      %s2677 = scalar_lea.vmem %s7, 64
      %v2678 = vld [vmem:[%s2677] sm:$0xff]
      %v2679 = vld [vmem:[%s2677 + $0x8] sm:$0xff]
      %v2680 = vld [vmem:[%s2677 + $0x10] sm:$0xff]
      %v2681 = vld [vmem:[%s2677 + $0x18] sm:$0xff]
      %v2682 = vld [vmem:[%s2677 + $0x20] sm:$0xff]
      %v2683 = vld [vmem:[%s2677 + $0x28] sm:$0xff]
      %v2684 = vld [vmem:[%s2677 + $0x30] sm:$0xff]
      %v2685 = vld [vmem:[%s2677 + $0x38] sm:$0xff]
      %v2686 = vpack.c.bf16 %v2676, %v2675
      %v2687 = vperm.slane %v2244, 6
      %v2688 = vperm.slane %v2245, 6
      %v2697 = vunpack.c.l.b16 %v2678
      %v2698 = vunpack.c.h.b16 %v2678
      %v2699 = vunpack.c.l.b16 %v2679
      %v2700 = vunpack.c.h.b16 %v2679
      %v2701 = vunpack.c.l.b16 %v2680
      %v2702 = vunpack.c.h.b16 %v2680
      %v2703 = vunpack.c.l.b16 %v2681
      %v2704 = vunpack.c.h.b16 %v2681
      %v2705 = vunpack.c.l.b16 %v2682
      %v2706 = vunpack.c.h.b16 %v2682
      %v2707 = vunpack.c.l.b16 %v2683
      %v2708 = vunpack.c.h.b16 %v2683
      %v2709 = vunpack.c.l.b16 %v2684
      %v2710 = vunpack.c.h.b16 %v2684
      %v2711 = vunpack.c.l.b16 %v2685
      %v2712 = vunpack.c.h.b16 %v2685
      %v2713 = vpack.c.b16 %v2699, %v2697
      %v2714 = vpack.c.b16 %v2700, %v2698
      %v2715 = vpack.c.b16 %v2703, %v2701
      %v2716 = vpack.c.b16 %v2704, %v2702
      %v2717 = vpack.c.b16 %v2707, %v2705
      %v2718 = vpack.c.b16 %v2708, %v2706
      %v2719 = vpack.c.b16 %v2711, %v2709
      %v2720 = vpack.c.b16 %v2712, %v2710
      %v2730 = vsel %vm562, %v2686, 0
      %2732 = vmatpush.bf16.msra.mxu0 0
      %2733 = vmatpush.bf16.msra.mxu0 0
      %2734 = vmatpush.bf16.msra.mxu0 0
      %2735 = vmatpush.bf16.msra.mxu0 0
      %2736 = vmatpush.bf16.msra.mxu0 %v2719
      %2737 = vmatpush.bf16.msra.mxu0 %v2717
      %2738 = vmatpush.bf16.msra.mxu0 %v2715
      %2739 = vmatpush.bf16.msra.mxu0 %v2713
      %2740 = vmatmul.bf16.gmra.mxu0 %v2730
      %v2741 = vpop.f32.mrf.mxu0
      %v2742 = vadd.f32 %v2687, %v2741
      %v2743 = vpop.f32.mrf.mxu0
      %v2744 = vadd.f32 %v2687, %v2743
      %2745 = vdwg.mxu0
      %2746 = vmatpush.bf16.msra.mxu0 0
      %2747 = vmatpush.bf16.msra.mxu0 0
      %2748 = vmatpush.bf16.msra.mxu0 0
      %2749 = vmatpush.bf16.msra.mxu0 0
      %2750 = vmatpush.bf16.msra.mxu0 %v2720
      %2751 = vmatpush.bf16.msra.mxu0 %v2718
      %2752 = vmatpush.bf16.msra.mxu0 %v2716
      %2753 = vmatpush.bf16.msra.mxu0 %v2714
      %2754 = vmatmul.bf16.gmra.mxu0 %v2730
      %v2755 = vpop.f32.mrf.mxu0
      %v2756 = vadd.f32 %v2688, %v2755
      %v2757 = vpop.f32.mrf.mxu0
      %v2758 = vadd.f32 %v2688, %v2757
      %2759 = vdwg.mxu0
      %v2760 = vpack.c.bf16 %v2744, %v2742
      %v2761 = vpack.c.bf16 %v2758, %v2756
      %2763 = vrot.lane.b32.xlu0 %v2760, 64
      %v2764 = vpop.permute.xlu0 %2763
      %v2766 = vsel %vm1083, %v2760, 0
      %v2769 = vsel %vm1083, %v2764, 0
      %2771 = vmatpush.bf16.xpose.msra.mxu0 0
      %2772 = vmatpush.bf16.xpose.msra.mxu0 0
      %2773 = vmatpush.bf16.xpose.msra.mxu0 0
      %2774 = vmatpush.bf16.xpose.msra.mxu0 0
      %2775 = vmatpush.bf16.xpose.msra.mxu0 0
      %2776 = vmatpush.bf16.xpose.msra.mxu0 0
      %2777 = vmatpush.bf16.xpose.msra.mxu0 0
      %2778 = vmatpush.bf16.xpose.msra.mxu0 %v2769
      %2779 = vmatmul.bf16.gmra.mxu0 %v2766
      %v2780 = vpop.f32.mrf.mxu0
      %v2781 = vadd.f32 0.0, %v2780
      %v2782 = vpop.f32.mrf.mxu0
      %v2783 = vadd.f32 0.0, %v2782
      %2784 = vdwg.mxu0
      %v2785 = vmul.f32 %v2781, 0.25
      %v2786 = vmul.f32 %v2783, 0.25
      %v2787 = vadd.f32 %v2785, %v468
      %v2788 = vadd.f32 %v2786, %v468
      %v2789 = vsel %vm1108, %v2787, -inf
      %2790 = vmax.xlane.f32.xlu0 %v2789
      %v2791 = vpop.xlane.xlu0 %2790
      %v2792 = vsel %vm1112, %v2788, -inf
      %2793 = vmax.xlane.f32.xlu0 %v2792
      %v2794 = vpop.xlane.xlu0 %2793
      %v2795 = vsub.f32 %v2787, %v2791
      %v2796 = vsub.f32 %v2788, %v2794
      %v2797 = vmul.f32 %v2795, 1.442695
      %v2798 = vpow.pop %v2797
      %v2799 = vmul.f32 %v2796, 1.442695
      %v2800 = vpow.pop %v2799
      %v2801 = vsel %vm1108, %v2798, 0.0
      %2802 = vadd.xlane.f32.xlu0 %v2801
      %v2803 = vpop.xlane.xlu0 %2802
      %v2804 = vsel %vm1112, %v2800, 0.0
      %2805 = vadd.xlane.f32.xlu0 %v2804
      %v2806 = vpop.xlane.xlu0 %2805
      %v2807 = vrcp.pop %v2803
      %v2808 = vrcp.pop %v2806
      %v2809 = vmul.f32 %v2798, %v2807
      %v2810 = vmul.f32 %v2800, %v2808
      %v2811 = vpack.c.bf16 %v2810, %v2809
      %v2813 = vsel %vm1108, %v2811, 0
      %v2816 = vand.u32 %v2761, %v1139
      %2818 = vmatpush.bf16.msra.mxu0 0
      %2819 = vmatpush.bf16.msra.mxu0 0
      %2820 = vmatpush.bf16.msra.mxu0 0
      %2821 = vmatpush.bf16.msra.mxu0 0
      %2822 = vmatpush.bf16.msra.mxu0 0
      %2823 = vmatpush.bf16.msra.mxu0 0
      %2824 = vmatpush.bf16.msra.mxu0 0
      %2825 = vmatpush.bf16.msra.mxu0 %v2816
      %2826 = vmatmul.bf16.gmra.mxu0 %v2813
      %v2827 = vpop.f32.mrf.mxu0
      %v2828 = vadd.f32 0.0, %v2827
      %v2829 = vpop.f32.mrf.mxu0
      %v2830 = vadd.f32 0.0, %v2829
      %2831 = vdwg.mxu0
      %2832 = vrot.lane.b32.xlu0 %v2760, 112
      %v2833 = vpop.permute.xlu0 %2832
      %2834 = vrot.lane.b32.xlu0 %v2760, 48
      %v2835 = vpop.permute.xlu0 %2834
      %v2837 = vsel %vm1083, %v2833, 0
      %v2840 = vsel %vm1083, %v2835, 0
      %2842 = vmatpush.bf16.xpose.msra.mxu0 0
      %2843 = vmatpush.bf16.xpose.msra.mxu0 0
      %2844 = vmatpush.bf16.xpose.msra.mxu0 0
      %2845 = vmatpush.bf16.xpose.msra.mxu0 0
      %2846 = vmatpush.bf16.xpose.msra.mxu0 0
      %2847 = vmatpush.bf16.xpose.msra.mxu0 0
      %2848 = vmatpush.bf16.xpose.msra.mxu0 0
      %2849 = vmatpush.bf16.xpose.msra.mxu0 %v2840
      %2850 = vmatmul.bf16.gmra.mxu0 %v2837
      %v2851 = vpop.f32.mrf.mxu0
      %v2852 = vadd.f32 0.0, %v2851
      %v2853 = vpop.f32.mrf.mxu0
      %v2854 = vadd.f32 0.0, %v2853
      %2855 = vdwg.mxu0
      %v2856 = vmul.f32 %v2852, 0.25
      %v2857 = vmul.f32 %v2854, 0.25
      %v2858 = vadd.f32 %v2856, %v468
      %v2859 = vadd.f32 %v2857, %v468
      %v2860 = vsel %vm1108, %v2858, -inf
      %2861 = vmax.xlane.f32.xlu0 %v2860
      %v2862 = vpop.xlane.xlu0 %2861
      %v2863 = vsel %vm1112, %v2859, -inf
      %2864 = vmax.xlane.f32.xlu0 %v2863
      %v2865 = vpop.xlane.xlu0 %2864
      %v2866 = vsub.f32 %v2858, %v2862
      %v2867 = vsub.f32 %v2859, %v2865
      %v2868 = vmul.f32 %v2866, 1.442695
      %v2869 = vpow.pop %v2868
      %v2870 = vmul.f32 %v2867, 1.442695
      %v2871 = vpow.pop %v2870
      %v2872 = vsel %vm1108, %v2869, 0.0
      %2873 = vadd.xlane.f32.xlu0 %v2872
      %v2874 = vpop.xlane.xlu0 %2873
      %v2875 = vsel %vm1112, %v2871, 0.0
      %2876 = vadd.xlane.f32.xlu0 %v2875
      %v2877 = vpop.xlane.xlu0 %2876
      %v2878 = vrcp.pop %v2874
      %v2879 = vrcp.pop %v2877
      %v2880 = vmul.f32 %v2869, %v2878
      %v2881 = vmul.f32 %v2871, %v2879
      %v2882 = vpack.c.bf16 %v2881, %v2880
      %2884 = vrot.lane.b32.xlu0 %v2761, 112
      %v2885 = vpop.permute.xlu0 %2884
      %v2887 = vsel %vm1108, %v2882, 0
      %v2890 = vand.u32 %v2885, %v1139
      %2892 = vmatpush.bf16.msra.mxu0 0
      %2893 = vmatpush.bf16.msra.mxu0 0
      %2894 = vmatpush.bf16.msra.mxu0 0
      %2895 = vmatpush.bf16.msra.mxu0 0
      %2896 = vmatpush.bf16.msra.mxu0 0
      %2897 = vmatpush.bf16.msra.mxu0 0
      %2898 = vmatpush.bf16.msra.mxu0 0
      %2899 = vmatpush.bf16.msra.mxu0 %v2890
      %2900 = vmatmul.bf16.gmra.mxu0 %v2887
      %v2901 = vpop.f32.mrf.mxu0
      %v2902 = vadd.f32 0.0, %v2901
      %v2903 = vpop.f32.mrf.mxu0
      %v2904 = vadd.f32 0.0, %v2903
      %2905 = vdwg.mxu0
      %2906 = vrot.lane.b32.xlu0 %v2760, 96
      %v2907 = vpop.permute.xlu0 %2906
      %2908 = vrot.lane.b32.xlu0 %v2760, 32
      %v2909 = vpop.permute.xlu0 %2908
      %v2911 = vsel %vm1083, %v2907, 0
      %v2914 = vsel %vm1083, %v2909, 0
      %2916 = vmatpush.bf16.xpose.msra.mxu0 0
      %2917 = vmatpush.bf16.xpose.msra.mxu0 0
      %2918 = vmatpush.bf16.xpose.msra.mxu0 0
      %2919 = vmatpush.bf16.xpose.msra.mxu0 0
      %2920 = vmatpush.bf16.xpose.msra.mxu0 0
      %2921 = vmatpush.bf16.xpose.msra.mxu0 0
      %2922 = vmatpush.bf16.xpose.msra.mxu0 0
      %2923 = vmatpush.bf16.xpose.msra.mxu0 %v2914
      %2924 = vmatmul.bf16.gmra.mxu0 %v2911
      %v2925 = vpop.f32.mrf.mxu0
      %v2926 = vadd.f32 0.0, %v2925
      %v2927 = vpop.f32.mrf.mxu0
      %v2928 = vadd.f32 0.0, %v2927
      %2929 = vdwg.mxu0
      %v2930 = vmul.f32 %v2926, 0.25
      %v2931 = vmul.f32 %v2928, 0.25
      %v2932 = vadd.f32 %v2930, %v468
      %v2933 = vadd.f32 %v2931, %v468
      %v2934 = vsel %vm1108, %v2932, -inf
      %2935 = vmax.xlane.f32.xlu0 %v2934
      %v2936 = vpop.xlane.xlu0 %2935
      %v2937 = vsel %vm1112, %v2933, -inf
      %2938 = vmax.xlane.f32.xlu0 %v2937
      %v2939 = vpop.xlane.xlu0 %2938
      %v2940 = vsub.f32 %v2932, %v2936
      %v2941 = vsub.f32 %v2933, %v2939
      %v2942 = vmul.f32 %v2940, 1.442695
      %v2943 = vpow.pop %v2942
      %v2944 = vmul.f32 %v2941, 1.442695
      %v2945 = vpow.pop %v2944
      %v2946 = vsel %vm1108, %v2943, 0.0
      %2947 = vadd.xlane.f32.xlu0 %v2946
      %v2948 = vpop.xlane.xlu0 %2947
      %v2949 = vsel %vm1112, %v2945, 0.0
      %2950 = vadd.xlane.f32.xlu0 %v2949
      %v2951 = vpop.xlane.xlu0 %2950
      %v2952 = vrcp.pop %v2948
      %v2953 = vrcp.pop %v2951
      %v2954 = vmul.f32 %v2943, %v2952
      %v2955 = vmul.f32 %v2945, %v2953
      %v2956 = vpack.c.bf16 %v2955, %v2954
      %2957 = vrot.lane.b32.xlu0 %v2761, 96
      %v2958 = vpop.permute.xlu0 %2957
      %v2960 = vsel %vm1108, %v2956, 0
      %v2963 = vand.u32 %v2958, %v1139
      %2965 = vmatpush.bf16.msra.mxu0 0
      %2966 = vmatpush.bf16.msra.mxu0 0
      %2967 = vmatpush.bf16.msra.mxu0 0
      %2968 = vmatpush.bf16.msra.mxu0 0
      %2969 = vmatpush.bf16.msra.mxu0 0
      %2970 = vmatpush.bf16.msra.mxu0 0
      %2971 = vmatpush.bf16.msra.mxu0 0
      %2972 = vmatpush.bf16.msra.mxu0 %v2963
      %2973 = vmatmul.bf16.gmra.mxu0 %v2960
      %v2974 = vpop.f32.mrf.mxu0
      %v2975 = vadd.f32 0.0, %v2974
      %v2976 = vpop.f32.mrf.mxu0
      %v2977 = vadd.f32 0.0, %v2976
      %2978 = vdwg.mxu0
      %2979 = vrot.lane.b32.xlu0 %v2760, 80
      %v2980 = vpop.permute.xlu0 %2979
      %2981 = vrot.lane.b32.xlu0 %v2760, 16
      %v2982 = vpop.permute.xlu0 %2981
      %v2984 = vsel %vm1083, %v2980, 0
      %v2987 = vsel %vm1083, %v2982, 0
      %2989 = vmatpush.bf16.xpose.msra.mxu0 0
      %2990 = vmatpush.bf16.xpose.msra.mxu0 0
      %2991 = vmatpush.bf16.xpose.msra.mxu0 0
      %2992 = vmatpush.bf16.xpose.msra.mxu0 0
      %2993 = vmatpush.bf16.xpose.msra.mxu0 0
      %2994 = vmatpush.bf16.xpose.msra.mxu0 0
      %2995 = vmatpush.bf16.xpose.msra.mxu0 0
      %2996 = vmatpush.bf16.xpose.msra.mxu0 %v2987
      %2997 = vmatmul.bf16.gmra.mxu0 %v2984
      %v2998 = vpop.f32.mrf.mxu0
      %v2999 = vadd.f32 0.0, %v2998
      %v3000 = vpop.f32.mrf.mxu0
      %v3001 = vadd.f32 0.0, %v3000
      %3002 = vdwg.mxu0
      %v3003 = vmul.f32 %v2999, 0.25
      %v3004 = vmul.f32 %v3001, 0.25
      %v3005 = vadd.f32 %v3003, %v468
      %v3006 = vadd.f32 %v3004, %v468
      %v3007 = vsel %vm1108, %v3005, -inf
      %3008 = vmax.xlane.f32.xlu0 %v3007
      %v3009 = vpop.xlane.xlu0 %3008
      %v3010 = vsel %vm1112, %v3006, -inf
      %3011 = vmax.xlane.f32.xlu0 %v3010
      %v3012 = vpop.xlane.xlu0 %3011
      %v3013 = vsub.f32 %v3005, %v3009
      %v3014 = vsub.f32 %v3006, %v3012
      %v3015 = vmul.f32 %v3013, 1.442695
      %v3016 = vpow.pop %v3015
      %v3017 = vmul.f32 %v3014, 1.442695
      %v3018 = vpow.pop %v3017
      %v3019 = vsel %vm1108, %v3016, 0.0
      %3020 = vadd.xlane.f32.xlu0 %v3019
      %v3021 = vpop.xlane.xlu0 %3020
      %v3022 = vsel %vm1112, %v3018, 0.0
      %3023 = vadd.xlane.f32.xlu0 %v3022
      %v3024 = vpop.xlane.xlu0 %3023
      %v3025 = vrcp.pop %v3021
      %v3026 = vrcp.pop %v3024
      %v3027 = vmul.f32 %v3016, %v3025
      %v3028 = vmul.f32 %v3018, %v3026
      %v3029 = vpack.c.bf16 %v3028, %v3027
      %3030 = vrot.lane.b32.xlu0 %v2761, 80
      %v3031 = vpop.permute.xlu0 %3030
      %v3033 = vsel %vm1108, %v3029, 0
      %v3036 = vand.u32 %v3031, %v1139
      %3038 = vmatpush.bf16.msra.mxu0 0
      %3039 = vmatpush.bf16.msra.mxu0 0
      %3040 = vmatpush.bf16.msra.mxu0 0
      %3041 = vmatpush.bf16.msra.mxu0 0
      %3042 = vmatpush.bf16.msra.mxu0 0
      %3043 = vmatpush.bf16.msra.mxu0 0
      %3044 = vmatpush.bf16.msra.mxu0 0
      %3045 = vmatpush.bf16.msra.mxu0 %v3036
      %3046 = vmatmul.bf16.gmra.mxu0 %v3033
      %v3047 = vpop.f32.mrf.mxu0
      %v3048 = vadd.f32 0.0, %v3047
      %v3049 = vpop.f32.mrf.mxu0
      %v3050 = vadd.f32 0.0, %v3049
      %3051 = vdwg.mxu0
      %3054 = vrot.lane.b32.xlu0 %v2902, 16
      %v3055 = vpop.permute.xlu0 %3054
      %3056 = vrot.lane.b32.xlu0 %v2904, 16
      %v3057 = vpop.permute.xlu0 %3056
      %3062 = vrot.lane.b32.xlu0 %v2975, 32
      %v3063 = vpop.permute.xlu0 %3062
      %3064 = vrot.lane.b32.xlu0 %v2977, 32
      %v3065 = vpop.permute.xlu0 %3064
      %3070 = vrot.lane.b32.xlu0 %v3048, 48
      %v3071 = vpop.permute.xlu0 %3070
      %3072 = vrot.lane.b32.xlu0 %v3050, 48
      %v3073 = vpop.permute.xlu0 %3072
      %v3076 = vsel %vm1083, %v2828, %v3055
      %v3077 = vsel %vm1083, %v2830, %v3057
      %v3078 = vsel %vm1403, %v3076, %v3063
      %v3079 = vsel %vm1403, %v3077, %v3065
      %v3080 = vsel %vm1406, %v3078, %v3071
      %v3081 = vsel %vm1406, %v3079, %v3073
      %s3082 = scalar_lea.vmem %s8, 32
      %v3083 = vld [vmem:[%s3082] sm:$0xf]
      %v3084 = vld [vmem:[%s3082 + $0x4] sm:$0xf]
      %v3085 = vld [vmem:[%s3082 + $0x8] sm:$0xf]
      %v3086 = vld [vmem:[%s3082 + $0xc] sm:$0xf]
      %v3087 = vld [vmem:[%s3082 + $0x10] sm:$0xf]
      %v3088 = vld [vmem:[%s3082 + $0x14] sm:$0xf]
      %v3089 = vld [vmem:[%s3082 + $0x18] sm:$0xf]
      %v3090 = vld [vmem:[%s3082 + $0x1c] sm:$0xf]
      %v3091 = vpack.c.bf16 %v3081, %v3080
      %v3100 = vunpack.c.l.b16 %v3083
      %v3101 = vunpack.c.l.b16 %v3084
      %v3102 = vunpack.c.l.b16 %v3085
      %v3103 = vunpack.c.l.b16 %v3086
      %v3104 = vunpack.c.l.b16 %v3087
      %v3105 = vunpack.c.l.b16 %v3088
      %v3106 = vunpack.c.l.b16 %v3089
      %v3107 = vunpack.c.l.b16 %v3090
      %v3108 = vpack.c.b16 %v3101, %v3100
      %v3109 = vpack.c.b16 %v3103, %v3102
      %v3110 = vpack.c.b16 %v3105, %v3104
      %v3111 = vpack.c.b16 %v3107, %v3106
      %v3117 = vsel %vm562, %v3091, 0
      %3119 = vmatpush.bf16.msra.mxu0 0
      %3120 = vmatpush.bf16.msra.mxu0 0
      %3121 = vmatpush.bf16.msra.mxu0 0
      %3122 = vmatpush.bf16.msra.mxu0 0
      %3123 = vmatpush.bf16.msra.mxu0 %v3111
      %3124 = vmatpush.bf16.msra.mxu0 %v3110
      %3125 = vmatpush.bf16.msra.mxu0 %v3109
      %3126 = vmatpush.bf16.msra.mxu0 %v3108
      %3127 = vmatmul.bf16.gmra.mxu0 %v3117
      %v3128 = vpop.f32.mrf.mxu0
      %v3129 = vadd.f32 0.0, %v3128
      %v3130 = vpop.f32.mrf.mxu0
      %v3131 = vadd.f32 0.0, %v3130
      %3132 = vdwg.mxu0
      %v3133 = vadd.f32 %v2625, %v3129
      %v3134 = vadd.f32 %v2626, %v3131
      %v3135 = vperm.slane %v2244, 7
      %v3136 = vadd.f32 %v3133, %v3135
      %v3137 = vadd.f32 %v3134, %v3135
      %v3138 = vmul.f32 %v3136, %v460
      %v3139 = vmul.f32 %v3137, %v461
      %v3140 = vsel %vm562, %v3138, 0.0
      %3141 = vadd.xlane.f32.xlu0 %v3140
      %v3142 = vpop.xlane.xlu0 %3141
      %v3143 = vsel %vm566, %v3139, 0.0
      %3144 = vadd.xlane.f32.xlu0 %v3143
      %v3145 = vpop.xlane.xlu0 %3144
      %v3146 = vmul.f32 %v3142, %v576
      %v3147 = vmul.f32 %v3145, %v576
      %v3148 = vsub.f32 %v3138, %v3146
      %v3149 = vsub.f32 %v3139, %v3147
      %v3150 = vmul.f32 %v3148, %v3148
      %v3151 = vmul.f32 %v3149, %v3149
      %v3152 = vsel %vm562, %v3150, 0.0
      %3153 = vadd.xlane.f32.xlu0 %v3152
      %v3154 = vpop.xlane.xlu0 %3153
      %v3155 = vsel %vm566, %v3151, 0.0
      %3156 = vadd.xlane.f32.xlu0 %v3155
      %v3157 = vpop.xlane.xlu0 %3156
      %v3158 = vmul.f32 %v3154, %v576
      %v3159 = vmul.f32 %v3157, %v576
      %v3160 = vadd.f32 %v3158, 1e-05
      %v3161 = vadd.f32 %v3159, 1e-05
      %v3162 = vrsqrt.pop %v3160
      %v3163 = vmul.f32 %v3162, %v3160
      %v3164 = vmul.f32 %v3163, %v3162
      %v3165 = vmul.f32 0.5, %v3164
      %v3166 = vsub.f32 1.5, %v3165
      %v3167 = vmul.f32 %v3162, %v3166
      %vm3168 = vweird.f32 %v3160
      %vm3169 = vweird.f32 %v3162
      %vm3170 = vmor %vm3168, %vm3169
      %v3171 = vsel %vm3170, %v3162, %v3167
      %v3172 = vrsqrt.pop %v3161
      %v3173 = vmul.f32 %v3172, %v3161
      %v3174 = vmul.f32 %v3173, %v3172
      %v3175 = vmul.f32 0.5, %v3174
      %v3176 = vsub.f32 1.5, %v3175
      %v3177 = vmul.f32 %v3172, %v3176
      %vm3178 = vweird.f32 %v3161
      %vm3179 = vweird.f32 %v3172
      %vm3180 = vmor %vm3178, %vm3179
      %v3181 = vsel %vm3180, %v3172, %v3177
      %v3182 = vmul.f32 %v3148, %v3171
      %v3183 = vmul.f32 %v3149, %v3181
      %v3184 = vperm.slane %v2246, 0
      %v3185 = vmul.f32 %v3182, %v3184
      %v3186 = vmul.f32 %v3183, %v3184
      %v3187 = vperm.slane %v2246, 1
      %v3188 = vadd.f32 %v3185, %v3187
      %v3189 = vadd.f32 %v3186, %v3187
      %s3190 = scalar_lea.vmem %s9, 32
      %v3191 = vld [vmem:[%s3190] sm:$0xf]
      %v3192 = vld [vmem:[%s3190 + $0x4] sm:$0xf]
      %v3193 = vld [vmem:[%s3190 + $0x8] sm:$0xf]
      %v3194 = vld [vmem:[%s3190 + $0xc] sm:$0xf]
      %v3195 = vld [vmem:[%s3190 + $0x10] sm:$0xf]
      %v3196 = vld [vmem:[%s3190 + $0x14] sm:$0xf]
      %v3197 = vld [vmem:[%s3190 + $0x18] sm:$0xf]
      %v3198 = vld [vmem:[%s3190 + $0x1c] sm:$0xf]
      %v3199 = vpack.c.bf16 %v3189, %v3188
      %v3200 = vperm.slane %v2246, 2
      %v3209 = vunpack.c.l.b16 %v3191
      %v3210 = vunpack.c.l.b16 %v3192
      %v3211 = vunpack.c.l.b16 %v3193
      %v3212 = vunpack.c.l.b16 %v3194
      %v3213 = vunpack.c.l.b16 %v3195
      %v3214 = vunpack.c.l.b16 %v3196
      %v3215 = vunpack.c.l.b16 %v3197
      %v3216 = vunpack.c.l.b16 %v3198
      %v3217 = vpack.c.b16 %v3210, %v3209
      %v3218 = vpack.c.b16 %v3212, %v3211
      %v3219 = vpack.c.b16 %v3214, %v3213
      %v3220 = vpack.c.b16 %v3216, %v3215
      %v3226 = vsel %vm562, %v3199, 0
      %3228 = vmatpush.bf16.msra.mxu0 0
      %3229 = vmatpush.bf16.msra.mxu0 0
      %3230 = vmatpush.bf16.msra.mxu0 0
      %3231 = vmatpush.bf16.msra.mxu0 0
      %3232 = vmatpush.bf16.msra.mxu0 %v3220
      %3233 = vmatpush.bf16.msra.mxu0 %v3219
      %3234 = vmatpush.bf16.msra.mxu0 %v3218
      %3235 = vmatpush.bf16.msra.mxu0 %v3217
      %3236 = vmatmul.bf16.gmra.mxu0 %v3226
      %v3237 = vpop.f32.mrf.mxu0
      %v3238 = vadd.f32 %v3200, %v3237
      %v3239 = vpop.f32.mrf.mxu0
      %v3240 = vadd.f32 %v3200, %v3239
      %3241 = vdwg.mxu0
      %v3242 = vxor.u32 %v3238, 2147483648
      %v3243 = vxor.u32 %v3240, 2147483648
      %v3244 = vmul.f32 %v3242, 1.442695
      %v3245 = vpow.pop %v3244
      %v3246 = vmul.f32 %v3243, 1.442695
      %v3247 = vpow.pop %v3246
      %v3248 = vadd.f32 %v3245, 1.0
      %v3249 = vadd.f32 %v3247, 1.0
      %v3250 = vrcp.pop %v3248
      %v3251 = vmul.f32 %v3248, %v3250
      %v3252 = vsub.f32 1.0, %v3251
      %v3253 = vmul.f32 %v3250, %v3252
      %v3254 = vadd.f32 %v3250, %v3253
      %vm3255 = vweird.f32 %v3248
      %vm3256 = vweird.f32 %v3250
      %vm3257 = vmor %vm3255, %vm3256
      %v3258 = vsel %vm3257, %v3250, %v3254
      %v3259 = vand.u32 2147483647, %v3248
      %vm3260 = vcmp.eq.f32.partialorder %v3259, 8.507059e+37
      %v3261 = vand.u32 %v3248, 2147483648
      %v3262 = vor.u32 1.1754944e-38, %v3261
      %v3263 = vsel %vm3260, %v3262, %v3258
      %v3264 = vmul.f32 1.0, %v3263
      %v3265 = vrcp.pop %v3249
      %v3266 = vmul.f32 %v3249, %v3265
      %v3267 = vsub.f32 1.0, %v3266
      %v3268 = vmul.f32 %v3265, %v3267
      %v3269 = vadd.f32 %v3265, %v3268
      %vm3270 = vweird.f32 %v3249
      %vm3271 = vweird.f32 %v3265
      %vm3272 = vmor %vm3270, %vm3271
      %v3273 = vsel %vm3272, %v3265, %v3269
      %v3274 = vand.u32 2147483647, %v3249
      %vm3275 = vcmp.eq.f32.partialorder %v3274, 8.507059e+37
      %v3276 = vand.u32 %v3249, 2147483648
      %v3277 = vor.u32 1.1754944e-38, %v3276
      %v3278 = vsel %vm3275, %v3277, %v3273
      %v3279 = vmul.f32 1.0, %v3278
      %3282 = vrot.lane.b32.xlu0 %v3264, 64
      %v3283 = vpop.permute.xlu0 %3282
      %3284 = vrot.lane.b32.xlu0 %v3279, 64
      %v3285 = vpop.permute.xlu0 %3284
      %v3288 = vmul.f32 %v3238, %v3283
      %v3289 = vmul.f32 %v3240, %v3285
      %v3290 = vmul.f32 %v3288, %v460
      %v3291 = vmul.f32 %v3289, %v461
      %v3294 = vrot.slane %v3290, 6
      %v3295 = vrot.slane %v3291, 6
      %v3296 = vsel %vm1619, %v3294, %v3295
      %v3300 = vsel %vm1619, 0.0, %v3294
      %v3301 = vsel %vm1627, %v3295, 0.0
      %v3302 = vperm.slane %v2247, 7
      %v3303 = vmul.f32 %v3300, %v3302
      %v3304 = vmul.f32 %v3296, %v3302
      %v3305 = vadd.f32 %v3303, 0.0
      %v3306 = vadd.f32 %v3304, 0.0
      %v3307 = vperm.slane %v2249, 0
      %v3308 = vmul.f32 %v3300, %v3307
      %v3309 = vmul.f32 %v3296, %v3307
      %v3312 = vrot.slane %v3308, 1
      %v3313 = vrot.slane %v3309, 1
      %v3314 = vsel %vm1136, %v3312, %v3313
      %v3317 = vadd.f32 %v3305, %v3314
      %v3318 = vadd.f32 %v3306, %v3313
      %v3319 = vperm.slane %v2249, 1
      %v3320 = vmul.f32 %v3300, %v3319
      %v3321 = vmul.f32 %v3296, %v3319
      %v3322 = vmul.f32 %v3301, %v3319
      %v3326 = vrot.slane %v3320, 2
      %v3327 = vrot.slane %v3321, 2
      %v3328 = vsel %vm1653, %v3326, %v3327
      %v3329 = vrot.slane %v3322, 2
      %v3330 = vsel %vm1653, %v3327, %v3329
      %v3333 = vadd.f32 %v3317, %v3328
      %v3334 = vadd.f32 %v3318, %v3330
      %v3335 = vperm.slane %v2249, 2
      %v3336 = vmul.f32 %v3300, %v3335
      %v3337 = vmul.f32 %v3296, %v3335
      %v3338 = vmul.f32 %v3301, %v3335
      %v3342 = vrot.slane %v3336, 3
      %v3343 = vrot.slane %v3337, 3
      %v3344 = vsel %vm1670, %v3342, %v3343
      %v3345 = vrot.slane %v3338, 3
      %v3346 = vsel %vm1670, %v3343, %v3345
      %v3349 = vadd.f32 %v3333, %v3344
      %v3350 = vadd.f32 %v3334, %v3346
      %v3351 = vperm.slane %v2249, 3
      %v3352 = vmul.f32 %v3300, %v3351
      %v3353 = vmul.f32 %v3296, %v3351
      %v3354 = vmul.f32 %v3301, %v3351
      %v3358 = vrot.slane %v3352, 4
      %v3359 = vrot.slane %v3353, 4
      %v3360 = vsel %vm1687, %v3358, %v3359
      %v3361 = vrot.slane %v3354, 4
      %v3362 = vsel %vm1687, %v3359, %v3361
      %v3365 = vadd.f32 %v3349, %v3360
      %v3366 = vadd.f32 %v3350, %v3362
      %v3367 = vperm.slane %v2246, 3
      %v3368 = vadd.f32 %v3365, %v3367
      %v3369 = vadd.f32 %v3366, %v3367
      %v3370 = vperm.slane %v2246, 6
      %v3371 = vsub.f32 %v3368, %v3370
      %v3372 = vsub.f32 %v3369, %v3370
      %v3373 = vadd.f32 %v2246, 1e-05
      %v3374 = vrsqrt.pop %v3373
      %v3375 = vmul.f32 %v3374, %v3373
      %v3376 = vmul.f32 %v3375, %v3374
      %v3377 = vmul.f32 0.5, %v3376
      %v3378 = vsub.f32 1.5, %v3377
      %v3379 = vmul.f32 %v3374, %v3378
      %vm3380 = vweird.f32 %v3373
      %vm3381 = vweird.f32 %v3374
      %vm3382 = vmor %vm3380, %vm3381
      %v3383 = vsel %vm3382, %v3374, %v3379
      %v3384 = vperm.slane %v3383, 7
      %v3385 = vmul.f32 %v3371, %v3384
      %v3386 = vmul.f32 %v3372, %v3384
      %v3387 = vperm.slane %v2246, 4
      %v3388 = vmul.f32 %v3385, %v3387
      %v3389 = vmul.f32 %v3386, %v3387
      %v3390 = vperm.slane %v2246, 5
      %v3391 = vadd.f32 %v3388, %v3390
      %v3392 = vadd.f32 %v3389, %v3390
      %v3393 = vxor.u32 %v3391, 2147483648
      %v3394 = vxor.u32 %v3392, 2147483648
      %v3395 = vmul.f32 %v3393, 1.442695
      %v3396 = vpow.pop %v3395
      %v3397 = vmul.f32 %v3394, 1.442695
      %v3398 = vpow.pop %v3397
      %v3399 = vadd.f32 %v3396, 1.0
      %v3400 = vadd.f32 %v3398, 1.0
      %v3401 = vrcp.pop %v3399
      %v3402 = vmul.f32 %v3399, %v3401
      %v3403 = vsub.f32 1.0, %v3402
      %v3404 = vmul.f32 %v3401, %v3403
      %v3405 = vadd.f32 %v3401, %v3404
      %vm3406 = vweird.f32 %v3399
      %vm3407 = vweird.f32 %v3401
      %vm3408 = vmor %vm3406, %vm3407
      %v3409 = vsel %vm3408, %v3401, %v3405
      %v3410 = vand.u32 2147483647, %v3399
      %vm3411 = vcmp.eq.f32.partialorder %v3410, 8.507059e+37
      %v3412 = vand.u32 %v3399, 2147483648
      %v3413 = vor.u32 1.1754944e-38, %v3412
      %v3414 = vsel %vm3411, %v3413, %v3409
      %v3415 = vmul.f32 1.0, %v3414
      %v3416 = vrcp.pop %v3400
      %v3417 = vmul.f32 %v3400, %v3416
      %v3418 = vsub.f32 1.0, %v3417
      %v3419 = vmul.f32 %v3416, %v3418
      %v3420 = vadd.f32 %v3416, %v3419
      %vm3421 = vweird.f32 %v3400
      %vm3422 = vweird.f32 %v3416
      %vm3423 = vmor %vm3421, %vm3422
      %v3424 = vsel %vm3423, %v3416, %v3420
      %v3425 = vand.u32 2147483647, %v3400
      %vm3426 = vcmp.eq.f32.partialorder %v3425, 8.507059e+37
      %v3427 = vand.u32 %v3400, 2147483648
      %v3428 = vor.u32 1.1754944e-38, %v3427
      %v3429 = vsel %vm3426, %v3428, %v3424
      %v3430 = vmul.f32 1.0, %v3429
      %v3431 = vmul.f32 %v3391, %v3415
      %v3432 = vmul.f32 %v3392, %v3430
      %s3433 = scalar_lea.vmem %s10, 32
      %v3434 = vld [vmem:[%s3433] sm:$0xf]
      %v3435 = vld [vmem:[%s3433 + $0x4] sm:$0xf]
      %v3436 = vld [vmem:[%s3433 + $0x8] sm:$0xf]
      %v3437 = vld [vmem:[%s3433 + $0xc] sm:$0xf]
      %v3438 = vld [vmem:[%s3433 + $0x10] sm:$0xf]
      %v3439 = vld [vmem:[%s3433 + $0x14] sm:$0xf]
      %v3440 = vld [vmem:[%s3433 + $0x18] sm:$0xf]
      %v3441 = vld [vmem:[%s3433 + $0x1c] sm:$0xf]
      %v3442 = vpack.c.bf16 %v3432, %v3431
      %v3443 = vperm.slane %v2247, 0
      %v3452 = vunpack.c.l.b16 %v3434
      %v3453 = vunpack.c.l.b16 %v3435
      %v3454 = vunpack.c.l.b16 %v3436
      %v3455 = vunpack.c.l.b16 %v3437
      %v3456 = vunpack.c.l.b16 %v3438
      %v3457 = vunpack.c.l.b16 %v3439
      %v3458 = vunpack.c.l.b16 %v3440
      %v3459 = vunpack.c.l.b16 %v3441
      %v3460 = vpack.c.b16 %v3453, %v3452
      %v3461 = vpack.c.b16 %v3455, %v3454
      %v3462 = vpack.c.b16 %v3457, %v3456
      %v3463 = vpack.c.b16 %v3459, %v3458
      %v3469 = vsel %vm562, %v3442, 0
      %3471 = vmatpush.bf16.msra.mxu0 0
      %3472 = vmatpush.bf16.msra.mxu0 0
      %3473 = vmatpush.bf16.msra.mxu0 0
      %3474 = vmatpush.bf16.msra.mxu0 0
      %3475 = vmatpush.bf16.msra.mxu0 %v3463
      %3476 = vmatpush.bf16.msra.mxu0 %v3462
      %3477 = vmatpush.bf16.msra.mxu0 %v3461
      %3478 = vmatpush.bf16.msra.mxu0 %v3460
      %3479 = vmatmul.bf16.gmra.mxu0 %v3469
      %v3480 = vpop.f32.mrf.mxu0
      %v3481 = vadd.f32 %v3443, %v3480
      %v3482 = vpop.f32.mrf.mxu0
      %v3483 = vadd.f32 %v3443, %v3482
      %3484 = vdwg.mxu0
      %v3485 = vadd.f32 %v3138, %v3481
      %v3486 = vadd.f32 %v3139, %v3483
      %v3487 = vsel %vm562, %v3485, 0.0
      %3488 = vadd.xlane.f32.xlu0 %v3487
      %v3489 = vpop.xlane.xlu0 %3488
      %v3490 = vsel %vm566, %v3486, 0.0
      %3491 = vadd.xlane.f32.xlu0 %v3490
      %v3492 = vpop.xlane.xlu0 %3491
      %v3493 = vmul.f32 %v3489, %v576
      %v3494 = vmul.f32 %v3492, %v576
      %v3495 = vsub.f32 %v3485, %v3493
      %v3496 = vsub.f32 %v3486, %v3494
      %v3497 = vmul.f32 %v3495, %v3495
      %v3498 = vmul.f32 %v3496, %v3496
      %v3499 = vsel %vm562, %v3497, 0.0
      %3500 = vadd.xlane.f32.xlu0 %v3499
      %v3501 = vpop.xlane.xlu0 %3500
      %v3502 = vsel %vm566, %v3498, 0.0
      %3503 = vadd.xlane.f32.xlu0 %v3502
      %v3504 = vpop.xlane.xlu0 %3503
      %v3505 = vmul.f32 %v3501, %v576
      %v3506 = vmul.f32 %v3504, %v576
      %v3507 = vadd.f32 %v3505, 1e-05
      %v3508 = vadd.f32 %v3506, 1e-05
      %v3509 = vrsqrt.pop %v3507
      %v3510 = vmul.f32 %v3509, %v3507
      %v3511 = vmul.f32 %v3510, %v3509
      %v3512 = vmul.f32 0.5, %v3511
      %v3513 = vsub.f32 1.5, %v3512
      %v3514 = vmul.f32 %v3509, %v3513
      %vm3515 = vweird.f32 %v3507
      %vm3516 = vweird.f32 %v3509
      %vm3517 = vmor %vm3515, %vm3516
      %v3518 = vsel %vm3517, %v3509, %v3514
      %v3519 = vrsqrt.pop %v3508
      %v3520 = vmul.f32 %v3519, %v3508
      %v3521 = vmul.f32 %v3520, %v3519
      %v3522 = vmul.f32 0.5, %v3521
      %v3523 = vsub.f32 1.5, %v3522
      %v3524 = vmul.f32 %v3519, %v3523
      %vm3525 = vweird.f32 %v3508
      %vm3526 = vweird.f32 %v3519
      %vm3527 = vmor %vm3525, %vm3526
      %v3528 = vsel %vm3527, %v3519, %v3524
      %v3529 = vmul.f32 %v3495, %v3518
      %v3530 = vmul.f32 %v3496, %v3528
      %v3531 = vperm.slane %v2247, 1
      %v3532 = vmul.f32 %v3529, %v3531
      %v3533 = vmul.f32 %v3530, %v3531
      %v3534 = vperm.slane %v2247, 2
      %v3535 = vadd.f32 %v3532, %v3534
      %v3536 = vadd.f32 %v3533, %v3534
      %s3537 = scalar_lea.vmem %s11, 64
      %v3538 = vld [vmem:[%s3537] sm:$0xff]
      %v3539 = vld [vmem:[%s3537 + $0x8] sm:$0xff]
      %v3540 = vld [vmem:[%s3537 + $0x10] sm:$0xff]
      %v3541 = vld [vmem:[%s3537 + $0x18] sm:$0xff]
      %v3542 = vld [vmem:[%s3537 + $0x20] sm:$0xff]
      %v3543 = vld [vmem:[%s3537 + $0x28] sm:$0xff]
      %v3544 = vld [vmem:[%s3537 + $0x30] sm:$0xff]
      %v3545 = vld [vmem:[%s3537 + $0x38] sm:$0xff]
      %v3546 = vpack.c.bf16 %v3536, %v3535
      %v3547 = vperm.slane %v2247, 3
      %v3548 = vperm.slane %v2248, 3
      %v3557 = vunpack.c.l.b16 %v3538
      %v3558 = vunpack.c.h.b16 %v3538
      %v3559 = vunpack.c.l.b16 %v3539
      %v3560 = vunpack.c.h.b16 %v3539
      %v3561 = vunpack.c.l.b16 %v3540
      %v3562 = vunpack.c.h.b16 %v3540
      %v3563 = vunpack.c.l.b16 %v3541
      %v3564 = vunpack.c.h.b16 %v3541
      %v3565 = vunpack.c.l.b16 %v3542
      %v3566 = vunpack.c.h.b16 %v3542
      %v3567 = vunpack.c.l.b16 %v3543
      %v3568 = vunpack.c.h.b16 %v3543
      %v3569 = vunpack.c.l.b16 %v3544
      %v3570 = vunpack.c.h.b16 %v3544
      %v3571 = vunpack.c.l.b16 %v3545
      %v3572 = vunpack.c.h.b16 %v3545
      %v3573 = vpack.c.b16 %v3559, %v3557
      %v3574 = vpack.c.b16 %v3560, %v3558
      %v3575 = vpack.c.b16 %v3563, %v3561
      %v3576 = vpack.c.b16 %v3564, %v3562
      %v3577 = vpack.c.b16 %v3567, %v3565
      %v3578 = vpack.c.b16 %v3568, %v3566
      %v3579 = vpack.c.b16 %v3571, %v3569
      %v3580 = vpack.c.b16 %v3572, %v3570
      %v3590 = vsel %vm562, %v3546, 0
      %3592 = vmatpush.bf16.msra.mxu0 0
      %3593 = vmatpush.bf16.msra.mxu0 0
      %3594 = vmatpush.bf16.msra.mxu0 0
      %3595 = vmatpush.bf16.msra.mxu0 0
      %3596 = vmatpush.bf16.msra.mxu0 %v3579
      %3597 = vmatpush.bf16.msra.mxu0 %v3577
      %3598 = vmatpush.bf16.msra.mxu0 %v3575
      %3599 = vmatpush.bf16.msra.mxu0 %v3573
      %3600 = vmatmul.bf16.gmra.mxu0 %v3590
      %v3601 = vpop.f32.mrf.mxu0
      %v3602 = vadd.f32 %v3547, %v3601
      %v3603 = vpop.f32.mrf.mxu0
      %v3604 = vadd.f32 %v3547, %v3603
      %3605 = vdwg.mxu0
      %3606 = vmatpush.bf16.msra.mxu0 0
      %3607 = vmatpush.bf16.msra.mxu0 0
      %3608 = vmatpush.bf16.msra.mxu0 0
      %3609 = vmatpush.bf16.msra.mxu0 0
      %3610 = vmatpush.bf16.msra.mxu0 %v3580
      %3611 = vmatpush.bf16.msra.mxu0 %v3578
      %3612 = vmatpush.bf16.msra.mxu0 %v3576
      %3613 = vmatpush.bf16.msra.mxu0 %v3574
      %3614 = vmatmul.bf16.gmra.mxu0 %v3590
      %v3615 = vpop.f32.mrf.mxu0
      %v3616 = vadd.f32 %v3548, %v3615
      %v3617 = vpop.f32.mrf.mxu0
      %v3618 = vadd.f32 %v3548, %v3617
      %3619 = vdwg.mxu0
      %v3620 = vxor.u32 %v3602, 2147483648
      %v3621 = vxor.u32 %v3616, 2147483648
      %v3622 = vxor.u32 %v3604, 2147483648
      %v3623 = vxor.u32 %v3618, 2147483648
      %v3624 = vmul.f32 %v3620, 1.442695
      %v3625 = vpow.pop %v3624
      %v3626 = vmul.f32 %v3621, 1.442695
      %v3627 = vpow.pop %v3626
      %v3628 = vmul.f32 %v3622, 1.442695
      %v3629 = vpow.pop %v3628
      %v3630 = vmul.f32 %v3623, 1.442695
      %v3631 = vpow.pop %v3630
      %v3632 = vadd.f32 %v3625, 1.0
      %v3633 = vadd.f32 %v3627, 1.0
      %v3634 = vadd.f32 %v3629, 1.0
      %v3635 = vadd.f32 %v3631, 1.0
      %v3636 = vrcp.pop %v3632
      %v3637 = vmul.f32 %v3632, %v3636
      %v3638 = vsub.f32 1.0, %v3637
      %v3639 = vmul.f32 %v3636, %v3638
      %v3640 = vadd.f32 %v3636, %v3639
      %vm3641 = vweird.f32 %v3632
      %vm3642 = vweird.f32 %v3636
      %vm3643 = vmor %vm3641, %vm3642
      %v3644 = vsel %vm3643, %v3636, %v3640
      %v3645 = vand.u32 2147483647, %v3632
      %vm3646 = vcmp.eq.f32.partialorder %v3645, 8.507059e+37
      %v3647 = vand.u32 %v3632, 2147483648
      %v3648 = vor.u32 1.1754944e-38, %v3647
      %v3649 = vsel %vm3646, %v3648, %v3644
      %v3650 = vmul.f32 1.0, %v3649
      %v3651 = vrcp.pop %v3633
      %v3652 = vmul.f32 %v3633, %v3651
      %v3653 = vsub.f32 1.0, %v3652
      %v3654 = vmul.f32 %v3651, %v3653
      %v3655 = vadd.f32 %v3651, %v3654
      %vm3656 = vweird.f32 %v3633
      %vm3657 = vweird.f32 %v3651
      %vm3658 = vmor %vm3656, %vm3657
      %v3659 = vsel %vm3658, %v3651, %v3655
      %v3660 = vand.u32 2147483647, %v3633
      %vm3661 = vcmp.eq.f32.partialorder %v3660, 8.507059e+37
      %v3662 = vand.u32 %v3633, 2147483648
      %v3663 = vor.u32 1.1754944e-38, %v3662
      %v3664 = vsel %vm3661, %v3663, %v3659
      %v3665 = vmul.f32 1.0, %v3664
      %v3666 = vrcp.pop %v3634
      %v3667 = vmul.f32 %v3634, %v3666
      %v3668 = vsub.f32 1.0, %v3667
      %v3669 = vmul.f32 %v3666, %v3668
      %v3670 = vadd.f32 %v3666, %v3669
      %vm3671 = vweird.f32 %v3634
      %vm3672 = vweird.f32 %v3666
      %vm3673 = vmor %vm3671, %vm3672
      %v3674 = vsel %vm3673, %v3666, %v3670
      %v3675 = vand.u32 2147483647, %v3634
      %vm3676 = vcmp.eq.f32.partialorder %v3675, 8.507059e+37
      %v3677 = vand.u32 %v3634, 2147483648
      %v3678 = vor.u32 1.1754944e-38, %v3677
      %v3679 = vsel %vm3676, %v3678, %v3674
      %v3680 = vmul.f32 1.0, %v3679
      %v3681 = vrcp.pop %v3635
      %v3682 = vmul.f32 %v3635, %v3681
      %v3683 = vsub.f32 1.0, %v3682
      %v3684 = vmul.f32 %v3681, %v3683
      %v3685 = vadd.f32 %v3681, %v3684
      %vm3686 = vweird.f32 %v3635
      %vm3687 = vweird.f32 %v3681
      %vm3688 = vmor %vm3686, %vm3687
      %v3689 = vsel %vm3688, %v3681, %v3685
      %v3690 = vand.u32 2147483647, %v3635
      %vm3691 = vcmp.eq.f32.partialorder %v3690, 8.507059e+37
      %v3692 = vand.u32 %v3635, 2147483648
      %v3693 = vor.u32 1.1754944e-38, %v3692
      %v3694 = vsel %vm3691, %v3693, %v3689
      %v3695 = vmul.f32 1.0, %v3694
      %v3696 = vmul.f32 %v3602, %v3650
      %v3697 = vmul.f32 %v3616, %v3665
      %v3698 = vmul.f32 %v3604, %v3680
      %v3699 = vmul.f32 %v3618, %v3695
      %s3700 = scalar_lea.vmem %s12, 128
      %v3701 = vld [vmem:[%s3700] sm:$0xf]
      %v3702 = vld [vmem:[%s3700 + $0x4] sm:$0xf]
      %v3703 = vld [vmem:[%s3700 + $0x8] sm:$0xf]
      %v3704 = vld [vmem:[%s3700 + $0xc] sm:$0xf]
      %v3705 = vld [vmem:[%s3700 + $0x10] sm:$0xf]
      %v3706 = vld [vmem:[%s3700 + $0x14] sm:$0xf]
      %v3707 = vld [vmem:[%s3700 + $0x18] sm:$0xf]
      %v3708 = vld [vmem:[%s3700 + $0x1c] sm:$0xf]
      %v3709 = vld [vmem:[%s3700 + $0x20] sm:$0xf]
      %v3710 = vld [vmem:[%s3700 + $0x24] sm:$0xf]
      %v3711 = vld [vmem:[%s3700 + $0x28] sm:$0xf]
      %v3712 = vld [vmem:[%s3700 + $0x2c] sm:$0xf]
      %v3713 = vld [vmem:[%s3700 + $0x30] sm:$0xf]
      %v3714 = vld [vmem:[%s3700 + $0x34] sm:$0xf]
      %v3715 = vld [vmem:[%s3700 + $0x38] sm:$0xf]
      %v3716 = vld [vmem:[%s3700 + $0x3c] sm:$0xf]
      %v3717 = vld [vmem:[%s3700 + $0x40] sm:$0xf]
      %v3718 = vld [vmem:[%s3700 + $0x44] sm:$0xf]
      %v3719 = vld [vmem:[%s3700 + $0x48] sm:$0xf]
      %v3720 = vld [vmem:[%s3700 + $0x4c] sm:$0xf]
      %v3721 = vld [vmem:[%s3700 + $0x50] sm:$0xf]
      %v3722 = vld [vmem:[%s3700 + $0x54] sm:$0xf]
      %v3723 = vld [vmem:[%s3700 + $0x58] sm:$0xf]
      %v3724 = vld [vmem:[%s3700 + $0x5c] sm:$0xf]
      %v3725 = vld [vmem:[%s3700 + $0x60] sm:$0xf]
      %v3726 = vld [vmem:[%s3700 + $0x64] sm:$0xf]
      %v3727 = vld [vmem:[%s3700 + $0x68] sm:$0xf]
      %v3728 = vld [vmem:[%s3700 + $0x6c] sm:$0xf]
      %v3729 = vld [vmem:[%s3700 + $0x70] sm:$0xf]
      %v3730 = vld [vmem:[%s3700 + $0x74] sm:$0xf]
      %v3731 = vld [vmem:[%s3700 + $0x78] sm:$0xf]
      %v3732 = vld [vmem:[%s3700 + $0x7c] sm:$0xf]
      %v3733 = vpack.c.bf16 %v3698, %v3696
      %v3734 = vpack.c.bf16 %v3699, %v3697
      %v3735 = vperm.slane %v2247, 4
      %v3768 = vunpack.c.l.b16 %v3701
      %v3769 = vunpack.c.l.b16 %v3702
      %v3770 = vunpack.c.l.b16 %v3703
      %v3771 = vunpack.c.l.b16 %v3704
      %v3772 = vunpack.c.l.b16 %v3705
      %v3773 = vunpack.c.l.b16 %v3706
      %v3774 = vunpack.c.l.b16 %v3707
      %v3775 = vunpack.c.l.b16 %v3708
      %v3776 = vunpack.c.l.b16 %v3709
      %v3777 = vunpack.c.l.b16 %v3710
      %v3778 = vunpack.c.l.b16 %v3711
      %v3779 = vunpack.c.l.b16 %v3712
      %v3780 = vunpack.c.l.b16 %v3713
      %v3781 = vunpack.c.l.b16 %v3714
      %v3782 = vunpack.c.l.b16 %v3715
      %v3783 = vunpack.c.l.b16 %v3716
      %v3784 = vunpack.c.l.b16 %v3717
      %v3785 = vunpack.c.l.b16 %v3718
      %v3786 = vunpack.c.l.b16 %v3719
      %v3787 = vunpack.c.l.b16 %v3720
      %v3788 = vunpack.c.l.b16 %v3721
      %v3789 = vunpack.c.l.b16 %v3722
      %v3790 = vunpack.c.l.b16 %v3723
      %v3791 = vunpack.c.l.b16 %v3724
      %v3792 = vunpack.c.l.b16 %v3725
      %v3793 = vunpack.c.l.b16 %v3726
      %v3794 = vunpack.c.l.b16 %v3727
      %v3795 = vunpack.c.l.b16 %v3728
      %v3796 = vunpack.c.l.b16 %v3729
      %v3797 = vunpack.c.l.b16 %v3730
      %v3798 = vunpack.c.l.b16 %v3731
      %v3799 = vunpack.c.l.b16 %v3732
      %v3800 = vpack.c.b16 %v3769, %v3768
      %v3801 = vpack.c.b16 %v3771, %v3770
      %v3802 = vpack.c.b16 %v3773, %v3772
      %v3803 = vpack.c.b16 %v3775, %v3774
      %v3804 = vpack.c.b16 %v3777, %v3776
      %v3805 = vpack.c.b16 %v3779, %v3778
      %v3806 = vpack.c.b16 %v3781, %v3780
      %v3807 = vpack.c.b16 %v3783, %v3782
      %v3808 = vpack.c.b16 %v3785, %v3784
      %v3809 = vpack.c.b16 %v3787, %v3786
      %v3810 = vpack.c.b16 %v3789, %v3788
      %v3811 = vpack.c.b16 %v3791, %v3790
      %v3812 = vpack.c.b16 %v3793, %v3792
      %v3813 = vpack.c.b16 %v3795, %v3794
      %v3814 = vpack.c.b16 %v3797, %v3796
      %v3815 = vpack.c.b16 %v3799, %v3798
      %3832 = vmatpush.bf16.msra.mxu0 %v3807
      %3833 = vmatpush.bf16.msra.mxu0 %v3806
      %3834 = vmatpush.bf16.msra.mxu0 %v3805
      %3835 = vmatpush.bf16.msra.mxu0 %v3804
      %3836 = vmatpush.bf16.msra.mxu0 %v3803
      %3837 = vmatpush.bf16.msra.mxu0 %v3802
      %3838 = vmatpush.bf16.msra.mxu0 %v3801
      %3839 = vmatpush.bf16.msra.mxu0 %v3800
      %3840 = vmatmul.bf16.gmra.mxu0 %v3733
      %v3841 = vpop.f32.mrf.mxu0
      %v3842 = vadd.f32 %v3735, %v3841
      %v3843 = vpop.f32.mrf.mxu0
      %v3844 = vadd.f32 %v3735, %v3843
      %3845 = vdwg.mxu0
      %3846 = vmatpush.bf16.msra.mxu0 %v3815
      %3847 = vmatpush.bf16.msra.mxu0 %v3814
      %3848 = vmatpush.bf16.msra.mxu0 %v3813
      %3849 = vmatpush.bf16.msra.mxu0 %v3812
      %3850 = vmatpush.bf16.msra.mxu0 %v3811
      %3851 = vmatpush.bf16.msra.mxu0 %v3810
      %3852 = vmatpush.bf16.msra.mxu0 %v3809
      %3853 = vmatpush.bf16.msra.mxu0 %v3808
      %3854 = vmatmul.bf16.gmra.mxu0 %v3734
      %v3855 = vpop.f32.mrf.mxu0
      %v3856 = vadd.f32 %v3842, %v3855
      %v3857 = vpop.f32.mrf.mxu0
      %v3858 = vadd.f32 %v3844, %v3857
      %3859 = vdwg.mxu0
      %v3860 = vmul.f32 %v3856, 0.5
      %v3861 = vmul.f32 %v3858, 0.5
      %v3862 = vadd.f32 %v3485, %v3860
      %v3863 = vadd.f32 %v3486, %v3861
      %v3864 = vsel %vm562, %v3862, 0.0
      %3865 = vadd.xlane.f32.xlu0 %v3864
      %v3866 = vpop.xlane.xlu0 %3865
      %v3867 = vsel %vm566, %v3863, 0.0
      %3868 = vadd.xlane.f32.xlu0 %v3867
      %v3869 = vpop.xlane.xlu0 %3868
      %v3870 = vmul.f32 %v3866, %v576
      %v3871 = vmul.f32 %v3869, %v576
      %v3872 = vsub.f32 %v3862, %v3870
      %v3873 = vsub.f32 %v3863, %v3871
      %v3874 = vmul.f32 %v3872, %v3872
      %v3875 = vmul.f32 %v3873, %v3873
      %v3876 = vsel %vm562, %v3874, 0.0
      %3877 = vadd.xlane.f32.xlu0 %v3876
      %v3878 = vpop.xlane.xlu0 %3877
      %v3879 = vsel %vm566, %v3875, 0.0
      %3880 = vadd.xlane.f32.xlu0 %v3879
      %v3881 = vpop.xlane.xlu0 %3880
      %v3882 = vmul.f32 %v3878, %v576
      %v3883 = vmul.f32 %v3881, %v576
      %v3884 = vadd.f32 %v3882, 1e-05
      %v3885 = vadd.f32 %v3883, 1e-05
      %v3886 = vrsqrt.pop %v3884
      %v3887 = vmul.f32 %v3886, %v3884
      %v3888 = vmul.f32 %v3887, %v3886
      %v3889 = vmul.f32 0.5, %v3888
      %v3890 = vsub.f32 1.5, %v3889
      %v3891 = vmul.f32 %v3886, %v3890
      %vm3892 = vweird.f32 %v3884
      %vm3893 = vweird.f32 %v3886
      %vm3894 = vmor %vm3892, %vm3893
      %v3895 = vsel %vm3894, %v3886, %v3891
      %v3896 = vrsqrt.pop %v3885
      %v3897 = vmul.f32 %v3896, %v3885
      %v3898 = vmul.f32 %v3897, %v3896
      %v3899 = vmul.f32 0.5, %v3898
      %v3900 = vsub.f32 1.5, %v3899
      %v3901 = vmul.f32 %v3896, %v3900
      %vm3902 = vweird.f32 %v3885
      %vm3903 = vweird.f32 %v3896
      %vm3904 = vmor %vm3902, %vm3903
      %v3905 = vsel %vm3904, %v3896, %v3901
      %v3906 = vmul.f32 %v3872, %v3895
      %v3907 = vmul.f32 %v3873, %v3905
      %v3908 = vperm.slane %v2247, 5
      %v3909 = vmul.f32 %v3906, %v3908
      %v3910 = vmul.f32 %v3907, %v3908
      %v3911 = vperm.slane %v2247, 6
      %v3912 = vadd.f32 %v3909, %v3911
      %v3913 = vadd.f32 %v3910, %v3911
      %v3914 = vmul.f32 %v3912, %v460
      %v3915 = vmul.f32 %v3913, %v461
      %v3916 = vld [vmem:[%s4] sm:$0xf]
      %v3917 = vld [vmem:[%s4 + $0x4] sm:$0xf]
      %v3918 = vld [vmem:[%s4 + $0x8] sm:$0xf]
      %v3919 = vld [vmem:[%s4 + $0xc] sm:$0xf]
      %v3920 = vld [vmem:[%s4 + $0x10] sm:$0xf]
      %v3921 = vld [vmem:[%s4 + $0x14] sm:$0xf]
      %v3922 = vld [vmem:[%s4 + $0x18] sm:$0xf]
      %v3923 = vld [vmem:[%s4 + $0x1c] sm:$0xf]
      %v3924 = vpack.c.bf16 %v3915, %v3914
      %v3925 = vperm.slane %v469, 1
      %v3934 = vunpack.c.l.b16 %v3916
      %v3935 = vunpack.c.l.b16 %v3917
      %v3936 = vunpack.c.l.b16 %v3918
      %v3937 = vunpack.c.l.b16 %v3919
      %v3938 = vunpack.c.l.b16 %v3920
      %v3939 = vunpack.c.l.b16 %v3921
      %v3940 = vunpack.c.l.b16 %v3922
      %v3941 = vunpack.c.l.b16 %v3923
      %v3942 = vpack.c.b16 %v3935, %v3934
      %v3943 = vpack.c.b16 %v3937, %v3936
      %v3944 = vpack.c.b16 %v3939, %v3938
      %v3945 = vpack.c.b16 %v3941, %v3940
      %v3951 = vsel %vm562, %v3924, 0
      %3953 = vmatpush.bf16.msra.mxu0 0
      %3954 = vmatpush.bf16.msra.mxu0 0
      %3955 = vmatpush.bf16.msra.mxu0 0
      %3956 = vmatpush.bf16.msra.mxu0 0
      %3957 = vmatpush.bf16.msra.mxu0 %v3945
      %3958 = vmatpush.bf16.msra.mxu0 %v3944
      %3959 = vmatpush.bf16.msra.mxu0 %v3943
      %3960 = vmatpush.bf16.msra.mxu0 %v3942
      %3961 = vmatmul.bf16.gmra.mxu0 %v3951
      %v3962 = vpop.f32.mrf.mxu0
      %v3963 = vadd.f32 %v3925, %v3962
      %v3964 = vpop.f32.mrf.mxu0
      %v3965 = vadd.f32 %v3925, %v3964
      %3966 = vdwg.mxu0
      %3967 = vmax.xlane.f32.xlu0 %v3963
      %v3968 = vpop.xlane.xlu0 %3967
      %v3969 = vsel %vm1136, %v3965, -inf
      %3970 = vmax.xlane.f32.xlu0 %v3969
      %v3971 = vpop.xlane.xlu0 %3970
      %v3972 = vsub.f32 %v3963, %v3968
      %v3973 = vsub.f32 %v3965, %v3971
      %v3974 = vmul.f32 %v3972, 1.442695
      %v3975 = vpow.pop %v3974
      %v3976 = vmul.f32 %v3973, 1.442695
      %v3977 = vpow.pop %v3976
      %3978 = vadd.xlane.f32.xlu0 %v3975
      %v3979 = vpop.xlane.xlu0 %3978
      %v3980 = vsel %vm1136, %v3977, 0.0
      %3981 = vadd.xlane.f32.xlu0 %v3980
      %v3982 = vpop.xlane.xlu0 %3981
      %v3983 = vlog2.pop %v3979
      %v3984 = vmul.f32 %v3983, 0.6931472
      %v3985 = vlog2.pop %v3982
      %v3986 = vmul.f32 %v3985, 0.6931472
      %v3987 = vsub.f32 %v3972, %v3984
      %v3988 = vsub.f32 %v3973, %v3986
      %3989 = vst [vmem:[%s449] sm:$0xff] %v3987
      %3990 = vst [vmem:[%s449 + $0x8] sm:$0x7f] %v3988
      %p3991 = scmp.lt.s32.totalorder %s33, 1
      %s3992 = scalar_select %p3991, %s33, 1
      %s3993 = smul.addr %s3992, 2
      %s3994 = smul.addr %s3993, 8
      %s3995 = scalar_lea.vmem %s14, %s3994
      // Predicated region
      $region73: #{model_forward.3} parent=71 // pred_check
        %p3996 = pneg %p329
      $region74: #{model_forward.3} parent=71 // pred_check_branch
        %3998 = sbr.rel (%p3996) target = $region76
      $region75: #{model_forward.3} parent=71 // pred_region
        _
      $region76: #{model_forward.3} parent=71 // pred_fallthru
        _
    $region72: #{model_forward.3} parent=5 // pred_fallthru
      _
    %p3999 = scmp.le.s32.totalorder 2, %s28
    // Predicated region
    $region77: #{model_forward.3} parent=5 // pred_check
      %p4000 = pneg %p3999
    $region78: #{model_forward.3} parent=5 // pred_check_branch
      %4002 = sbr.rel (%p4000) target = $region80
    $region79: #{model_forward.3} parent=5 // pred_region
      %s4003 = ssub.s32 %s28, 2
      // Predicated region
      $region81: #{model_forward.3} parent=79 // pred_check
        %p4004 = pneg %p335
      $region82: #{model_forward.3} parent=79 // pred_check_branch
        %4006 = sbr.rel (%p4004) target = $region84
      $region83: #{model_forward.3} parent=79 // pred_region
        %p4007 = scmp.lt.s32.totalorder %s34, 1
        %s4008 = scalar_select %p4007, %s34, 1
        %s4009 = smul.addr %s4008, 2
        %s4010 = smul.addr %s4009, 8
        %s4011 = scalar_lea.vmem %s14, %s4010
      $region84: #{model_forward.3} parent=79 // pred_fallthru
        _
    $region80: #{model_forward.3} parent=5 // pred_fallthru
      _
  $region6: #{model_forward.3} parent=0 // loop_footer
    %s32 = sadd.s32 1, %s28
  $region7: #{model_forward.3} parent=0 // loop_footer_branch
    %27 = sbr.rel target = $region3
  $region8: #{model_forward.3} parent=0 // loop_exit
    _

</llo_original>
